<compile_context>
chip_gen: v6e
topology: v6e:2x2x1
jax: 0.10.0
libtpu: 0.0.40
codegen_flags: <defaults>
</compile_context>

<pallas_src>
import functools

import jax
import jax.numpy as jnp
from jax import lax
from jax.experimental import pallas as pl
from jax.experimental.pallas import tpu as pltpu

# ----------------------------------------------------------------------------
# Synthetic g_conf (the original reads a global config object)
# ----------------------------------------------------------------------------
VARIABLE_WEIGHT = {"Steer": 0.5, "Gas": 0.45, "Brake": 0.05}
BRANCH_LOSS_WEIGHT = [0.95, 0.05]
LOSSES_WEIGHTS = {"control_t": 1.0, "stdim": 1.0}
NUM_TARGETS = 3  # len(g_conf.TARGETS): steer, throttle, brake

# TODO(synk): nn.Dropout in training mode is stochastic; treated as identity (eval).


# ----------------------------------------------------------------------------
# Weight preprocessing helpers (run once at construction, not in the forward)
# ----------------------------------------------------------------------------
def _conv_as_dense(w_oihw, in_hw, stride, pad=1):
    """Express a 3x3 conv layer as a dense linear map on the flattened NHWC
    input: returns (M [Hin*Win*Cin, Ho*Wo*Cout], (Ho, Wo)).  Built by probing
    the conv with an identity basis (exact, linear)."""
    cout, cin, kh, kw = w_oihw.shape
    h, w = in_hw
    ho = (h + 2 * pad - kh) // stride + 1
    wo = (w + 2 * pad - kw) // stride + 1
    basis = jnp.eye(h * w * cin, dtype=jnp.float32).reshape(-1, h, w, cin)
    w_hwio = jnp.transpose(w_oihw, (2, 3, 1, 0))
    out = lax.conv_general_dilated(
        basis, w_hwio, window_strides=(stride, stride),
        padding=((pad, pad), (pad, pad)),
        dimension_numbers=("NHWC", "HWIO", "NHWC"))
    return out.reshape(h * w * cin, ho * wo * cout), (ho, wo)


def _block_diag(mats):
    rows = sum(m.shape[0] for m in mats)
    cols = sum(m.shape[1] for m in mats)
    out = jnp.zeros((rows, cols), jnp.float32)
    r = c = 0
    for m in mats:
        out = out.at[r:r + m.shape[0], c:c + m.shape[1]].set(m)
        r += m.shape[0]
        c += m.shape[1]
    return out


# ----------------------------------------------------------------------------
# Kernel 1: fused conv encoder (5 convs + FC) as a 6-layer matmul chain
# ----------------------------------------------------------------------------
def _encoder_kernel(*refs, n_layers, tap):
    """refs = [x, (w,b)*n_layers, o_local, o_feat]; weights VMEM-resident,
    intermediates stay in vregs/VMEM."""
    x_ref = refs[0]
    o_local = refs[1 + 2 * n_layers]
    o_feat = refs[2 + 2 * n_layers]
    h = x_ref[...]
    for i in range(n_layers):
        w = refs[1 + 2 * i][...]          # bf16 [K_i, N_i]
        b = refs[2 + 2 * i][...]          # f32  [1,  N_i]
        h = jnp.dot(h.astype(jnp.bfloat16), w,
                    preferred_element_type=jnp.float32) + b
        h = jnp.maximum(h, 0.0)
        if i == tap:                      # post conv-5: local spatial features
            o_local[...] = h.astype(jnp.bfloat16)
    o_feat[...] = h.astype(jnp.bfloat16)


def encoder_forward(x_flat, layers):
    """x_flat: [2N, H*W*C] bf16 -> (local_flat [2N, S*P] bf16, feat [2N, P] bf16)."""
    m = x_flat.shape[0]
    args = [x_flat]
    in_specs = [pl.BlockSpec(x_flat.shape, lambda i: (0, 0))]
    for (w, b) in layers:
        in_specs.append(pl.BlockSpec(w.shape, lambda i: (0, 0)))   # resident
        in_specs.append(pl.BlockSpec(b.shape, lambda i: (0, 0)))   # resident
        args += [w, b]
    local_dim = layers[-2][0].shape[1]
    feat_dim = layers[-1][0].shape[1]
    kern = functools.partial(_encoder_kernel, n_layers=len(layers),
                             tap=len(layers) - 2)
    return pl.pallas_call(
        kern,
        out_shape=(jax.ShapeDtypeStruct((m, local_dim), jnp.bfloat16),
                   jax.ShapeDtypeStruct((m, feat_dim), jnp.bfloat16)),
        grid=(1,),
        in_specs=in_specs,
        out_specs=(pl.BlockSpec((m, local_dim), lambda i: (0, 0)),
                   pl.BlockSpec((m, feat_dim), lambda i: (0, 0))),
        compiler_params=pltpu.CompilerParams(
            dimension_semantics=("arbitrary",),
            vmem_limit_bytes=32 * 1024 * 1024),
    )(*args)


# ----------------------------------------------------------------------------
# Kernel 2: the whole post-encoder head in one call
#   rows of jo_in: [x_ti|m_ti|c_ti], [x_t|m_t|c_t],
#                  [local_prev|m_t|c_t]*S, [local_t|m_ti|c_ti]*S
# ----------------------------------------------------------------------------
def _head_kernel(x_ref, w1, b1, w2, b2, w3, b3, waf, baf, wact, bact,
                 ws1, bs1, ws2, bs2, wja, wjb, bj, o1_ref, o2_ref, *, n, s, p):
    f32, bf16 = jnp.float32, jnp.bfloat16
    x = x_ref[...]                                            # [2n+2sn, p+5] bf16
    # measurements / command folded into the join_obs chain via block-diagonal
    # weights (identity pass-through on the feature columns; ReLU-safe).
    h = jnp.maximum(jnp.dot(x, w1[...], preferred_element_type=f32) + b1[...], 0.0)
    h = jnp.maximum(jnp.dot(h.astype(bf16), w2[...],
                            preferred_element_type=f32) + b2[...], 0.0)
    jo = jnp.maximum(jnp.dot(h.astype(bf16), w3[...],
                             preferred_element_type=f32) + b3[...], 0.0)   # [rows, p]
    f_t_global = jo[0:n]                                      # f32 [n, p]
    obs_t_prev = jo[n:2 * n].astype(bf16)                     # [n, p]
    obs_prev_loc = jo[2 * n:2 * n + s * n].astype(bf16)       # [s*n, p]
    pred_t_local = jo[2 * n + s * n:2 * n + 2 * s * n].astype(bf16)
    x_t = x[n:2 * n, 0:p]                                     # bf16 [n, p]

    # actionfeat -> action  and  speed_branch (both end layers, no final ReLU)
    a_feat = jnp.maximum(jnp.dot(obs_t_prev, waf[...],
                                 preferred_element_type=f32) + baf[...], 0.0)
    a_pred = jnp.dot(a_feat.astype(bf16), wact[...],
                     preferred_element_type=f32) + bact[...]              # [n, 3]
    sp_h = jnp.maximum(jnp.dot(x_t, ws1[...],
                               preferred_element_type=f32) + bs1[...], 0.0)
    spd = jnp.dot(sp_h.astype(bf16), ws2[...],
                  preferred_element_type=f32) + bs2[...]                  # [n, 1]

    # join(obs_prev_local, a_feat): split weight, compute the a_feat half once
    # and broadcast it over the S positions in-kernel (no HBM tile).
    t1 = jnp.dot(obs_prev_loc, wja[...], preferred_element_type=f32)      # [s*n, p]
    t2 = jnp.dot(a_feat.astype(bf16), wjb[...], preferred_element_type=f32)  # [n, p]
    f_ti_pred = jnp.maximum(t1 + jnp.concatenate([t2] * s, axis=0) + bj[...], 0.0)

    # lane-packed output slabs
    o1_ref[...] = jnp.concatenate([f_t_global, a_pred, spd], axis=1)      # [n, p+4] f32
    o2_ref[...] = jnp.concatenate([pred_t_local, f_ti_pred.astype(bf16)],
                                  axis=1)                                 # [s*n, 2p] bf16


_HEAD_WEIGHT_NAMES = ["w1", "b1", "w2", "b2", "w3", "b3", "waf", "baf",
                      "wact", "bact", "ws1", "bs1", "ws2", "bs2",
                      "wja", "wjb", "bj"]


def head_forward(jo_in, weights, *, n, s, p):
    args = [jo_in] + [weights[k] for k in _HEAD_WEIGHT_NAMES]
    in_specs = [pl.BlockSpec(a.shape, lambda i: (0, 0)) for a in args]
    out_shape = (jax.ShapeDtypeStruct((n, p + NUM_TARGETS + 1), jnp.float32),
                 jax.ShapeDtypeStruct((s * n, 2 * p), jnp.bfloat16))
    out_specs = (pl.BlockSpec((n, p + NUM_TARGETS + 1), lambda i: (0, 0)),
                 pl.BlockSpec((s * n, 2 * p), lambda i: (0, 0)))
    kern = functools.partial(_head_kernel, n=n, s=s, p=p)
    return pl.pallas_call(
        kern,
        out_shape=out_shape,
        grid=(1,),
        in_specs=in_specs,
        out_specs=out_specs,
        compiler_params=pltpu.CompilerParams(
            dimension_semantics=("arbitrary",),
            vmem_limit_bytes=32 * 1024 * 1024),
    )(*args)


# ----------------------------------------------------------------------------
# Kernel 3: InfoNCE (both stdim terms, gridded over S) + action/speed L1 losses
# ----------------------------------------------------------------------------
def _loss_kernel(local_ref, gh_ref, a_ref, m0_ref, out_ref, acc_ref,
                 *, n_batch, s_total, p):
    step = pl.program_id(0)

    @pl.when(step == 0)
    def _init():
        acc_ref[0] = jnp.float32(0.0)
        acc_ref[1] = jnp.float32(0.0)

    blk = local_ref[0]                       # [N, 2P] bf16 (one spatial position)
    pred_local = blk[:, 0:p]                 # [N, P]
    pos = blk[:, p:2 * p]                    # [N, P]
    g = gh_ref[:, 0:p].astype(jnp.bfloat16)  # resident f_t_global [N, P]

    logits_a = jnp.einsum("nd,md->nm", g, pos,
                          preferred_element_type=jnp.float32)       # [N, N]
    logits_b = jnp.einsum("nd,md->nm", pred_local, pos,
                          preferred_element_type=jnp.float32)
    pos_f = pos.astype(jnp.float32)
    diag_a = jnp.sum(g.astype(jnp.float32) * pos_f, axis=-1, keepdims=True)
    diag_b = jnp.sum(pred_local.astype(jnp.float32) * pos_f, axis=-1,
                     keepdims=True)

    def _mean_ce(logits, diag):
        mx = jnp.max(logits, axis=-1, keepdims=True)
        lse = jnp.log(jnp.sum(jnp.exp(logits - mx), axis=-1, keepdims=True)) + mx
        return jnp.sum(lse - diag) / n_batch

    acc_ref[0] = acc_ref[0] + _mean_ce(logits_a, diag_a)
    acc_ref[1] = acc_ref[1] + _mean_ce(logits_b, diag_b)

    @pl.when(step == pl.num_programs(0) - 1)
    def _finalize():
        head = gh_ref[:, p:p + NUM_TARGETS + 1]          # [N, 4] f32
        a_pred = head[:, 0:NUM_TARGETS]
        spd = head[:, NUM_TARGETS:NUM_TARGETS + 1]
        la = jnp.abs(a_pred - a_ref[...])
        loss_action = jnp.sum(la[:, 0:1] * VARIABLE_WEIGHT["Steer"]
                              + la[:, 1:2] * VARIABLE_WEIGHT["Gas"]
                              + la[:, 2:3] * VARIABLE_WEIGHT["Brake"])
        loss_speed = jnp.sum(jnp.abs(spd - m0_ref[...]))
        # sum_a (not /S) is added to loss1, sum_b is /S -- matches the original.
        loss1 = (loss_action * BRANCH_LOSS_WEIGHT[0] / n_batch
                 + loss_speed * BRANCH_LOSS_WEIGHT[1] / n_batch
                 + acc_ref[0])
        loss3 = acc_ref[1] / float(s_total)
        stdim = loss3 * (LOSSES_WEIGHTS["stdim"] / 2.0)   # loss2 term is exactly 0
        out_ref[0] = loss1 * LOSSES_WEIGHTS["control_t"] + stdim
        out_ref[1] = loss1
        out_ref[2] = stdim


def loss_forward(local_pair, glob_head, a, m0):
    """local_pair: [S, N, 2P] bf16 ([pred_t_local | f_ti_pred] per position);
    glob_head: [N, P+4] f32 ([f_t_global | action | speed]).  Returns (3,) f32:
    (loss, loss1, stdim_term)."""
    s, n, c = local_pair.shape
    p = c // 2
    kern = functools.partial(_loss_kernel, n_batch=n, s_total=s, p=p)
    return pl.pallas_call(
        kern,
        out_shape=jax.ShapeDtypeStruct((3,), jnp.float32),
        grid=(s,),
        in_specs=[pl.BlockSpec((1, n, c), lambda i: (i, 0, 0)),
                  pl.BlockSpec(glob_head.shape, lambda i: (0, 0)),
                  pl.BlockSpec(a.shape, lambda i: (0, 0)),
                  pl.BlockSpec(m0.shape, lambda i: (0, 0))],
        out_specs=pl.BlockSpec(memory_space=pltpu.MemorySpace.SMEM),
        scratch_shapes=[pltpu.SMEM((2,), jnp.float32)],
        compiler_params=pltpu.CompilerParams(
            dimension_semantics=("arbitrary",)),
    )(local_pair, glob_head, a, m0)


# ----------------------------------------------------------------------------
# Model: deterministic synthetic weights, pre-packed / pre-cast at init
# ----------------------------------------------------------------------------
class ETEDIMPallas:
    def __init__(self, key):
        ks = jax.random.split(key, 8)
        P, CM, CC, ACT = 32, 8, 8, 32
        self.P = P
        bf16 = jnp.bfloat16

        # ---- conv encoder -> dense composite matrices -----------------------
        kenc = ks[0]
        channels = [3, 8, 16, 16, 32, 32]
        strides = [2, 2, 1, 2, 1]
        hw = (16, 16)
        enc_layers = []
        for li in range(5):
            kenc, k1, k2 = jax.random.split(kenc, 3)
            w = 0.1 * jax.random.normal(
                k1, (channels[li + 1], channels[li], 3, 3), jnp.float32)
            b = 0.01 * jax.random.normal(k2, (channels[li + 1],), jnp.float32)
            mat, hw = _conv_as_dense(w, hw, strides[li])
            bias = jnp.tile(b, (hw[0] * hw[1],)).reshape(1, -1)
            enc_layers.append((mat.astype(bf16), bias))
        self.S = hw[0] * hw[1]
        flat = channels[-1] * hw[0] * hw[1]
        kenc, k1, k2 = jax.random.split(kenc, 3)
        fc_w = 0.1 * jax.random.normal(k1, (flat, P), jnp.float32)
        fc_b = 0.01 * jax.random.normal(k2, (P,), jnp.float32)
        enc_layers.append((fc_w.astype(bf16), fc_b.reshape(1, -1)))
        self.enc_layers = enc_layers

        # ---- head weights ----------------------------------------------------
        def lin(k, kin, kout):
            k1, k2 = jax.random.split(k)
            w = 0.1 * jax.random.normal(k1, (kin, kout), jnp.float32)
            b = 0.01 * jax.random.normal(k2, (kout,), jnp.float32)
            return w, b

        km = jax.random.split(ks[1], 2)
        wm1, bm1 = lin(km[0], 1, CM)
        wm2, bm2 = lin(km[1], CM, CM)
        kc = jax.random.split(ks[2], 2)
        wc1, bc1 = lin(kc[0], 4, CC)
        wc2, bc2 = lin(kc[1], CC, CC)
        wjo, bjo = lin(ks[3], P + CM + CC, P)
        waf, baf = lin(ks[4], P, ACT)
        wact, bact = lin(ks[5], ACT, NUM_TARGETS)
        wjoin, bjoin = lin(ks[6], ACT + P, P)
        ksp = jax.random.split(ks[7], 2)
        ws1, bs1 = lin(ksp[0], P, 16)
        ws2, bs2 = lin(ksp[1], 16, 1)

        eye_p = jnp.eye(P, dtype=jnp.float32)
        zeros_p = jnp.zeros((P,), jnp.float32)
        w1 = _block_diag([eye_p, wm1, wc1])          # [P+5, P+16]
        b1 = jnp.concatenate([zeros_p, bm1, bc1])
        w2 = _block_diag([eye_p, wm2, wc2])          # [P+16, P+16]
        b2 = jnp.concatenate([zeros_p, bm2, bc2])
        self.head_w = dict(
            w1=w1.astype(bf16), b1=b1.reshape(1, -1),
            w2=w2.astype(bf16), b2=b2.reshape(1, -1),
            w3=wjo.astype(bf16), b3=bjo.reshape(1, -1),
            waf=waf.astype(bf16), baf=baf.reshape(1, -1),
            wact=wact.astype(bf16), bact=bact.reshape(1, -1),
            ws1=ws1.astype(bf16), bs1=bs1.reshape(1, -1),
            ws2=ws2.astype(bf16), bs2=bs2.reshape(1, -1),
            wja=wjoin[:ACT].astype(bf16), wjb=wjoin[ACT:].astype(bf16),
            bj=bjoin.reshape(1, -1),
        )

    def forward(self, x, m, c, a):
        N = x[0].shape[0]
        P, S = self.P, self.S

        # --- both frames through the fused conv-encoder kernel (NHWC-flat) ---
        xb = jnp.concatenate([x[0], x[1]], axis=0)                     # [2N,3,H,W]
        xb = xb.transpose(0, 2, 3, 1).reshape(2 * N, -1).astype(jnp.bfloat16)
        local_flat, feat = encoder_forward(xb, self.enc_layers)
        feat_t, feat_ti = feat[:N], feat[N:]
        lf = local_flat.reshape(2 * N, S, P)
        lp_flat = lf[:N].transpose(1, 0, 2).reshape(S * N, P)          # position-major
        lt_flat = lf[N:].transpose(1, 0, 2).reshape(S * N, P)

        # --- raw 5-wide measurement/command columns (no processed-feature tiles)
        mc_t = jnp.concatenate([m[0], c[0]], axis=1).astype(jnp.bfloat16)
        mc_ti = jnp.concatenate([m[1], c[1]], axis=1).astype(jnp.bfloat16)
        jo_in = jnp.concatenate([
            jnp.concatenate([feat_ti, mc_ti], axis=1),
            jnp.concatenate([feat_t, mc_t], axis=1),
            jnp.concatenate([lp_flat, jnp.tile(mc_t, (S, 1))], axis=1),
            jnp.concatenate([lt_flat, jnp.tile(mc_ti, (S, 1))], axis=1),
        ], axis=0)                                                     # [2N+2SN, P+5]

        # --- whole head in one kernel ---
        glob_head, local_pair = head_forward(jo_in, self.head_w, n=N, s=S, p=P)
        local_pair = local_pair.reshape(S, N, 2 * P)

        # --- InfoNCE (both terms) + action/speed L1 in one kernel ---
        out = loss_forward(local_pair, glob_head, a, m[0])
        return out[0], out[1], out[2]


# ----------------------------------------------------------------------------
if __name__ == "__main__":
    key = jax.random.PRNGKey(0)
    kmodel, kx0, kx1, km0, km1, kc, ka = jax.random.split(key, 7)

    model = ETEDIMPallas(kmodel)

    N = 2
    x = [jax.random.normal(kx0, (N, 3, 16, 16), jnp.float32),
         jax.random.normal(kx1, (N, 3, 16, 16), jnp.float32)]
    m = [jax.random.normal(km0, (N, 1), jnp.float32),
         jax.random.normal(km1, (N, 1), jnp.float32)]
    c_idx = jax.random.randint(kc, (2, N), 0, 4)
    c = [jax.nn.one_hot(c_idx[0], 4, dtype=jnp.float32),
         jax.nn.one_hot(c_idx[1], 4, dtype=jnp.float32)]
    a = jax.random.normal(ka, (N, NUM_TARGETS), jnp.float32)

    fwd = jax.jit(lambda x, m, c, a: model.forward(x, m, c, a))
    loss, loss1, loss_stdim = fwd(x, m, c, a)
    jax.block_until_ready((loss, loss1, loss_stdim))
    print("KERNEL_OK")
</pallas_src>

<mosaic_0001>
module attributes {stable_mosaic.version = 11 : i64} {
  func.func @_encoder_kernel(%arg0: i32, %arg1: memref<4x768xbf16, #tpu.memory_space<vmem>>, %arg2: memref<768x512xbf16, #tpu.memory_space<vmem>>, %arg3: memref<1x512xf32, #tpu.memory_space<vmem>>, %arg4: memref<512x256xbf16, #tpu.memory_space<vmem>>, %arg5: memref<1x256xf32, #tpu.memory_space<vmem>>, %arg6: memref<256x256xbf16, #tpu.memory_space<vmem>>, %arg7: memref<1x256xf32, #tpu.memory_space<vmem>>, %arg8: memref<256x128xbf16, #tpu.memory_space<vmem>>, %arg9: memref<1x128xf32, #tpu.memory_space<vmem>>, %arg10: memref<128x128xbf16, #tpu.memory_space<vmem>>, %arg11: memref<1x128xf32, #tpu.memory_space<vmem>>, %arg12: memref<128x32xbf16, #tpu.memory_space<vmem>>, %arg13: memref<1x32xf32, #tpu.memory_space<vmem>>, %arg14: memref<4x128xbf16, #tpu.memory_space<vmem>>, %arg15: memref<4x32xbf16, #tpu.memory_space<vmem>>) attributes {dimension_semantics = [#tpu.dimension_semantics<arbitrary>], iteration_bounds = array<i64: 1>, scalar_prefetch = 0 : i64, scratch_operands = 0 : i64, tpu.core_type = #tpu.core_type<tc>, window_params = [{pipeline_mode = #tpu.pipeline_mode<synchronous>, transform_indices = @transform_0, window_bounds = array<i64: 4, 768>}, {pipeline_mode = #tpu.pipeline_mode<synchronous>, transform_indices = @transform_1, window_bounds = array<i64: 768, 512>}, {pipeline_mode = #tpu.pipeline_mode<synchronous>, transform_indices = @transform_2, window_bounds = array<i64: 1, 512>}, {pipeline_mode = #tpu.pipeline_mode<synchronous>, transform_indices = @transform_3, window_bounds = array<i64: 512, 256>}, {pipeline_mode = #tpu.pipeline_mode<synchronous>, transform_indices = @transform_4, window_bounds = array<i64: 1, 256>}, {pipeline_mode = #tpu.pipeline_mode<synchronous>, transform_indices = @transform_5, window_bounds = array<i64: 256, 256>}, {pipeline_mode = #tpu.pipeline_mode<synchronous>, transform_indices = @transform_6, window_bounds = array<i64: 1, 256>}, {pipeline_mode = #tpu.pipeline_mode<synchronous>, transform_indices = @transform_7, window_bounds = array<i64: 256, 128>}, {pipeline_mode = #tpu.pipeline_mode<synchronous>, transform_indices = @transform_8, window_bounds = array<i64: 1, 128>}, {pipeline_mode = #tpu.pipeline_mode<synchronous>, transform_indices = @transform_9, window_bounds = array<i64: 128, 128>}, {pipeline_mode = #tpu.pipeline_mode<synchronous>, transform_indices = @transform_10, window_bounds = array<i64: 1, 128>}, {pipeline_mode = #tpu.pipeline_mode<synchronous>, transform_indices = @transform_11, window_bounds = array<i64: 128, 32>}, {pipeline_mode = #tpu.pipeline_mode<synchronous>, transform_indices = @transform_12, window_bounds = array<i64: 1, 32>}, {pipeline_mode = #tpu.pipeline_mode<synchronous>, transform_indices = @transform_13, window_bounds = array<i64: 4, 128>}, {pipeline_mode = #tpu.pipeline_mode<synchronous>, transform_indices = @transform_14, window_bounds = array<i64: 4, 32>}]} {
    %c0 = arith.constant 0 : index
    %c0_0 = arith.constant 0 : index
    %0 = vector.load %arg1[%c0, %c0_0] : memref<4x768xbf16, #tpu.memory_space<vmem>>, vector<4x768xbf16>
    %c0_1 = arith.constant 0 : index
    %c0_2 = arith.constant 0 : index
    %1 = vector.load %arg2[%c0_1, %c0_2] : memref<768x512xbf16, #tpu.memory_space<vmem>>, vector<768x512xbf16>
    %c0_3 = arith.constant 0 : index
    %c0_4 = arith.constant 0 : index
    %2 = vector.load %arg3[%c0_3, %c0_4] : memref<1x512xf32, #tpu.memory_space<vmem>>, vector<1x512xf32>
    %cst = arith.constant dense<0.000000e+00> : vector<4x512xf32>
    %3 = tpu.matmul %0, %1, %cst {dimension_numbers = #tpu.dot_dimension_numbers<[1], [0], [0], [1], [0, 0, 1, 1], [], []>} : vector<4x768xbf16>, vector<768x512xbf16>, vector<4x512xf32> -> vector<4x512xf32>
    %4 = vector.broadcast %2 : vector<1x512xf32> to vector<4x512xf32>
    %5 = arith.addf %3, %4 : vector<4x512xf32>
    %cst_5 = arith.constant 0.000000e+00 : f32
    %6 = vector.broadcast %cst_5 : f32 to vector<4x512xf32>
    %7 = arith.maximumf %5, %6 : vector<4x512xf32>
    %c0_6 = arith.constant 0 : index
    %c0_7 = arith.constant 0 : index
    %8 = vector.load %arg4[%c0_6, %c0_7] : memref<512x256xbf16, #tpu.memory_space<vmem>>, vector<512x256xbf16>
    %c0_8 = arith.constant 0 : index
    %c0_9 = arith.constant 0 : index
    %9 = vector.load %arg5[%c0_8, %c0_9] : memref<1x256xf32, #tpu.memory_space<vmem>>, vector<1x256xf32>
    %10 = arith.truncf %7 : vector<4x512xf32> to vector<4x512xbf16>
    %cst_10 = arith.constant dense<0.000000e+00> : vector<4x256xf32>
    %11 = tpu.matmul %10, %8, %cst_10 {dimension_numbers = #tpu.dot_dimension_numbers<[1], [0], [0], [1], [0, 0, 1, 1], [], []>} : vector<4x512xbf16>, vector<512x256xbf16>, vector<4x256xf32> -> vector<4x256xf32>
    %12 = vector.broadcast %9 : vector<1x256xf32> to vector<4x256xf32>
    %13 = arith.addf %11, %12 : vector<4x256xf32>
    %cst_11 = arith.constant 0.000000e+00 : f32
    %14 = vector.broadcast %cst_11 : f32 to vector<4x256xf32>
    %15 = arith.maximumf %13, %14 : vector<4x256xf32>
    %c0_12 = arith.constant 0 : index
    %c0_13 = arith.constant 0 : index
    %16 = vector.load %arg6[%c0_12, %c0_13] : memref<256x256xbf16, #tpu.memory_space<vmem>>, vector<256x256xbf16>
    %c0_14 = arith.constant 0 : index
    %c0_15 = arith.constant 0 : index
    %17 = vector.load %arg7[%c0_14, %c0_15] : memref<1x256xf32, #tpu.memory_space<vmem>>, vector<1x256xf32>
    %18 = arith.truncf %15 : vector<4x256xf32> to vector<4x256xbf16>
    %cst_16 = arith.constant dense<0.000000e+00> : vector<4x256xf32>
    %19 = tpu.matmul %18, %16, %cst_16 {dimension_numbers = #tpu.dot_dimension_numbers<[1], [0], [0], [1], [0, 0, 1, 1], [], []>} : vector<4x256xbf16>, vector<256x256xbf16>, vector<4x256xf32> -> vector<4x256xf32>
    %20 = vector.broadcast %17 : vector<1x256xf32> to vector<4x256xf32>
    %21 = arith.addf %19, %20 : vector<4x256xf32>
    %cst_17 = arith.constant 0.000000e+00 : f32
    %22 = vector.broadcast %cst_17 : f32 to vector<4x256xf32>
    %23 = arith.maximumf %21, %22 : vector<4x256xf32>
    %c0_18 = arith.constant 0 : index
    %c0_19 = arith.constant 0 : index
    %24 = vector.load %arg8[%c0_18, %c0_19] : memref<256x128xbf16, #tpu.memory_space<vmem>>, vector<256x128xbf16>
    %c0_20 = arith.constant 0 : index
    %c0_21 = arith.constant 0 : index
    %25 = vector.load %arg9[%c0_20, %c0_21] : memref<1x128xf32, #tpu.memory_space<vmem>>, vector<1x128xf32>
    %26 = arith.truncf %23 : vector<4x256xf32> to vector<4x256xbf16>
    %cst_22 = arith.constant dense<0.000000e+00> : vector<4x128xf32>
    %27 = tpu.matmul %26, %24, %cst_22 {dimension_numbers = #tpu.dot_dimension_numbers<[1], [0], [0], [1], [0, 0, 1, 1], [], []>} : vector<4x256xbf16>, vector<256x128xbf16>, vector<4x128xf32> -> vector<4x128xf32>
    %28 = vector.broadcast %25 : vector<1x128xf32> to vector<4x128xf32>
    %29 = arith.addf %27, %28 : vector<4x128xf32>
    %cst_23 = arith.constant 0.000000e+00 : f32
    %30 = vector.broadcast %cst_23 : f32 to vector<4x128xf32>
    %31 = arith.maximumf %29, %30 : vector<4x128xf32>
    %c0_24 = arith.constant 0 : index
    %c0_25 = arith.constant 0 : index
    %32 = vector.load %arg10[%c0_24, %c0_25] : memref<128x128xbf16, #tpu.memory_space<vmem>>, vector<128x128xbf16>
    %c0_26 = arith.constant 0 : index
    %c0_27 = arith.constant 0 : index
    %33 = vector.load %arg11[%c0_26, %c0_27] : memref<1x128xf32, #tpu.memory_space<vmem>>, vector<1x128xf32>
    %34 = arith.truncf %31 : vector<4x128xf32> to vector<4x128xbf16>
    %cst_28 = arith.constant dense<0.000000e+00> : vector<4x128xf32>
    %35 = tpu.matmul %34, %32, %cst_28 {dimension_numbers = #tpu.dot_dimension_numbers<[1], [0], [0], [1], [0, 0, 1, 1], [], []>} : vector<4x128xbf16>, vector<128x128xbf16>, vector<4x128xf32> -> vector<4x128xf32>
    %36 = vector.broadcast %33 : vector<1x128xf32> to vector<4x128xf32>
    %37 = arith.addf %35, %36 : vector<4x128xf32>
    %cst_29 = arith.constant 0.000000e+00 : f32
    %38 = vector.broadcast %cst_29 : f32 to vector<4x128xf32>
    %39 = arith.maximumf %37, %38 : vector<4x128xf32>
    %40 = arith.truncf %39 : vector<4x128xf32> to vector<4x128xbf16>
    %c0_30 = arith.constant 0 : index
    %c0_31 = arith.constant 0 : index
    %41 = vector.load %arg14[%c0_30, %c0_31] : memref<4x128xbf16, #tpu.memory_space<vmem>>, vector<4x128xbf16>
    tpu.vector_store %arg14[%c0_30, %c0_31], %40 {strides = array<i32>} : memref<4x128xbf16, #tpu.memory_space<vmem>>, vector<4x128xbf16>,
    %c0_32 = arith.constant 0 : index
    %c0_33 = arith.constant 0 : index
    %42 = vector.load %arg12[%c0_32, %c0_33] : memref<128x32xbf16, #tpu.memory_space<vmem>>, vector<128x32xbf16>
    %c0_34 = arith.constant 0 : index
    %c0_35 = arith.constant 0 : index
    %43 = vector.load %arg13[%c0_34, %c0_35] : memref<1x32xf32, #tpu.memory_space<vmem>>, vector<1x32xf32>
    %44 = arith.truncf %39 : vector<4x128xf32> to vector<4x128xbf16>
    %cst_36 = arith.constant dense<0.000000e+00> : vector<4x32xf32>
    %45 = tpu.matmul %44, %42, %cst_36 {dimension_numbers = #tpu.dot_dimension_numbers<[1], [0], [0], [1], [0, 0, 1, 1], [], []>} : vector<4x128xbf16>, vector<128x32xbf16>, vector<4x32xf32> -> vector<4x32xf32>
    %46 = vector.broadcast %43 : vector<1x32xf32> to vector<4x32xf32>
    %47 = arith.addf %45, %46 : vector<4x32xf32>
    %cst_37 = arith.constant 0.000000e+00 : f32
    %48 = vector.broadcast %cst_37 : f32 to vector<4x32xf32>
    %49 = arith.maximumf %47, %48 : vector<4x32xf32>
    %50 = arith.truncf %49 : vector<4x32xf32> to vector<4x32xbf16>
    %c0_38 = arith.constant 0 : index
    %c0_39 = arith.constant 0 : index
    %51 = vector.load %arg15[%c0_38, %c0_39] : memref<4x32xbf16, #tpu.memory_space<vmem>>, vector<4x32xbf16>
    tpu.vector_store %arg15[%c0_38, %c0_39], %50 {strides = array<i32>} : memref<4x32xbf16, #tpu.memory_space<vmem>>, vector<4x32xbf16>,
    return
  }
  func.func @transform_0(%arg0: i32) -> (i32, i32) {
    %c0_i32 = arith.constant 0 : i32
    %c0_i32_0 = arith.constant 0 : i32
    %c0_i32_1 = arith.constant 0 : i32
    return %c0_i32, %c0_i32_0 : i32, i32
  }
  func.func @transform_1(%arg0: i32) -> (i32, i32) {
    %c0_i32 = arith.constant 0 : i32
    %c0_i32_0 = arith.constant 0 : i32
    %c0_i32_1 = arith.constant 0 : i32
    return %c0_i32, %c0_i32_0 : i32, i32
  }
  func.func @transform_2(%arg0: i32) -> (i32, i32) {
    %c0_i32 = arith.constant 0 : i32
    %c0_i32_0 = arith.constant 0 : i32
    %c0_i32_1 = arith.constant 0 : i32
    return %c0_i32, %c0_i32_0 : i32, i32
  }
  func.func @transform_3(%arg0: i32) -> (i32, i32) {
    %c0_i32 = arith.constant 0 : i32
    %c0_i32_0 = arith.constant 0 : i32
    %c0_i32_1 = arith.constant 0 : i32
    return %c0_i32, %c0_i32_0 : i32, i32
  }
  func.func @transform_4(%arg0: i32) -> (i32, i32) {
    %c0_i32 = arith.constant 0 : i32
    %c0_i32_0 = arith.constant 0 : i32
    %c0_i32_1 = arith.constant 0 : i32
    return %c0_i32, %c0_i32_0 : i32, i32
  }
  func.func @transform_5(%arg0: i32) -> (i32, i32) {
    %c0_i32 = arith.constant 0 : i32
    %c0_i32_0 = arith.constant 0 : i32
    %c0_i32_1 = arith.constant 0 : i32
    return %c0_i32, %c0_i32_0 : i32, i32
  }
  func.func @transform_6(%arg0: i32) -> (i32, i32) {
    %c0_i32 = arith.constant 0 : i32
    %c0_i32_0 = arith.constant 0 : i32
    %c0_i32_1 = arith.constant 0 : i32
    return %c0_i32, %c0_i32_0 : i32, i32
  }
  func.func @transform_7(%arg0: i32) -> (i32, i32) {
    %c0_i32 = arith.constant 0 : i32
    %c0_i32_0 = arith.constant 0 : i32
    %c0_i32_1 = arith.constant 0 : i32
    return %c0_i32, %c0_i32_0 : i32, i32
  }
  func.func @transform_8(%arg0: i32) -> (i32, i32) {
    %c0_i32 = arith.constant 0 : i32
    %c0_i32_0 = arith.constant 0 : i32
    %c0_i32_1 = arith.constant 0 : i32
    return %c0_i32, %c0_i32_0 : i32, i32
  }
  func.func @transform_9(%arg0: i32) -> (i32, i32) {
    %c0_i32 = arith.constant 0 : i32
    %c0_i32_0 = arith.constant 0 : i32
    %c0_i32_1 = arith.constant 0 : i32
    return %c0_i32, %c0_i32_0 : i32, i32
  }
  func.func @transform_10(%arg0: i32) -> (i32, i32) {
    %c0_i32 = arith.constant 0 : i32
    %c0_i32_0 = arith.constant 0 : i32
    %c0_i32_1 = arith.constant 0 : i32
    return %c0_i32, %c0_i32_0 : i32, i32
  }
  func.func @transform_11(%arg0: i32) -> (i32, i32) {
    %c0_i32 = arith.constant 0 : i32
    %c0_i32_0 = arith.constant 0 : i32
    %c0_i32_1 = arith.constant 0 : i32
    return %c0_i32, %c0_i32_0 : i32, i32
  }
  func.func @transform_12(%arg0: i32) -> (i32, i32) {
    %c0_i32 = arith.constant 0 : i32
    %c0_i32_0 = arith.constant 0 : i32
    %c0_i32_1 = arith.constant 0 : i32
    return %c0_i32, %c0_i32_0 : i32, i32
  }
  func.func @transform_13(%arg0: i32) -> (i32, i32) {
    %c0_i32 = arith.constant 0 : i32
    %c0_i32_0 = arith.constant 0 : i32
    %c0_i32_1 = arith.constant 0 : i32
    return %c0_i32, %c0_i32_0 : i32, i32
  }
  func.func @transform_14(%arg0: i32) -> (i32, i32) {
    %c0_i32 = arith.constant 0 : i32
    %c0_i32_0 = arith.constant 0 : i32
    %c0_i32_1 = arith.constant 0 : i32
    return %c0_i32, %c0_i32_0 : i32, i32
  }
}

module attributes {stable_mosaic.version = 11 : i64} {
  func.func @_head_kernel(%arg0: i32, %arg1: memref<20x37xbf16, #tpu.memory_space<vmem>>, %arg2: memref<37x48xbf16, #tpu.memory_space<vmem>>, %arg3: memref<1x48xf32, #tpu.memory_space<vmem>>, %arg4: memref<48x48xbf16, #tpu.memory_space<vmem>>, %arg5: memref<1x48xf32, #tpu.memory_space<vmem>>, %arg6: memref<48x32xbf16, #tpu.memory_space<vmem>>, %arg7: memref<1x32xf32, #tpu.memory_space<vmem>>, %arg8: memref<32x32xbf16, #tpu.memory_space<vmem>>, %arg9: memref<1x32xf32, #tpu.memory_space<vmem>>, %arg10: memref<32x3xbf16, #tpu.memory_space<vmem>>, %arg11: memref<1x3xf32, #tpu.memory_space<vmem>>, %arg12: memref<32x16xbf16, #tpu.memory_space<vmem>>, %arg13: memref<1x16xf32, #tpu.memory_space<vmem>>, %arg14: memref<16x1xbf16, #tpu.memory_space<vmem>>, %arg15: memref<1x1xf32, #tpu.memory_space<vmem>>, %arg16: memref<32x32xbf16, #tpu.memory_space<vmem>>, %arg17: memref<32x32xbf16, #tpu.memory_space<vmem>>, %arg18: memref<1x32xf32, #tpu.memory_space<vmem>>, %arg19: memref<2x36xf32, #tpu.memory_space<vmem>>, %arg20: memref<8x64xbf16, #tpu.memory_space<vmem>>) attributes {dimension_semantics = [#tpu.dimension_semantics<arbitrary>], iteration_bounds = array<i64: 1>, scalar_prefetch = 0 : i64, scratch_operands = 0 : i64, tpu.core_type = #tpu.core_type<tc>, window_params = [{pipeline_mode = #tpu.pipeline_mode<synchronous>, transform_indices = @transform_0, window_bounds = array<i64: 20, 37>}, {pipeline_mode = #tpu.pipeline_mode<synchronous>, transform_indices = @transform_1, window_bounds = array<i64: 37, 48>}, {pipeline_mode = #tpu.pipeline_mode<synchronous>, transform_indices = @transform_2, window_bounds = array<i64: 1, 48>}, {pipeline_mode = #tpu.pipeline_mode<synchronous>, transform_indices = @transform_3, window_bounds = array<i64: 48, 48>}, {pipeline_mode = #tpu.pipeline_mode<synchronous>, transform_indices = @transform_4, window_bounds = array<i64: 1, 48>}, {pipeline_mode = #tpu.pipeline_mode<synchronous>, transform_indices = @transform_5, window_bounds = array<i64: 48, 32>}, {pipeline_mode = #tpu.pipeline_mode<synchronous>, transform_indices = @transform_6, window_bounds = array<i64: 1, 32>}, {pipeline_mode = #tpu.pipeline_mode<synchronous>, transform_indices = @transform_7, window_bounds = array<i64: 32, 32>}, {pipeline_mode = #tpu.pipeline_mode<synchronous>, transform_indices = @transform_8, window_bounds = array<i64: 1, 32>}, {pipeline_mode = #tpu.pipeline_mode<synchronous>, transform_indices = @transform_9, window_bounds = array<i64: 32, 3>}, {pipeline_mode = #tpu.pipeline_mode<synchronous>, transform_indices = @transform_10, window_bounds = array<i64: 1, 3>}, {pipeline_mode = #tpu.pipeline_mode<synchronous>, transform_indices = @transform_11, window_bounds = array<i64: 32, 16>}, {pipeline_mode = #tpu.pipeline_mode<synchronous>, transform_indices = @transform_12, window_bounds = array<i64: 1, 16>}, {pipeline_mode = #tpu.pipeline_mode<synchronous>, transform_indices = @transform_13, window_bounds = array<i64: 16, 1>}, {pipeline_mode = #tpu.pipeline_mode<synchronous>, transform_indices = @transform_14, window_bounds = array<i64: 1, 1>}, {pipeline_mode = #tpu.pipeline_mode<synchronous>, transform_indices = @transform_15, window_bounds = array<i64: 32, 32>}, {pipeline_mode = #tpu.pipeline_mode<synchronous>, transform_indices = @transform_16, window_bounds = array<i64: 32, 32>}, {pipeline_mode = #tpu.pipeline_mode<synchronous>, transform_indices = @transform_17, window_bounds = array<i64: 1, 32>}, {pipeline_mode = #tpu.pipeline_mode<synchronous>, transform_indices = @transform_18, window_bounds = array<i64: 2, 36>}, {pipeline_mode = #tpu.pipeline_mode<synchronous>, transform_indices = @transform_19, window_bounds = array<i64: 8, 64>}]} {
    %c0 = arith.constant 0 : index
    %c0_0 = arith.constant 0 : index
    %0 = vector.load %arg1[%c0, %c0_0] : memref<20x37xbf16, #tpu.memory_space<vmem>>, vector<20x37xbf16>
    %c0_1 = arith.constant 0 : index
    %c0_2 = arith.constant 0 : index
    %1 = vector.load %arg2[%c0_1, %c0_2] : memref<37x48xbf16, #tpu.memory_space<vmem>>, vector<37x48xbf16>
    %cst = arith.constant dense<0.000000e+00> : vector<20x48xf32>
    %2 = tpu.matmul %0, %1, %cst {dimension_numbers = #tpu.dot_dimension_numbers<[1], [0], [0], [1], [0, 0, 1, 1], [], []>} : vector<20x37xbf16>, vector<37x48xbf16>, vector<20x48xf32> -> vector<20x48xf32>
    %c0_3 = arith.constant 0 : index
    %c0_4 = arith.constant 0 : index
    %3 = vector.load %arg3[%c0_3, %c0_4] : memref<1x48xf32, #tpu.memory_space<vmem>>, vector<1x48xf32>
    %4 = vector.broadcast %3 : vector<1x48xf32> to vector<20x48xf32>
    %5 = arith.addf %2, %4 : vector<20x48xf32>
    %cst_5 = arith.constant 0.000000e+00 : f32
    %6 = vector.broadcast %cst_5 : f32 to vector<20x48xf32>
    %7 = arith.maximumf %5, %6 : vector<20x48xf32>
    %8 = arith.truncf %7 : vector<20x48xf32> to vector<20x48xbf16>
    %c0_6 = arith.constant 0 : index
    %c0_7 = arith.constant 0 : index
    %9 = vector.load %arg4[%c0_6, %c0_7] : memref<48x48xbf16, #tpu.memory_space<vmem>>, vector<48x48xbf16>
    %cst_8 = arith.constant dense<0.000000e+00> : vector<20x48xf32>
    %10 = tpu.matmul %8, %9, %cst_8 {dimension_numbers = #tpu.dot_dimension_numbers<[1], [0], [0], [1], [0, 0, 1, 1], [], []>} : vector<20x48xbf16>, vector<48x48xbf16>, vector<20x48xf32> -> vector<20x48xf32>
    %c0_9 = arith.constant 0 : index
    %c0_10 = arith.constant 0 : index
    %11 = vector.load %arg5[%c0_9, %c0_10] : memref<1x48xf32, #tpu.memory_space<vmem>>, vector<1x48xf32>
    %12 = vector.broadcast %11 : vector<1x48xf32> to vector<20x48xf32>
    %13 = arith.addf %10, %12 : vector<20x48xf32>
    %cst_11 = arith.constant 0.000000e+00 : f32
    %14 = vector.broadcast %cst_11 : f32 to vector<20x48xf32>
    %15 = arith.maximumf %13, %14 : vector<20x48xf32>
    %16 = arith.truncf %15 : vector<20x48xf32> to vector<20x48xbf16>
    %c0_12 = arith.constant 0 : index
    %c0_13 = arith.constant 0 : index
    %17 = vector.load %arg6[%c0_12, %c0_13] : memref<48x32xbf16, #tpu.memory_space<vmem>>, vector<48x32xbf16>
    %cst_14 = arith.constant dense<0.000000e+00> : vector<20x32xf32>
    %18 = tpu.matmul %16, %17, %cst_14 {dimension_numbers = #tpu.dot_dimension_numbers<[1], [0], [0], [1], [0, 0, 1, 1], [], []>} : vector<20x48xbf16>, vector<48x32xbf16>, vector<20x32xf32> -> vector<20x32xf32>
    %c0_15 = arith.constant 0 : index
    %c0_16 = arith.constant 0 : index
    %19 = vector.load %arg7[%c0_15, %c0_16] : memref<1x32xf32, #tpu.memory_space<vmem>>, vector<1x32xf32>
    %20 = vector.broadcast %19 : vector<1x32xf32> to vector<20x32xf32>
    %21 = arith.addf %18, %20 : vector<20x32xf32>
    %cst_17 = arith.constant 0.000000e+00 : f32
    %22 = vector.broadcast %cst_17 : f32 to vector<20x32xf32>
    %23 = arith.maximumf %21, %22 : vector<20x32xf32>
    %24 = vector.extract_strided_slice %23 {offsets = [0, 0], sizes = [2, 32], strides = [1, 1]} : vector<20x32xf32> to vector<2x32xf32>
    %25 = vector.extract_strided_slice %23 {offsets = [2, 0], sizes = [2, 32], strides = [1, 1]} : vector<20x32xf32> to vector<2x32xf32>
    %26 = arith.truncf %25 : vector<2x32xf32> to vector<2x32xbf16>
    %27 = vector.extract_strided_slice %23 {offsets = [4, 0], sizes = [8, 32], strides = [1, 1]} : vector<20x32xf32> to vector<8x32xf32>
    %28 = arith.truncf %27 : vector<8x32xf32> to vector<8x32xbf16>
    %29 = vector.extract_strided_slice %23 {offsets = [12, 0], sizes = [8, 32], strides = [1, 1]} : vector<20x32xf32> to vector<8x32xf32>
    %30 = arith.truncf %29 : vector<8x32xf32> to vector<8x32xbf16>
    %31 = vector.extract_strided_slice %0 {offsets = [2, 0], sizes = [2, 32], strides = [1, 1]} : vector<20x37xbf16> to vector<2x32xbf16>
    %c0_18 = arith.constant 0 : index
    %c0_19 = arith.constant 0 : index
    %32 = vector.load %arg8[%c0_18, %c0_19] : memref<32x32xbf16, #tpu.memory_space<vmem>>, vector<32x32xbf16>
    %cst_20 = arith.constant dense<0.000000e+00> : vector<2x32xf32>
    %33 = tpu.matmul %26, %32, %cst_20 {dimension_numbers = #tpu.dot_dimension_numbers<[1], [0], [0], [1], [0, 0, 1, 1], [], []>} : vector<2x32xbf16>, vector<32x32xbf16>, vector<2x32xf32> -> vector<2x32xf32>
    %c0_21 = arith.constant 0 : index
    %c0_22 = arith.constant 0 : index
    %34 = vector.load %arg9[%c0_21, %c0_22] : memref<1x32xf32, #tpu.memory_space<vmem>>, vector<1x32xf32>
    %35 = vector.broadcast %34 : vector<1x32xf32> to vector<2x32xf32>
    %36 = arith.addf %33, %35 : vector<2x32xf32>
    %cst_23 = arith.constant 0.000000e+00 : f32
    %37 = vector.broadcast %cst_23 : f32 to vector<2x32xf32>
    %38 = arith.maximumf %36, %37 : vector<2x32xf32>
    %39 = arith.truncf %38 : vector<2x32xf32> to vector<2x32xbf16>
    %c0_24 = arith.constant 0 : index
    %c0_25 = arith.constant 0 : index
    %40 = vector.load %arg10[%c0_24, %c0_25] : memref<32x3xbf16, #tpu.memory_space<vmem>>, vector<32x3xbf16>
    %cst_26 = arith.constant dense<0.000000e+00> : vector<2x3xf32>
    %41 = tpu.matmul %39, %40, %cst_26 {dimension_numbers = #tpu.dot_dimension_numbers<[1], [0], [0], [1], [0, 0, 1, 1], [], []>} : vector<2x32xbf16>, vector<32x3xbf16>, vector<2x3xf32> -> vector<2x3xf32>
    %c0_27 = arith.constant 0 : index
    %c0_28 = arith.constant 0 : index
    %42 = vector.load %arg11[%c0_27, %c0_28] : memref<1x3xf32, #tpu.memory_space<vmem>>, vector<1x3xf32>
    %43 = vector.broadcast %42 : vector<1x3xf32> to vector<2x3xf32>
    %44 = arith.addf %41, %43 : vector<2x3xf32>
    %c0_29 = arith.constant 0 : index
    %c0_30 = arith.constant 0 : index
    %45 = vector.load %arg12[%c0_29, %c0_30] : memref<32x16xbf16, #tpu.memory_space<vmem>>, vector<32x16xbf16>
    %cst_31 = arith.constant dense<0.000000e+00> : vector<2x16xf32>
    %46 = tpu.matmul %31, %45, %cst_31 {dimension_numbers = #tpu.dot_dimension_numbers<[1], [0], [0], [1], [0, 0, 1, 1], [], []>} : vector<2x32xbf16>, vector<32x16xbf16>, vector<2x16xf32> -> vector<2x16xf32>
    %c0_32 = arith.constant 0 : index
    %c0_33 = arith.constant 0 : index
    %47 = vector.load %arg13[%c0_32, %c0_33] : memref<1x16xf32, #tpu.memory_space<vmem>>, vector<1x16xf32>
    %48 = vector.broadcast %47 : vector<1x16xf32> to vector<2x16xf32>
    %49 = arith.addf %46, %48 : vector<2x16xf32>
    %cst_34 = arith.constant 0.000000e+00 : f32
    %50 = vector.broadcast %cst_34 : f32 to vector<2x16xf32>
    %51 = arith.maximumf %49, %50 : vector<2x16xf32>
    %52 = arith.truncf %51 : vector<2x16xf32> to vector<2x16xbf16>
    %c0_35 = arith.constant 0 : index
    %c0_36 = arith.constant 0 : index
    %53 = vector.load %arg14[%c0_35, %c0_36] : memref<16x1xbf16, #tpu.memory_space<vmem>>, vector<16x1xbf16>
    %cst_37 = arith.constant dense<0.000000e+00> : vector<2x1xf32>
    %54 = tpu.matmul %52, %53, %cst_37 {dimension_numbers = #tpu.dot_dimension_numbers<[1], [0], [0], [1], [0, 0, 1, 1], [], []>} : vector<2x16xbf16>, vector<16x1xbf16>, vector<2x1xf32> -> vector<2x1xf32>
    %c0_38 = arith.constant 0 : index
    %c0_39 = arith.constant 0 : index
    %55 = vector.load %arg15[%c0_38, %c0_39] : memref<1x1xf32, #tpu.memory_space<vmem>>, vector<1x1xf32>
    %56 = vector.broadcast %55 : vector<1x1xf32> to vector<2x1xf32>
    %57 = arith.addf %54, %56 : vector<2x1xf32>
    %c0_40 = arith.constant 0 : index
    %c0_41 = arith.constant 0 : index
    %58 = vector.load %arg16[%c0_40, %c0_41] : memref<32x32xbf16, #tpu.memory_space<vmem>>, vector<32x32xbf16>
    %cst_42 = arith.constant dense<0.000000e+00> : vector<8x32xf32>
    %59 = tpu.matmul %28, %58, %cst_42 {dimension_numbers = #tpu.dot_dimension_numbers<[1], [0], [0], [1], [0, 0, 1, 1], [], []>} : vector<8x32xbf16>, vector<32x32xbf16>, vector<8x32xf32> -> vector<8x32xf32>
    %60 = arith.truncf %38 : vector<2x32xf32> to vector<2x32xbf16>
    %c0_43 = arith.constant 0 : index
    %c0_44 = arith.constant 0 : index
    %61 = vector.load %arg17[%c0_43, %c0_44] : memref<32x32xbf16, #tpu.memory_space<vmem>>, vector<32x32xbf16>
    %cst_45 = arith.constant dense<0.000000e+00> : vector<2x32xf32>
    %62 = tpu.matmul %60, %61, %cst_45 {dimension_numbers = #tpu.dot_dimension_numbers<[1], [0], [0], [1], [0, 0, 1, 1], [], []>} : vector<2x32xbf16>, vector<32x32xbf16>, vector<2x32xf32> -> vector<2x32xf32>
    %63 = tpu.concatenate %62, %62, %62, %62 in 0 : vector<2x32xf32>, vector<2x32xf32>, vector<2x32xf32>, vector<2x32xf32> -> vector<8x32xf32>
    %64 = arith.addf %59, %63 : vector<8x32xf32>
    %c0_46 = arith.constant 0 : index
    %c0_47 = arith.constant 0 : index
    %65 = vector.load %arg18[%c0_46, %c0_47] : memref<1x32xf32, #tpu.memory_space<vmem>>, vector<1x32xf32>
    %66 = vector.broadcast %65 : vector<1x32xf32> to vector<8x32xf32>
    %67 = arith.addf %64, %66 : vector<8x32xf32>
    %cst_48 = arith.constant 0.000000e+00 : f32
    %68 = vector.broadcast %cst_48 : f32 to vector<8x32xf32>
    %69 = arith.maximumf %67, %68 : vector<8x32xf32>
    %70 = tpu.concatenate %24, %44, %57 in 1 : vector<2x32xf32>, vector<2x3xf32>, vector<2x1xf32> -> vector<2x36xf32>
    %c0_49 = arith.constant 0 : index
    %c0_50 = arith.constant 0 : index
    %71 = vector.load %arg19[%c0_49, %c0_50] : memref<2x36xf32, #tpu.memory_space<vmem>>, vector<2x36xf32>
    tpu.vector_store %arg19[%c0_49, %c0_50], %70 {strides = array<i32>} : memref<2x36xf32, #tpu.memory_space<vmem>>, vector<2x36xf32>,
    %72 = arith.truncf %69 : vector<8x32xf32> to vector<8x32xbf16>
    %73 = tpu.concatenate %30, %72 in 1 : vector<8x32xbf16>, vector<8x32xbf16> -> vector<8x64xbf16>
    %c0_51 = arith.constant 0 : index
    %c0_52 = arith.constant 0 : index
    %74 = vector.load %arg20[%c0_51, %c0_52] : memref<8x64xbf16, #tpu.memory_space<vmem>>, vector<8x64xbf16>
    tpu.vector_store %arg20[%c0_51, %c0_52], %73 {strides = array<i32>} : memref<8x64xbf16, #tpu.memory_space<vmem>>, vector<8x64xbf16>,
    return
  }
  func.func @transform_0(%arg0: i32) -> (i32, i32) {
    %c0_i32 = arith.constant 0 : i32
    %c0_i32_0 = arith.constant 0 : i32
    %c0_i32_1 = arith.constant 0 : i32
    return %c0_i32, %c0_i32_0 : i32, i32
  }
  func.func @transform_1(%arg0: i32) -> (i32, i32) {
    %c0_i32 = arith.constant 0 : i32
    %c0_i32_0 = arith.constant 0 : i32
    %c0_i32_1 = arith.constant 0 : i32
    return %c0_i32, %c0_i32_0 : i32, i32
  }
  func.func @transform_2(%arg0: i32) -> (i32, i32) {
    %c0_i32 = arith.constant 0 : i32
    %c0_i32_0 = arith.constant 0 : i32
    %c0_i32_1 = arith.constant 0 : i32
    return %c0_i32, %c0_i32_0 : i32, i32
  }
  func.func @transform_3(%arg0: i32) -> (i32, i32) {
    %c0_i32 = arith.constant 0 : i32
    %c0_i32_0 = arith.constant 0 : i32
    %c0_i32_1 = arith.constant 0 : i32
    return %c0_i32, %c0_i32_0 : i32, i32
  }
  func.func @transform_4(%arg0: i32) -> (i32, i32) {
    %c0_i32 = arith.constant 0 : i32
    %c0_i32_0 = arith.constant 0 : i32
    %c0_i32_1 = arith.constant 0 : i32
    return %c0_i32, %c0_i32_0 : i32, i32
  }
  func.func @transform_5(%arg0: i32) -> (i32, i32) {
    %c0_i32 = arith.constant 0 : i32
    %c0_i32_0 = arith.constant 0 : i32
    %c0_i32_1 = arith.constant 0 : i32
    return %c0_i32, %c0_i32_0 : i32, i32
  }
  func.func @transform_6(%arg0: i32) -> (i32, i32) {
    %c0_i32 = arith.constant 0 : i32
    %c0_i32_0 = arith.constant 0 : i32
    %c0_i32_1 = arith.constant 0 : i32
    return %c0_i32, %c0_i32_0 : i32, i32
  }
  func.func @transform_7(%arg0: i32) -> (i32, i32) {
    %c0_i32 = arith.constant 0 : i32
    %c0_i32_0 = arith.constant 0 : i32
    %c0_i32_1 = arith.constant 0 : i32
    return %c0_i32, %c0_i32_0 : i32, i32
  }
  func.func @transform_8(%arg0: i32) -> (i32, i32) {
    %c0_i32 = arith.constant 0 : i32
    %c0_i32_0 = arith.constant 0 : i32
    %c0_i32_1 = arith.constant 0 : i32
    return %c0_i32, %c0_i32_0 : i32, i32
  }
  func.func @transform_9(%arg0: i32) -> (i32, i32) {
    %c0_i32 = arith.constant 0 : i32
    %c0_i32_0 = arith.constant 0 : i32
    %c0_i32_1 = arith.constant 0 : i32
    return %c0_i32, %c0_i32_0 : i32, i32
  }
  func.func @transform_10(%arg0: i32) -> (i32, i32) {
    %c0_i32 = arith.constant 0 : i32
    %c0_i32_0 = arith.constant 0 : i32
    %c0_i32_1 = arith.constant 0 : i32
    return %c0_i32, %c0_i32_0 : i32, i32
  }
  func.func @transform_11(%arg0: i32) -> (i32, i32) {
    %c0_i32 = arith.constant 0 : i32
    %c0_i32_0 = arith.constant 0 : i32
    %c0_i32_1 = arith.constant 0 : i32
    return %c0_i32, %c0_i32_0 : i32, i32
  }
  func.func @transform_12(%arg0: i32) -> (i32, i32) {
    %c0_i32 = arith.constant 0 : i32
    %c0_i32_0 = arith.constant 0 : i32
    %c0_i32_1 = arith.constant 0 : i32
    return %c0_i32, %c0_i32_0 : i32, i32
  }
  func.func @transform_13(%arg0: i32) -> (i32, i32) {
    %c0_i32 = arith.constant 0 : i32
    %c0_i32_0 = arith.constant 0 : i32
    %c0_i32_1 = arith.constant 0 : i32
    return %c0_i32, %c0_i32_0 : i32, i32
  }
  func.func @transform_14(%arg0: i32) -> (i32, i32) {
    %c0_i32 = arith.constant 0 : i32
    %c0_i32_0 = arith.constant 0 : i32
    %c0_i32_1 = arith.constant 0 : i32
    return %c0_i32, %c0_i32_0 : i32, i32
  }
  func.func @transform_15(%arg0: i32) -> (i32, i32) {
    %c0_i32 = arith.constant 0 : i32
    %c0_i32_0 = arith.constant 0 : i32
    %c0_i32_1 = arith.constant 0 : i32
    return %c0_i32, %c0_i32_0 : i32, i32
  }
  func.func @transform_16(%arg0: i32) -> (i32, i32) {
    %c0_i32 = arith.constant 0 : i32
    %c0_i32_0 = arith.constant 0 : i32
    %c0_i32_1 = arith.constant 0 : i32
    return %c0_i32, %c0_i32_0 : i32, i32
  }
  func.func @transform_17(%arg0: i32) -> (i32, i32) {
    %c0_i32 = arith.constant 0 : i32
    %c0_i32_0 = arith.constant 0 : i32
    %c0_i32_1 = arith.constant 0 : i32
    return %c0_i32, %c0_i32_0 : i32, i32
  }
  func.func @transform_18(%arg0: i32) -> (i32, i32) {
    %c0_i32 = arith.constant 0 : i32
    %c0_i32_0 = arith.constant 0 : i32
    %c0_i32_1 = arith.constant 0 : i32
    return %c0_i32, %c0_i32_0 : i32, i32
  }
  func.func @transform_19(%arg0: i32) -> (i32, i32) {
    %c0_i32 = arith.constant 0 : i32
    %c0_i32_0 = arith.constant 0 : i32
    %c0_i32_1 = arith.constant 0 : i32
    return %c0_i32, %c0_i32_0 : i32, i32
  }
}

module attributes {stable_mosaic.version = 11 : i64} {
  func.func @_loss_kernel(%arg0: i32, %arg1: memref<1x2x64xbf16, #tpu.memory_space<vmem>>, %arg2: memref<2x36xf32, #tpu.memory_space<vmem>>, %arg3: memref<2x3xf32, #tpu.memory_space<vmem>>, %arg4: memref<2x1xf32, #tpu.memory_space<vmem>>, %arg5: memref<3xf32, #tpu.memory_space<smem>>, %arg6: memref<2xf32, #tpu.memory_space<smem>>) attributes {dimension_semantics = [#tpu.dimension_semantics<arbitrary>], iteration_bounds = array<i64: 4>, scalar_prefetch = 0 : i64, scratch_operands = 1 : i64, tpu.core_type = #tpu.core_type<tc>, window_params = [{transform_indices = @transform_0, window_bounds = array<i64: 1, 2, 64>}, {pipeline_mode = #tpu.pipeline_mode<synchronous>, transform_indices = @transform_1, window_bounds = array<i64: 2, 36>}, {pipeline_mode = #tpu.pipeline_mode<synchronous>, transform_indices = @transform_2, window_bounds = array<i64: 2, 3>}, {pipeline_mode = #tpu.pipeline_mode<synchronous>, transform_indices = @transform_3, window_bounds = array<i64: 2, 1>}, {transform_indices = @transform_4, window_bounds = array<i64: 3>}]} {
    %c0_i32 = arith.constant 0 : i32
    %0 = arith.cmpi eq, %arg0, %c0_i32 : i32
    %1 = arith.extui %0 : i1 to i32
    %c0_i32_0 = arith.constant 0 : i32
    %2 = arith.cmpi ne, %1, %c0_i32_0 : i32
    scf.if %2 {
      %cst_20 = arith.constant 0.000000e+00 : f32
      %c0_21 = arith.constant 0 : index
      %59 = memref.load %arg6[%c0_21] : memref<2xf32, #tpu.memory_space<smem>>
      memref.store %cst_20, %arg6[%c0_21] : memref<2xf32, #tpu.memory_space<smem>>
      %cst_22 = arith.constant 0.000000e+00 : f32
      %c1_23 = arith.constant 1 : index
      %60 = memref.load %arg6[%c1_23] : memref<2xf32, #tpu.memory_space<smem>>
      memref.store %cst_22, %arg6[%c1_23] : memref<2xf32, #tpu.memory_space<smem>>
    } else {
    }
    %c0 = arith.constant 0 : index
    %c0_1 = arith.constant 0 : index
    %c0_2 = arith.constant 0 : index
    %3 = vector.load %arg1[%c0, %c0_1, %c0_2] : memref<1x2x64xbf16, #tpu.memory_space<vmem>>, vector<1x2x64xbf16>
    %4 = vector.shape_cast %3 : vector<1x2x64xbf16> to vector<2x64xbf16>
    %5 = vector.extract_strided_slice %4 {offsets = [0, 0], sizes = [2, 32], strides = [1, 1]} : vector<2x64xbf16> to vector<2x32xbf16>
    %6 = vector.extract_strided_slice %4 {offsets = [0, 32], sizes = [2, 32], strides = [1, 1]} : vector<2x64xbf16> to vector<2x32xbf16>
    %c0_3 = arith.constant 0 : index
    %c0_4 = arith.constant 0 : index
    %7 = vector.load %arg2[%c0_3, %c0_4] : memref<2x36xf32, #tpu.memory_space<vmem>>, vector<2x32xf32>
    %8 = arith.truncf %7 : vector<2x32xf32> to vector<2x32xbf16>
    "tpu.trace_start"() <{level = 10 : i32, message = "nd,md->nm"}> : () -> ()
    %cst = arith.constant dense<0.000000e+00> : vector<2x2xf32>
    %9 = tpu.matmul %8, %6, %cst {dimension_numbers = #tpu.dot_dimension_numbers<[1], [1], [0], [0], [0, 0, 1, 0], [], []>} : vector<2x32xbf16>, vector<2x32xbf16>, vector<2x2xf32> -> vector<2x2xf32>
    %cst_5 = arith.constant dense<0.000000e+00> : vector<2x2xf32>
    %10 = tpu.matmul %5, %6, %cst_5 {dimension_numbers = #tpu.dot_dimension_numbers<[1], [1], [0], [0], [0, 0, 1, 0], [], []>} : vector<2x32xbf16>, vector<2x32xbf16>, vector<2x2xf32> -> vector<2x2xf32>
    "tpu.trace_stop"() : () -> ()
    %11 = arith.extf %6 : vector<2x32xbf16> to vector<2x32xf32>
    %12 = arith.extf %8 : vector<2x32xbf16> to vector<2x32xf32>
    %13 = arith.mulf %12, %11 : vector<2x32xf32>
    %cst_6 = arith.constant dense<0.000000e+00> : vector<2xf32>
    %14 = vector.multi_reduction <add>, %13, %cst_6 [1] : vector<2x32xf32> to vector<2xf32>
    %15 = vector.shape_cast %14 : vector<2xf32> to vector<2x1xf32>
    %16 = arith.extf %5 : vector<2x32xbf16> to vector<2x32xf32>
    %17 = arith.mulf %16, %11 : vector<2x32xf32>
    %cst_7 = arith.constant dense<0.000000e+00> : vector<2xf32>
    %18 = vector.multi_reduction <add>, %17, %cst_7 [1] : vector<2x32xf32> to vector<2xf32>
    %19 = vector.shape_cast %18 : vector<2xf32> to vector<2x1xf32>
    %c0_8 = arith.constant 0 : index
    %20 = memref.load %arg6[%c0_8] : memref<2xf32, #tpu.memory_space<smem>>
    %cst_9 = arith.constant dense<0xFF800000> : vector<2xf32>
    %21 = vector.multi_reduction <maximumf>, %9, %cst_9 [1] : vector<2x2xf32> to vector<2xf32>
    %22 = vector.shape_cast %21 : vector<2xf32> to vector<2x1xf32>
    %23 = vector.broadcast %22 : vector<2x1xf32> to vector<2x2xf32>
    %24 = arith.subf %9, %23 : vector<2x2xf32>
    %25 = math.exp %24 : vector<2x2xf32>
    %cst_10 = arith.constant dense<0.000000e+00> : vector<2xf32>
    %26 = vector.multi_reduction <add>, %25, %cst_10 [1] : vector<2x2xf32> to vector<2xf32>
    %27 = vector.shape_cast %26 : vector<2xf32> to vector<2x1xf32>
    %28 = math.log %27 : vector<2x1xf32>
    %29 = arith.addf %28, %22 : vector<2x1xf32>
    %30 = arith.subf %29, %15 : vector<2x1xf32>
    %31 = vector.shape_cast %30 : vector<2x1xf32> to vector<1x2x1xf32>
    %cst_11 = arith.constant dense<0.000000e+00> : vector<1xf32>
    %32 = vector.multi_reduction <add>, %31, %cst_11 [1, 2] : vector<1x2x1xf32> to vector<1xf32>
    %33 = vector.shape_cast %32 : vector<1xf32> to vector<1x1x1xf32>
    %34 = vector.extract %33[0, 0, 0] : f32 from vector<1x1x1xf32>
    %cst_12 = arith.constant 2.000000e+00 : f32
    %35 = arith.divf %34, %cst_12 : f32
    %36 = arith.addf %20, %35 : f32
    %c0_13 = arith.constant 0 : index
    %37 = memref.load %arg6[%c0_13] : memref<2xf32, #tpu.memory_space<smem>>
    memref.store %36, %arg6[%c0_13] : memref<2xf32, #tpu.memory_space<smem>>
    %c1 = arith.constant 1 : index
    %38 = memref.load %arg6[%c1] : memref<2xf32, #tpu.memory_space<smem>>
    %cst_14 = arith.constant dense<0xFF800000> : vector<2xf32>
    %39 = vector.multi_reduction <maximumf>, %10, %cst_14 [1] : vector<2x2xf32> to vector<2xf32>
    %40 = vector.shape_cast %39 : vector<2xf32> to vector<2x1xf32>
    %41 = vector.broadcast %40 : vector<2x1xf32> to vector<2x2xf32>
    %42 = arith.subf %10, %41 : vector<2x2xf32>
    %43 = math.exp %42 : vector<2x2xf32>
    %cst_15 = arith.constant dense<0.000000e+00> : vector<2xf32>
    %44 = vector.multi_reduction <add>, %43, %cst_15 [1] : vector<2x2xf32> to vector<2xf32>
    %45 = vector.shape_cast %44 : vector<2xf32> to vector<2x1xf32>
    %46 = math.log %45 : vector<2x1xf32>
    %47 = arith.addf %46, %40 : vector<2x1xf32>
    %48 = arith.subf %47, %19 : vector<2x1xf32>
    %49 = vector.shape_cast %48 : vector<2x1xf32> to vector<1x2x1xf32>
    %cst_16 = arith.constant dense<0.000000e+00> : vector<1xf32>
    %50 = vector.multi_reduction <add>, %49, %cst_16 [1, 2] : vector<1x2x1xf32> to vector<1xf32>
    %51 = vector.shape_cast %50 : vector<1xf32> to vector<1x1x1xf32>
    %52 = vector.extract %51[0, 0, 0] : f32 from vector<1x1x1xf32>
    %cst_17 = arith.constant 2.000000e+00 : f32
    %53 = arith.divf %52, %cst_17 : f32
    %54 = arith.addf %38, %53 : f32
    %c1_18 = arith.constant 1 : index
    %55 = memref.load %arg6[%c1_18] : memref<2xf32, #tpu.memory_space<smem>>
    memref.store %54, %arg6[%c1_18] : memref<2xf32, #tpu.memory_space<smem>>
    %c3_i32 = arith.constant 3 : i32
    %56 = arith.cmpi eq, %arg0, %c3_i32 : i32
    %57 = arith.extui %56 : i1 to i32
    %c0_i32_19 = arith.constant 0 : i32
    %58 = arith.cmpi ne, %57, %c0_i32_19 : i32
    scf.if %58 {
      %c0_20 = arith.constant 0 : index
      %c32 = arith.constant 32 : index
      %59 = vector.load %arg2[%c0_20, %c32] : memref<2x36xf32, #tpu.memory_space<vmem>>, vector<2x4xf32>
      %60 = vector.extract_strided_slice %59 {offsets = [0, 0], sizes = [2, 3], strides = [1, 1]} : vector<2x4xf32> to vector<2x3xf32>
      %61 = vector.extract_strided_slice %59 {offsets = [0, 3], sizes = [2, 1], strides = [1, 1]} : vector<2x4xf32> to vector<2x1xf32>
      %c0_21 = arith.constant 0 : index
      %c0_22 = arith.constant 0 : index
      %62 = vector.load %arg3[%c0_21, %c0_22] : memref<2x3xf32, #tpu.memory_space<vmem>>, vector<2x3xf32>
      %63 = arith.subf %60, %62 : vector<2x3xf32>
      %64 = math.absf %63 : vector<2x3xf32>
      %65 = vector.extract_strided_slice %64 {offsets = [0, 0], sizes = [2, 1], strides = [1, 1]} : vector<2x3xf32> to vector<2x1xf32>
      %cst_23 = arith.constant 5.000000e-01 : f32
      %66 = vector.broadcast %cst_23 : f32 to vector<2x1xf32>
      %67 = arith.mulf %65, %66 : vector<2x1xf32>
      %68 = vector.extract_strided_slice %64 {offsets = [0, 1], sizes = [2, 1], strides = [1, 1]} : vector<2x3xf32> to vector<2x1xf32>
      %cst_24 = arith.constant 4.500000e-01 : f32
      %69 = vector.broadcast %cst_24 : f32 to vector<2x1xf32>
      %70 = arith.mulf %68, %69 : vector<2x1xf32>
      %71 = arith.addf %67, %70 : vector<2x1xf32>
      %72 = vector.extract_strided_slice %64 {offsets = [0, 2], sizes = [2, 1], strides = [1, 1]} : vector<2x3xf32> to vector<2x1xf32>
      %cst_25 = arith.constant 5.000000e-02 : f32
      %73 = vector.broadcast %cst_25 : f32 to vector<2x1xf32>
      %74 = arith.mulf %72, %73 : vector<2x1xf32>
      %75 = arith.addf %71, %74 : vector<2x1xf32>
      %76 = vector.shape_cast %75 : vector<2x1xf32> to vector<1x2x1xf32>
      %cst_26 = arith.constant dense<0.000000e+00> : vector<1xf32>
      %77 = vector.multi_reduction <add>, %76, %cst_26 [1, 2] : vector<1x2x1xf32> to vector<1xf32>
      %78 = vector.shape_cast %77 : vector<1xf32> to vector<1x1x1xf32>
      %79 = vector.extract %78[0, 0, 0] : f32 from vector<1x1x1xf32>
      %c0_27 = arith.constant 0 : index
      %c0_28 = arith.constant 0 : index
      %80 = vector.load %arg4[%c0_27, %c0_28] : memref<2x1xf32, #tpu.memory_space<vmem>>, vector<2x1xf32>
      %81 = arith.subf %61, %80 : vector<2x1xf32>
      %82 = math.absf %81 : vector<2x1xf32>
      %83 = vector.shape_cast %82 : vector<2x1xf32> to vector<1x2x1xf32>
      %cst_29 = arith.constant dense<0.000000e+00> : vector<1xf32>
      %84 = vector.multi_reduction <add>, %83, %cst_29 [1, 2] : vector<1x2x1xf32> to vector<1xf32>
      %85 = vector.shape_cast %84 : vector<1xf32> to vector<1x1x1xf32>
      %86 = vector.extract %85[0, 0, 0] : f32 from vector<1x1x1xf32>
      %cst_30 = arith.constant 0.949999988 : f32
      %87 = arith.mulf %79, %cst_30 : f32
      %cst_31 = arith.constant 2.000000e+00 : f32
      %88 = arith.divf %87, %cst_31 : f32
      %cst_32 = arith.constant 5.000000e-02 : f32
      %89 = arith.mulf %86, %cst_32 : f32
      %cst_33 = arith.constant 2.000000e+00 : f32
      %90 = arith.divf %89, %cst_33 : f32
      %91 = arith.addf %88, %90 : f32
      %c0_34 = arith.constant 0 : index
      %92 = memref.load %arg6[%c0_34] : memref<2xf32, #tpu.memory_space<smem>>
      %93 = arith.addf %91, %92 : f32
      %c1_35 = arith.constant 1 : index
      %94 = memref.load %arg6[%c1_35] : memref<2xf32, #tpu.memory_space<smem>>
      %cst_36 = arith.constant 4.000000e+00 : f32
      %95 = arith.divf %94, %cst_36 : f32
      %cst_37 = arith.constant 5.000000e-01 : f32
      %96 = arith.mulf %95, %cst_37 : f32
      %cst_38 = arith.constant 1.000000e+00 : f32
      %97 = arith.mulf %93, %cst_38 : f32
      %98 = arith.addf %97, %96 : f32
      %c0_39 = arith.constant 0 : index
      %99 = memref.load %arg5[%c0_39] : memref<3xf32, #tpu.memory_space<smem>>
      memref.store %98, %arg5[%c0_39] : memref<3xf32, #tpu.memory_space<smem>>
      %c1_40 = arith.constant 1 : index
      %100 = memref.load %arg5[%c1_40] : memref<3xf32, #tpu.memory_space<smem>>
      memref.store %93, %arg5[%c1_40] : memref<3xf32, #tpu.memory_space<smem>>
      %c2 = arith.constant 2 : index
      %101 = memref.load %arg5[%c2] : memref<3xf32, #tpu.memory_space<smem>>
      memref.store %96, %arg5[%c2] : memref<3xf32, #tpu.memory_space<smem>>
    } else {
    }
    return
  }
  func.func @transform_0(%arg0: i32) -> (i32, i32, i32) {
    %c0_i32 = arith.constant 0 : i32
    %c0_i32_0 = arith.constant 0 : i32
    %c0_i32_1 = arith.constant 0 : i32
    return %arg0, %c0_i32, %c0_i32_0 : i32, i32, i32
  }
  func.func @transform_1(%arg0: i32) -> (i32, i32) {
    %c0_i32 = arith.constant 0 : i32
    %c0_i32_0 = arith.constant 0 : i32
    %c0_i32_1 = arith.constant 0 : i32
    return %c0_i32, %c0_i32_0 : i32, i32
  }
  func.func @transform_2(%arg0: i32) -> (i32, i32) {
    %c0_i32 = arith.constant 0 : i32
    %c0_i32_0 = arith.constant 0 : i32
    %c0_i32_1 = arith.constant 0 : i32
    return %c0_i32, %c0_i32_0 : i32, i32
  }
  func.func @transform_3(%arg0: i32) -> (i32, i32) {
    %c0_i32 = arith.constant 0 : i32
    %c0_i32_0 = arith.constant 0 : i32
    %c0_i32_1 = arith.constant 0 : i32
    return %c0_i32, %c0_i32_0 : i32, i32
  }
  func.func @transform_4(%arg0: i32) -> i32 {
    %c0_i32 = arith.constant 0 : i32
    %c0_i32_0 = arith.constant 0 : i32
    return %c0_i32 : i32
  }
}

</mosaic_0001>

<llo_original>
// kernel: _lambda_.4
$region0: #{_lambda_.4}
  #allocation0 [shape = 'u32[]', space=smem, size = 0x4, offset = 0x4, fixed_abs, tag = 'smem constant byte address 0x4 - core index']
  #allocation1 [shape = 'u32[144,128]{1,0:T(1,128)}', space=vmem, size = 0x12000, scoped, tag = 'internal scratch']
  #allocation2 [shape = 'f32[1,1]{1,0:T(1,128)S(1)}', space=vmem, size = 0x200, scoped, tag = 'scoped memory for _lambda_.4']
  %s0 = inlined_call_operand.vmem [shape: bf16[20,37], index: 0, kind: input, shape index: {}]
  %s1 = inlined_call_operand.vmem [shape: bf16[37,48], index: 1, kind: input, shape index: {}]
  %s2 = inlined_call_operand.vmem [shape: f32[1,48], index: 2, kind: input, shape index: {}]
  %s3 = inlined_call_operand.vmem [shape: bf16[48,48], index: 3, kind: input, shape index: {}]
  %s4 = inlined_call_operand.vmem [shape: f32[1,48], index: 4, kind: input, shape index: {}]
  %s5 = inlined_call_operand.vmem [shape: bf16[48,32], index: 5, kind: input, shape index: {}]
  %s6 = inlined_call_operand.vmem [shape: f32[1,32], index: 6, kind: input, shape index: {}]
  %s7 = inlined_call_operand.vmem [shape: bf16[32,32], index: 7, kind: input, shape index: {}]
  %s8 = inlined_call_operand.vmem [shape: f32[1,32], index: 8, kind: input, shape index: {}]
  %s9 = inlined_call_operand.vmem [shape: bf16[32,3], index: 9, kind: input, shape index: {}]
  %s10 = inlined_call_operand.vmem [shape: f32[1,3], index: 10, kind: input, shape index: {}]
  %s11 = inlined_call_operand.vmem [shape: bf16[32,16], index: 11, kind: input, shape index: {}]
  %s12 = inlined_call_operand.vmem [shape: f32[1,16], index: 12, kind: input, shape index: {}]
  %s13 = inlined_call_operand.vmem [shape: bf16[16,1], index: 13, kind: input, shape index: {}]
  %s14 = inlined_call_operand.<no memory space> [shape: f32[1,1], index: 14, kind: input, shape index: {}]
  %s15 = inlined_call_operand.vmem [shape: bf16[32,32], index: 15, kind: input, shape index: {}]
  %s16 = inlined_call_operand.vmem [shape: bf16[32,32], index: 16, kind: input, shape index: {}]
  %s17 = inlined_call_operand.vmem [shape: f32[1,32], index: 17, kind: input, shape index: {}]
  %s18 = inlined_call_operand.vmem [shape: f32[2,36], index: 18, kind: output, shape index: {0}]
  %s19 = inlined_call_operand.vmem [shape: bf16[8,64], index: 19, kind: output, shape index: {1}]
  %20 = xla_tuple %s18, %s19
  %s21 = sld [smem:[#allocation0]]
  $region90: #{_lambda_.4} parent=0
    _
  %s23 = ssub.s32 1, %s21
  %s24 = scalar_select 0, %s23, %s21
  %v25 = vstv %s14
  %26 = vst [vmem:[#allocation2] sm:$0x1] %v25
  // Predicated region
  $region2: #{_lambda_.4} parent=0 // pred_check
    _
  $region3: #{_lambda_.4} parent=0 // pred_check_branch
    %28 = sbr.rel (0) target = $region5
  $region4: #{_lambda_.4} parent=0 // pred_region
    _
  $region5: #{_lambda_.4} parent=0 // pred_fallthru
    _
  // Predicated region
  $region6: #{_lambda_.4} parent=0 // pred_check
    _
  $region7: #{_lambda_.4} parent=0 // pred_check_branch
    %30 = sbr.rel (0) target = $region9
  $region8: #{_lambda_.4} parent=0 // pred_region
    _
  $region9: #{_lambda_.4} parent=0 // pred_fallthru
    _
  // Predicated region
  $region10: #{_lambda_.4} parent=0 // pred_check
    _
  $region11: #{_lambda_.4} parent=0 // pred_check_branch
    %32 = sbr.rel (0) target = $region13
  $region12: #{_lambda_.4} parent=0 // pred_region
    _
  $region13: #{_lambda_.4} parent=0 // pred_fallthru
    _
  // Predicated region
  $region14: #{_lambda_.4} parent=0 // pred_check
    _
  $region15: #{_lambda_.4} parent=0 // pred_check_branch
    %34 = sbr.rel (0) target = $region17
  $region16: #{_lambda_.4} parent=0 // pred_region
    _
  $region17: #{_lambda_.4} parent=0 // pred_fallthru
    _
  // Predicated region
  $region18: #{_lambda_.4} parent=0 // pred_check
    _
  $region19: #{_lambda_.4} parent=0 // pred_check_branch
    %36 = sbr.rel (0) target = $region21
  $region20: #{_lambda_.4} parent=0 // pred_region
    _
  $region21: #{_lambda_.4} parent=0 // pred_fallthru
    _
  // Predicated region
  $region22: #{_lambda_.4} parent=0 // pred_check
    _
  $region23: #{_lambda_.4} parent=0 // pred_check_branch
    %38 = sbr.rel (0) target = $region25
  $region24: #{_lambda_.4} parent=0 // pred_region
    _
  $region25: #{_lambda_.4} parent=0 // pred_fallthru
    _
  // Predicated region
  $region26: #{_lambda_.4} parent=0 // pred_check
    _
  $region27: #{_lambda_.4} parent=0 // pred_check_branch
    %40 = sbr.rel (0) target = $region29
  $region28: #{_lambda_.4} parent=0 // pred_region
    _
  $region29: #{_lambda_.4} parent=0 // pred_fallthru
    _
  // Predicated region
  $region30: #{_lambda_.4} parent=0 // pred_check
    _
  $region31: #{_lambda_.4} parent=0 // pred_check_branch
    %42 = sbr.rel (0) target = $region33
  $region32: #{_lambda_.4} parent=0 // pred_region
    _
  $region33: #{_lambda_.4} parent=0 // pred_fallthru
    _
  // Predicated region
  $region34: #{_lambda_.4} parent=0 // pred_check
    _
  $region35: #{_lambda_.4} parent=0 // pred_check_branch
    %44 = sbr.rel (0) target = $region37
  $region36: #{_lambda_.4} parent=0 // pred_region
    _
  $region37: #{_lambda_.4} parent=0 // pred_fallthru
    _
  // Predicated region
  $region38: #{_lambda_.4} parent=0 // pred_check
    _
  $region39: #{_lambda_.4} parent=0 // pred_check_branch
    %46 = sbr.rel (0) target = $region41
  $region40: #{_lambda_.4} parent=0 // pred_region
    _
  $region41: #{_lambda_.4} parent=0 // pred_fallthru
    _
  // Predicated region
  $region42: #{_lambda_.4} parent=0 // pred_check
    _
  $region43: #{_lambda_.4} parent=0 // pred_check_branch
    %48 = sbr.rel (0) target = $region45
  $region44: #{_lambda_.4} parent=0 // pred_region
    _
  $region45: #{_lambda_.4} parent=0 // pred_fallthru
    _
  // Predicated region
  $region46: #{_lambda_.4} parent=0 // pred_check
    _
  $region47: #{_lambda_.4} parent=0 // pred_check_branch
    %50 = sbr.rel (0) target = $region49
  $region48: #{_lambda_.4} parent=0 // pred_region
    _
  $region49: #{_lambda_.4} parent=0 // pred_fallthru
    _
  // Predicated region
  $region50: #{_lambda_.4} parent=0 // pred_check
    _
  $region51: #{_lambda_.4} parent=0 // pred_check_branch
    %52 = sbr.rel (0) target = $region53
  $region52: #{_lambda_.4} parent=0 // pred_region
    _
  $region53: #{_lambda_.4} parent=0 // pred_fallthru
    _
  // Predicated region
  $region54: #{_lambda_.4} parent=0 // pred_check
    _
  $region55: #{_lambda_.4} parent=0 // pred_check_branch
    %54 = sbr.rel (0) target = $region57
  $region56: #{_lambda_.4} parent=0 // pred_region
    _
  $region57: #{_lambda_.4} parent=0 // pred_fallthru
    _
  // Predicated region
  $region58: #{_lambda_.4} parent=0 // pred_check
    _
  $region59: #{_lambda_.4} parent=0 // pred_check_branch
    %56 = sbr.rel (0) target = $region61
  $region60: #{_lambda_.4} parent=0 // pred_region
    _
  $region61: #{_lambda_.4} parent=0 // pred_fallthru
    _
  // Predicated region
  $region62: #{_lambda_.4} parent=0 // pred_check
    _
  $region63: #{_lambda_.4} parent=0 // pred_check_branch
    %58 = sbr.rel (0) target = $region65
  $region64: #{_lambda_.4} parent=0 // pred_region
    _
  $region65: #{_lambda_.4} parent=0 // pred_fallthru
    _
  // Predicated region
  $region66: #{_lambda_.4} parent=0 // pred_check
    _
  $region67: #{_lambda_.4} parent=0 // pred_check_branch
    %60 = sbr.rel (0) target = $region69
  $region68: #{_lambda_.4} parent=0 // pred_region
    _
  $region69: #{_lambda_.4} parent=0 // pred_fallthru
    _
  // Predicated region
  $region70: #{_lambda_.4} parent=0 // pred_check
    _
  $region71: #{_lambda_.4} parent=0 // pred_check_branch
    %62 = sbr.rel (0) target = $region73
  $region72: #{_lambda_.4} parent=0 // pred_region
    _
  $region73: #{_lambda_.4} parent=0 // pred_fallthru
    _
  %v64 = vld [vmem:[%s0] sm:$0xf]
  %v65 = vld [vmem:[%s0 + $0x4] sm:$0xf]
  %v66 = vld [vmem:[%s0 + $0x8] sm:$0x3]
  %v67 = vld [vmem:[%s1] sm:$0xf]
  %v68 = vld [vmem:[%s1 + $0x4] sm:$0xf]
  %v69 = vld [vmem:[%s1 + $0x8] sm:$0xf]
  %v70 = vld [vmem:[%s1 + $0xc] sm:$0xf]
  %v71 = vld [vmem:[%s1 + $0x10] sm:$0x7]
  %v72 = vld [vmem:[%s2] sm:$0x1]
  %v74 = vlaneseq
  %v75 = vshrl.u32 %v74, 7
  %v76 = vsub.s32 0, %v75
  %v77 = vrot.slane %v72, %v76
  %v82 = vunpack.c.l.b16 %v64
  %v83 = vunpack.c.l.b16 %v65
  %v84 = vunpack.c.l.b16 %v66
  %v85 = vpack.c.b16 %v83, %v82
  %v86 = vpack.c.b16 %v84, %v84
  %v92 = vunpack.c.l.b16 %v67
  %v93 = vunpack.c.l.b16 %v68
  %v94 = vunpack.c.l.b16 %v69
  %v95 = vunpack.c.l.b16 %v70
  %v96 = vunpack.c.l.b16 %v71
  %v97 = vpack.c.b16 %v93, %v92
  %v98 = vpack.c.b16 %v95, %v94
  %v99 = vpack.c.b16 %v96, %v96
  %vm102 = vcmask 302080
  %v104 = vsel %vm102, %v85, 0
  %v107 = vsel %vm102, %v86, 0
  %vm109 = vcmask 1041408
  %vm110 = vcmask 1042432
  %v111 = vsel %vm109, 4294967295, 65535
  %v112 = vsel %vm110, %v111, 0
  %v114 = vand.u32 %v99, %v112
  %116 = vmatprep.subr.bf16.mxu0 0
  %117 = vmatpush1.bf16.msra.mxu0 0
  %118 = vmatprep.subr.bf16.mxu0 0
  %119 = vmatpush1.bf16.msra.mxu0 0
  %120 = vmatprep.subr.bf16.mxu0 0
  %121 = vmatpush1.bf16.msra.mxu0 0
  %122 = vmatprep.subr.bf16.mxu0 0
  %123 = vmatpush1.bf16.msra.mxu0 0
  %124 = vmatprep.subr.bf16.mxu0 0
  %125 = vmatpush1.bf16.msra.mxu0 0
  %126 = vmatprep.subr.bf16.mxu0 0
  %127 = vmatpush1.bf16.msra.mxu0 %v114
  %128 = vmatprep.subr.bf16.mxu0 0
  %129 = vmatpush1.bf16.msra.mxu0 %v98
  %130 = vmatprep.subr.bf16.mxu0 0
  %131 = vmatpush1.bf16.msra.mxu0 %v97
  %132 = vmatprep.subr.bf16.mxu0 0
  %133 = vmatpush2.bf16.msra.mxu0 0
  %134 = vmatprep.subr.bf16.mxu0 0
  %135 = vmatpush2.bf16.msra.mxu0 0
  %136 = vmatprep.subr.bf16.mxu0 0
  %137 = vmatpush2.bf16.msra.mxu0 0
  %138 = vmatprep.subr.bf16.mxu0 0
  %139 = vmatpush2.bf16.msra.mxu0 0
  %140 = vmatprep.subr.bf16.mxu0 0
  %141 = vmatpush2.bf16.msra.mxu0 0
  %142 = vmatprep.subr.bf16.mxu0 0
  %143 = vmatpush2.bf16.msra.mxu0 0
  %144 = vmatprep.subr.bf16.mxu0 0
  %145 = vmatpush2.bf16.msra.mxu0 0
  %146 = vmatprep.subr.bf16.mxu0 0
  %147 = vmatpush2.bf16.msra.mxu0 0
  %148 = vmatprep.mubr.bf16.mxu0 0
  %149 = vmatmul.mubr.bf16.gmra.mxu0 %v104
  %v150 = vpop.f32.mrf.mxu0
  %v151 = vadd.f32 %v77, %v150
  %v152 = vpop.f32.mrf.mxu0
  %v153 = vpop.f32.mrf.mxu0
  %v154 = vadd.f32 %v77, %v153
  %v155 = vpop.f32.mrf.mxu0
  %156 = vmatprep.mubr.bf16.mxu0 0
  %157 = vmatmul.mubr.bf16.gmra.mxu0 %v107
  %v158 = vpop.f32.mrf.mxu0
  %v159 = vadd.f32 %v77, %v158
  %v160 = vpop.f32.mrf.mxu0
  %v161 = vpop.f32.mrf.mxu0
  %v162 = vpop.f32.mrf.mxu0
  %163 = vdwg.mxu0
  %v164 = vmax.f32 %v151, 0.0
  %v165 = vmax.f32 %v154, 0.0
  %v166 = vmax.f32 %v159, 0.0
  %v167 = vpack.c.bf16 %v165, %v164
  %v168 = vpack.c.bf16 %v166, %v166
  %v169 = vld [vmem:[%s3] sm:$0xf]
  %v170 = vld [vmem:[%s3 + $0x4] sm:$0xf]
  %v171 = vld [vmem:[%s3 + $0x8] sm:$0xf]
  %v172 = vld [vmem:[%s3 + $0xc] sm:$0xf]
  %v173 = vld [vmem:[%s3 + $0x10] sm:$0xf]
  %v174 = vld [vmem:[%s3 + $0x14] sm:$0xf]
  %v175 = vld [vmem:[%s4] sm:$0x1]
  %v177 = vlaneseq
  %v178 = vshrl.u32 %v177, 7
  %v179 = vsub.s32 0, %v178
  %v180 = vrot.slane %v175, %v179
  %v188 = vunpack.c.l.b16 %v169
  %v189 = vunpack.c.l.b16 %v170
  %v190 = vunpack.c.l.b16 %v171
  %v191 = vunpack.c.l.b16 %v172
  %v192 = vunpack.c.l.b16 %v173
  %v193 = vunpack.c.l.b16 %v174
  %v194 = vpack.c.b16 %v189, %v188
  %v195 = vpack.c.b16 %v191, %v190
  %v196 = vpack.c.b16 %v193, %v192
  %vm200 = vcmask 392192
  %v202 = vsel %vm200, %v167, 0
  %v205 = vsel %vm200, %v168, 0
  %207 = vmatprep.subr.bf16.mxu0 0
  %208 = vmatpush1.bf16.msra.mxu0 0
  %209 = vmatprep.subr.bf16.mxu0 0
  %210 = vmatpush1.bf16.msra.mxu0 0
  %211 = vmatprep.subr.bf16.mxu0 0
  %212 = vmatpush1.bf16.msra.mxu0 0
  %213 = vmatprep.subr.bf16.mxu0 0
  %214 = vmatpush1.bf16.msra.mxu0 0
  %215 = vmatprep.subr.bf16.mxu0 0
  %216 = vmatpush1.bf16.msra.mxu0 0
  %217 = vmatprep.subr.bf16.mxu0 0
  %218 = vmatpush1.bf16.msra.mxu0 %v196
  %219 = vmatprep.subr.bf16.mxu0 0
  %220 = vmatpush1.bf16.msra.mxu0 %v195
  %221 = vmatprep.subr.bf16.mxu0 0
  %222 = vmatpush1.bf16.msra.mxu0 %v194
  %223 = vmatprep.subr.bf16.mxu0 0
  %224 = vmatpush2.bf16.msra.mxu0 0
  %225 = vmatprep.subr.bf16.mxu0 0
  %226 = vmatpush2.bf16.msra.mxu0 0
  %227 = vmatprep.subr.bf16.mxu0 0
  %228 = vmatpush2.bf16.msra.mxu0 0
  %229 = vmatprep.subr.bf16.mxu0 0
  %230 = vmatpush2.bf16.msra.mxu0 0
  %231 = vmatprep.subr.bf16.mxu0 0
  %232 = vmatpush2.bf16.msra.mxu0 0
  %233 = vmatprep.subr.bf16.mxu0 0
  %234 = vmatpush2.bf16.msra.mxu0 0
  %235 = vmatprep.subr.bf16.mxu0 0
  %236 = vmatpush2.bf16.msra.mxu0 0
  %237 = vmatprep.subr.bf16.mxu0 0
  %238 = vmatpush2.bf16.msra.mxu0 0
  %239 = vmatprep.mubr.bf16.mxu0 0
  %240 = vmatmul.mubr.bf16.gmra.mxu0 %v202
  %v241 = vpop.f32.mrf.mxu0
  %v242 = vadd.f32 %v180, %v241
  %v243 = vpop.f32.mrf.mxu0
  %v244 = vpop.f32.mrf.mxu0
  %v245 = vadd.f32 %v180, %v244
  %v246 = vpop.f32.mrf.mxu0
  %247 = vmatprep.mubr.bf16.mxu0 0
  %248 = vmatmul.mubr.bf16.gmra.mxu0 %v205
  %v249 = vpop.f32.mrf.mxu0
  %v250 = vadd.f32 %v180, %v249
  %v251 = vpop.f32.mrf.mxu0
  %v252 = vpop.f32.mrf.mxu0
  %v253 = vpop.f32.mrf.mxu0
  %254 = vdwg.mxu0
  %v255 = vmax.f32 %v242, 0.0
  %v256 = vmax.f32 %v245, 0.0
  %v257 = vmax.f32 %v250, 0.0
  %v258 = vpack.c.bf16 %v256, %v255
  %v259 = vpack.c.bf16 %v257, %v257
  %v260 = vld [vmem:[%s5] sm:$0xf]
  %v261 = vld [vmem:[%s5 + $0x4] sm:$0xf]
  %v262 = vld [vmem:[%s5 + $0x8] sm:$0xf]
  %v263 = vld [vmem:[%s5 + $0xc] sm:$0xf]
  %v264 = vld [vmem:[%s5 + $0x10] sm:$0xf]
  %v265 = vld [vmem:[%s5 + $0x14] sm:$0xf]
  %v266 = vld [vmem:[%s6] sm:$0x1]
  %v268 = vlaneseq
  %v269 = vshrl.u32 %v268, 7
  %v270 = vsub.s32 0, %v269
  %v271 = vrot.slane %v266, %v270
  %v279 = vunpack.c.l.b16 %v260
  %v280 = vunpack.c.l.b16 %v261
  %v281 = vunpack.c.l.b16 %v262
  %v282 = vunpack.c.l.b16 %v263
  %v283 = vunpack.c.l.b16 %v264
  %v284 = vunpack.c.l.b16 %v265
  %v285 = vpack.c.b16 %v280, %v279
  %v286 = vpack.c.b16 %v282, %v281
  %v287 = vpack.c.b16 %v284, %v283
  %v292 = vsel %vm200, %v258, 0
  %v295 = vsel %vm200, %v259, 0
  %297 = vmatprep.subr.bf16.mxu0 0
  %298 = vmatpush1.bf16.msra.mxu0 0
  %299 = vmatprep.subr.bf16.mxu0 0
  %300 = vmatpush1.bf16.msra.mxu0 0
  %301 = vmatprep.subr.bf16.mxu0 0
  %302 = vmatpush1.bf16.msra.mxu0 0
  %303 = vmatprep.subr.bf16.mxu0 0
  %304 = vmatpush1.bf16.msra.mxu0 0
  %305 = vmatprep.subr.bf16.mxu0 0
  %306 = vmatpush1.bf16.msra.mxu0 0
  %307 = vmatprep.subr.bf16.mxu0 0
  %308 = vmatpush1.bf16.msra.mxu0 %v287
  %309 = vmatprep.subr.bf16.mxu0 0
  %310 = vmatpush1.bf16.msra.mxu0 %v286
  %311 = vmatprep.subr.bf16.mxu0 0
  %312 = vmatpush1.bf16.msra.mxu0 %v285
  %313 = vmatprep.subr.bf16.mxu0 0
  %314 = vmatpush2.bf16.msra.mxu0 0
  %315 = vmatprep.subr.bf16.mxu0 0
  %316 = vmatpush2.bf16.msra.mxu0 0
  %317 = vmatprep.subr.bf16.mxu0 0
  %318 = vmatpush2.bf16.msra.mxu0 0
  %319 = vmatprep.subr.bf16.mxu0 0
  %320 = vmatpush2.bf16.msra.mxu0 0
  %321 = vmatprep.subr.bf16.mxu0 0
  %322 = vmatpush2.bf16.msra.mxu0 0
  %323 = vmatprep.subr.bf16.mxu0 0
  %324 = vmatpush2.bf16.msra.mxu0 0
  %325 = vmatprep.subr.bf16.mxu0 0
  %326 = vmatpush2.bf16.msra.mxu0 0
  %327 = vmatprep.subr.bf16.mxu0 0
  %328 = vmatpush2.bf16.msra.mxu0 0
  %329 = vmatprep.mubr.bf16.mxu0 0
  %330 = vmatmul.mubr.bf16.gmra.mxu0 %v292
  %v331 = vpop.f32.mrf.mxu0
  %v332 = vadd.f32 %v271, %v331
  %v333 = vpop.f32.mrf.mxu0
  %v334 = vpop.f32.mrf.mxu0
  %v335 = vadd.f32 %v271, %v334
  %v336 = vpop.f32.mrf.mxu0
  %337 = vmatprep.mubr.bf16.mxu0 0
  %338 = vmatmul.mubr.bf16.gmra.mxu0 %v295
  %v339 = vpop.f32.mrf.mxu0
  %v340 = vadd.f32 %v271, %v339
  %v341 = vpop.f32.mrf.mxu0
  %v342 = vpop.f32.mrf.mxu0
  %v343 = vpop.f32.mrf.mxu0
  %344 = vdwg.mxu0
  %v345 = vmax.f32 %v332, 0.0
  %v346 = vmax.f32 %v335, 0.0
  %v347 = vmax.f32 %v340, 0.0
  %v348 = vpack.c.bf16 %v345, %v345
  %v349 = vpack.c.bf16 %v346, %v345
  %v350 = vpack.c.bf16 %v347, %v346
  %v351 = vld [vmem:[%s7] sm:$0xf]
  %v352 = vld [vmem:[%s7 + $0x4] sm:$0xf]
  %v353 = vld [vmem:[%s7 + $0x8] sm:$0xf]
  %v354 = vld [vmem:[%s7 + $0xc] sm:$0xf]
  %v355 = vld [vmem:[%s8] sm:$0x1]
  %v357 = vlaneseq
  %v358 = vshrl.u32 %v357, 7
  %v359 = vsub.s32 0, %v358
  %v360 = vrot.slane %v355, %v359
  %v363 = vrot.slane %v348, 1
  %v368 = vunpack.c.l.b16 %v351
  %v369 = vunpack.c.l.b16 %v352
  %v370 = vunpack.c.l.b16 %v353
  %v371 = vunpack.c.l.b16 %v354
  %v372 = vpack.c.b16 %v369, %v368
  %v373 = vpack.c.b16 %v371, %v370
  %vm376 = vcmask 261120
  %v378 = vsel %vm376, %v363, 0
  %380 = vmatprep.subr.bf16.mxu0 0
  %381 = vmatpush1.bf16.msra.mxu0 0
  %382 = vmatprep.subr.bf16.mxu0 0
  %383 = vmatpush1.bf16.msra.mxu0 0
  %384 = vmatprep.subr.bf16.mxu0 0
  %385 = vmatpush1.bf16.msra.mxu0 0
  %386 = vmatprep.subr.bf16.mxu0 0
  %387 = vmatpush1.bf16.msra.mxu0 0
  %388 = vmatprep.subr.bf16.mxu0 0
  %389 = vmatpush1.bf16.msra.mxu0 0
  %390 = vmatprep.subr.bf16.mxu0 0
  %391 = vmatpush1.bf16.msra.mxu0 0
  %392 = vmatprep.subr.bf16.mxu0 0
  %393 = vmatpush1.bf16.msra.mxu0 %v373
  %394 = vmatprep.subr.bf16.mxu0 0
  %395 = vmatpush1.bf16.msra.mxu0 %v372
  %396 = vmatprep.subr.bf16.mxu0 0
  %397 = vmatpush2.bf16.msra.mxu0 0
  %398 = vmatprep.subr.bf16.mxu0 0
  %399 = vmatpush2.bf16.msra.mxu0 0
  %400 = vmatprep.subr.bf16.mxu0 0
  %401 = vmatpush2.bf16.msra.mxu0 0
  %402 = vmatprep.subr.bf16.mxu0 0
  %403 = vmatpush2.bf16.msra.mxu0 0
  %404 = vmatprep.subr.bf16.mxu0 0
  %405 = vmatpush2.bf16.msra.mxu0 0
  %406 = vmatprep.subr.bf16.mxu0 0
  %407 = vmatpush2.bf16.msra.mxu0 0
  %408 = vmatprep.subr.bf16.mxu0 0
  %409 = vmatpush2.bf16.msra.mxu0 0
  %410 = vmatprep.subr.bf16.mxu0 0
  %411 = vmatpush2.bf16.msra.mxu0 0
  %412 = vmatprep.mubr.bf16.mxu0 0
  %413 = vmatmul.mubr.bf16.gmra.mxu0 %v378
  %v414 = vpop.f32.mrf.mxu0
  %v415 = vadd.f32 %v360, %v414
  %v416 = vpop.f32.mrf.mxu0
  %v417 = vpop.f32.mrf.mxu0
  %v418 = vpop.f32.mrf.mxu0
  %419 = vdwg.mxu0
  %v420 = vmax.f32 %v415, 0.0
  %v421 = vpack.c.bf16 %v420, %v420
  %v422 = vld [vmem:[%s9] sm:$0xf]
  %v423 = vld [vmem:[%s9 + $0x4] sm:$0xf]
  %v424 = vld [vmem:[%s9 + $0x8] sm:$0xf]
  %v425 = vld [vmem:[%s9 + $0xc] sm:$0xf]
  %v426 = vld [vmem:[%s10] sm:$0x1]
  %v428 = vlaneseq
  %v429 = vshrl.u32 %v428, 7
  %v430 = vsub.s32 0, %v429
  %v431 = vrot.slane %v426, %v430
  %v437 = vunpack.c.l.b16 %v422
  %v438 = vunpack.c.l.b16 %v423
  %v439 = vunpack.c.l.b16 %v424
  %v440 = vunpack.c.l.b16 %v425
  %v441 = vpack.c.b16 %v438, %v437
  %v442 = vpack.c.b16 %v440, %v439
  %v446 = vsel %vm376, %v421, 0
  %448 = vmatprep.subr.bf16.mxu0 0
  %449 = vmatpush1.bf16.msra.mxu0 0
  %450 = vmatprep.subr.bf16.mxu0 0
  %451 = vmatpush1.bf16.msra.mxu0 0
  %452 = vmatprep.subr.bf16.mxu0 0
  %453 = vmatpush1.bf16.msra.mxu0 0
  %454 = vmatprep.subr.bf16.mxu0 0
  %455 = vmatpush1.bf16.msra.mxu0 0
  %456 = vmatprep.subr.bf16.mxu0 0
  %457 = vmatpush1.bf16.msra.mxu0 0
  %458 = vmatprep.subr.bf16.mxu0 0
  %459 = vmatpush1.bf16.msra.mxu0 0
  %460 = vmatprep.subr.bf16.mxu0 0
  %461 = vmatpush1.bf16.msra.mxu0 %v442
  %462 = vmatprep.subr.bf16.mxu0 0
  %463 = vmatpush1.bf16.msra.mxu0 %v441
  %464 = vmatprep.subr.bf16.mxu0 0
  %465 = vmatpush2.bf16.msra.mxu0 0
  %466 = vmatprep.subr.bf16.mxu0 0
  %467 = vmatpush2.bf16.msra.mxu0 0
  %468 = vmatprep.subr.bf16.mxu0 0
  %469 = vmatpush2.bf16.msra.mxu0 0
  %470 = vmatprep.subr.bf16.mxu0 0
  %471 = vmatpush2.bf16.msra.mxu0 0
  %472 = vmatprep.subr.bf16.mxu0 0
  %473 = vmatpush2.bf16.msra.mxu0 0
  %474 = vmatprep.subr.bf16.mxu0 0
  %475 = vmatpush2.bf16.msra.mxu0 0
  %476 = vmatprep.subr.bf16.mxu0 0
  %477 = vmatpush2.bf16.msra.mxu0 0
  %478 = vmatprep.subr.bf16.mxu0 0
  %479 = vmatpush2.bf16.msra.mxu0 0
  %480 = vmatprep.mubr.bf16.mxu0 0
  %481 = vmatmul.mubr.bf16.gmra.mxu0 %v446
  %v482 = vpop.f32.mrf.mxu0
  %v483 = vadd.f32 %v431, %v482
  %v484 = vpop.f32.mrf.mxu0
  %v485 = vpop.f32.mrf.mxu0
  %v486 = vpop.f32.mrf.mxu0
  %487 = vdwg.mxu0
  %v488 = vld [vmem:[%s11] sm:$0xf]
  %v489 = vld [vmem:[%s11 + $0x4] sm:$0xf]
  %v490 = vld [vmem:[%s11 + $0x8] sm:$0xf]
  %v491 = vld [vmem:[%s11 + $0xc] sm:$0xf]
  %v492 = vld [vmem:[%s12] sm:$0x1]
  %v494 = vlaneseq
  %v495 = vshrl.u32 %v494, 7
  %v496 = vsub.s32 0, %v495
  %v497 = vrot.slane %v492, %v496
  %v499 = vpack.c.b16 %v82, %v82
  %v500 = vrot.slane %v499, 1
  %v505 = vunpack.c.l.b16 %v488
  %v506 = vunpack.c.l.b16 %v489
  %v507 = vunpack.c.l.b16 %v490
  %v508 = vunpack.c.l.b16 %v491
  %v509 = vpack.c.b16 %v506, %v505
  %v510 = vpack.c.b16 %v508, %v507
  %v514 = vsel %vm376, %v500, 0
  %516 = vmatprep.subr.bf16.mxu0 0
  %517 = vmatpush1.bf16.msra.mxu0 0
  %518 = vmatprep.subr.bf16.mxu0 0
  %519 = vmatpush1.bf16.msra.mxu0 0
  %520 = vmatprep.subr.bf16.mxu0 0
  %521 = vmatpush1.bf16.msra.mxu0 0
  %522 = vmatprep.subr.bf16.mxu0 0
  %523 = vmatpush1.bf16.msra.mxu0 0
  %524 = vmatprep.subr.bf16.mxu0 0
  %525 = vmatpush1.bf16.msra.mxu0 0
  %526 = vmatprep.subr.bf16.mxu0 0
  %527 = vmatpush1.bf16.msra.mxu0 0
  %528 = vmatprep.subr.bf16.mxu0 0
  %529 = vmatpush1.bf16.msra.mxu0 %v510
  %530 = vmatprep.subr.bf16.mxu0 0
  %531 = vmatpush1.bf16.msra.mxu0 %v509
  %532 = vmatprep.subr.bf16.mxu0 0
  %533 = vmatpush2.bf16.msra.mxu0 0
  %534 = vmatprep.subr.bf16.mxu0 0
  %535 = vmatpush2.bf16.msra.mxu0 0
  %536 = vmatprep.subr.bf16.mxu0 0
  %537 = vmatpush2.bf16.msra.mxu0 0
  %538 = vmatprep.subr.bf16.mxu0 0
  %539 = vmatpush2.bf16.msra.mxu0 0
  %540 = vmatprep.subr.bf16.mxu0 0
  %541 = vmatpush2.bf16.msra.mxu0 0
  %542 = vmatprep.subr.bf16.mxu0 0
  %543 = vmatpush2.bf16.msra.mxu0 0
  %544 = vmatprep.subr.bf16.mxu0 0
  %545 = vmatpush2.bf16.msra.mxu0 0
  %546 = vmatprep.subr.bf16.mxu0 0
  %547 = vmatpush2.bf16.msra.mxu0 0
  %548 = vmatprep.mubr.bf16.mxu0 0
  %549 = vmatmul.mubr.bf16.gmra.mxu0 %v514
  %v550 = vpop.f32.mrf.mxu0
  %v551 = vadd.f32 %v497, %v550
  %v552 = vpop.f32.mrf.mxu0
  %v553 = vpop.f32.mrf.mxu0
  %v554 = vpop.f32.mrf.mxu0
  %555 = vdwg.mxu0
  %v556 = vmax.f32 %v551, 0.0
  %v557 = vpack.c.bf16 %v556, %v556
  %v558 = vld [vmem:[%s13] sm:$0xf]
  %v559 = vld [vmem:[%s13 + $0x4] sm:$0xf]
  %v560 = vld [vmem:[#allocation2] sm:$0x1]
  %v562 = vlaneseq
  %v563 = vshrl.u32 %v562, 7
  %v564 = vsub.s32 0, %v563
  %v565 = vrot.slane %v560, %v564
  %v569 = vunpack.c.l.b16 %v558
  %v570 = vunpack.c.l.b16 %v559
  %v571 = vpack.c.b16 %v570, %v569
  %vm573 = vcmask 130048
  %v575 = vsel %vm573, %v557, 0
  %577 = vmatprep.subr.bf16.mxu0 0
  %578 = vmatpush1.bf16.msra.mxu0 0
  %579 = vmatprep.subr.bf16.mxu0 0
  %580 = vmatpush1.bf16.msra.mxu0 0
  %581 = vmatprep.subr.bf16.mxu0 0
  %582 = vmatpush1.bf16.msra.mxu0 0
  %583 = vmatprep.subr.bf16.mxu0 0
  %584 = vmatpush1.bf16.msra.mxu0 0
  %585 = vmatprep.subr.bf16.mxu0 0
  %586 = vmatpush1.bf16.msra.mxu0 0
  %587 = vmatprep.subr.bf16.mxu0 0
  %588 = vmatpush1.bf16.msra.mxu0 0
  %589 = vmatprep.subr.bf16.mxu0 0
  %590 = vmatpush1.bf16.msra.mxu0 0
  %591 = vmatprep.subr.bf16.mxu0 0
  %592 = vmatpush1.bf16.msra.mxu0 %v571
  %593 = vmatprep.subr.bf16.mxu0 0
  %594 = vmatpush2.bf16.msra.mxu0 0
  %595 = vmatprep.subr.bf16.mxu0 0
  %596 = vmatpush2.bf16.msra.mxu0 0
  %597 = vmatprep.subr.bf16.mxu0 0
  %598 = vmatpush2.bf16.msra.mxu0 0
  %599 = vmatprep.subr.bf16.mxu0 0
  %600 = vmatpush2.bf16.msra.mxu0 0
  %601 = vmatprep.subr.bf16.mxu0 0
  %602 = vmatpush2.bf16.msra.mxu0 0
  %603 = vmatprep.subr.bf16.mxu0 0
  %604 = vmatpush2.bf16.msra.mxu0 0
  %605 = vmatprep.subr.bf16.mxu0 0
  %606 = vmatpush2.bf16.msra.mxu0 0
  %607 = vmatprep.subr.bf16.mxu0 0
  %608 = vmatpush2.bf16.msra.mxu0 0
  %609 = vmatprep.mubr.bf16.mxu0 0
  %610 = vmatmul.mubr.bf16.gmra.mxu0 %v575
  %v611 = vpop.f32.mrf.mxu0
  %v612 = vadd.f32 %v565, %v611
  %v613 = vpop.f32.mrf.mxu0
  %v614 = vpop.f32.mrf.mxu0
  %v615 = vpop.f32.mrf.mxu0
  %616 = vdwg.mxu0
  %v617 = vld [vmem:[%s15] sm:$0xf]
  %v618 = vld [vmem:[%s15 + $0x4] sm:$0xf]
  %v619 = vld [vmem:[%s15 + $0x8] sm:$0xf]
  %v620 = vld [vmem:[%s15 + $0xc] sm:$0xf]
  %v621 = vld [vmem:[%s16] sm:$0xf]
  %v622 = vld [vmem:[%s16 + $0x4] sm:$0xf]
  %v623 = vld [vmem:[%s16 + $0x8] sm:$0xf]
  %v624 = vld [vmem:[%s16 + $0xc] sm:$0xf]
  %v629 = vunpack.c.l.b16 %v621
  %v630 = vunpack.c.l.b16 %v622
  %v631 = vunpack.c.l.b16 %v623
  %v632 = vunpack.c.l.b16 %v624
  %v633 = vpack.c.b16 %v630, %v629
  %v634 = vpack.c.b16 %v632, %v631
  %637 = vmatprep.subr.bf16.mxu0 0
  %638 = vmatpush1.bf16.msra.mxu0 0
  %639 = vmatprep.subr.bf16.mxu0 0
  %640 = vmatpush1.bf16.msra.mxu0 0
  %641 = vmatprep.subr.bf16.mxu0 0
  %642 = vmatpush1.bf16.msra.mxu0 0
  %643 = vmatprep.subr.bf16.mxu0 0
  %644 = vmatpush1.bf16.msra.mxu0 0
  %645 = vmatprep.subr.bf16.mxu0 0
  %646 = vmatpush1.bf16.msra.mxu0 0
  %647 = vmatprep.subr.bf16.mxu0 0
  %648 = vmatpush1.bf16.msra.mxu0 0
  %649 = vmatprep.subr.bf16.mxu0 0
  %650 = vmatpush1.bf16.msra.mxu0 %v634
  %651 = vmatprep.subr.bf16.mxu0 0
  %652 = vmatpush1.bf16.msra.mxu0 %v633
  %653 = vmatprep.subr.bf16.mxu0 0
  %654 = vmatpush2.bf16.msra.mxu0 0
  %655 = vmatprep.subr.bf16.mxu0 0
  %656 = vmatpush2.bf16.msra.mxu0 0
  %657 = vmatprep.subr.bf16.mxu0 0
  %658 = vmatpush2.bf16.msra.mxu0 0
  %659 = vmatprep.subr.bf16.mxu0 0
  %660 = vmatpush2.bf16.msra.mxu0 0
  %661 = vmatprep.subr.bf16.mxu0 0
  %662 = vmatpush2.bf16.msra.mxu0 0
  %663 = vmatprep.subr.bf16.mxu0 0
  %664 = vmatpush2.bf16.msra.mxu0 0
  %665 = vmatprep.subr.bf16.mxu0 0
  %666 = vmatpush2.bf16.msra.mxu0 0
  %667 = vmatprep.subr.bf16.mxu0 0
  %668 = vmatpush2.bf16.msra.mxu0 0
  %669 = vmatprep.mubr.bf16.mxu0 0
  %670 = vmatmul.mubr.bf16.gmra.mxu0 %v446
  %v671 = vpop.f32.mrf.mxu0
  %v672 = vadd.f32 0.0, %v671
  %v673 = vpop.f32.mrf.mxu0
  %v674 = vpop.f32.mrf.mxu0
  %v675 = vpop.f32.mrf.mxu0
  %676 = vdwg.mxu0
  %v678 = vrot.slane %v672, 6
  %v680 = vrot.slane %v672, 4
  %v682 = vrot.slane %v672, 2
  %v684 = vsel %vm109, %v672, %v678
  %vm685 = vcmask 1043456
  %v686 = vsel %vm685, %v684, %v680
  %vm687 = vcmask 1045504
  %v688 = vsel %vm687, %v686, %v682
  %v690 = vrot.slane %v349, 2
  %v695 = vunpack.c.l.b16 %v617
  %v696 = vunpack.c.l.b16 %v618
  %v697 = vunpack.c.l.b16 %v619
  %v698 = vunpack.c.l.b16 %v620
  %v699 = vpack.c.b16 %v696, %v695
  %v700 = vpack.c.b16 %v698, %v697
  %v704 = vsel %vm376, %v690, 0
  %706 = vmatprep.subr.bf16.mxu0 0
  %707 = vmatpush1.bf16.msra.mxu0 0
  %708 = vmatprep.subr.bf16.mxu0 0
  %709 = vmatpush1.bf16.msra.mxu0 0
  %710 = vmatprep.subr.bf16.mxu0 0
  %711 = vmatpush1.bf16.msra.mxu0 0
  %712 = vmatprep.subr.bf16.mxu0 0
  %713 = vmatpush1.bf16.msra.mxu0 0
  %714 = vmatprep.subr.bf16.mxu0 0
  %715 = vmatpush1.bf16.msra.mxu0 0
  %716 = vmatprep.subr.bf16.mxu0 0
  %717 = vmatpush1.bf16.msra.mxu0 0
  %718 = vmatprep.subr.bf16.mxu0 0
  %719 = vmatpush1.bf16.msra.mxu0 %v700
  %720 = vmatprep.subr.bf16.mxu0 0
  %721 = vmatpush1.bf16.msra.mxu0 %v699
  %722 = vmatprep.subr.bf16.mxu0 0
  %723 = vmatpush2.bf16.msra.mxu0 0
  %724 = vmatprep.subr.bf16.mxu0 0
  %725 = vmatpush2.bf16.msra.mxu0 0
  %726 = vmatprep.subr.bf16.mxu0 0
  %727 = vmatpush2.bf16.msra.mxu0 0
  %728 = vmatprep.subr.bf16.mxu0 0
  %729 = vmatpush2.bf16.msra.mxu0 0
  %730 = vmatprep.subr.bf16.mxu0 0
  %731 = vmatpush2.bf16.msra.mxu0 0
  %732 = vmatprep.subr.bf16.mxu0 0
  %733 = vmatpush2.bf16.msra.mxu0 0
  %734 = vmatprep.subr.bf16.mxu0 0
  %735 = vmatpush2.bf16.msra.mxu0 0
  %736 = vmatprep.subr.bf16.mxu0 0
  %737 = vmatpush2.bf16.msra.mxu0 0
  %738 = vmatprep.mubr.bf16.mxu0 0
  %739 = vmatmul.mubr.bf16.gmra.mxu0 %v704
  %v740 = vpop.f32.mrf.mxu0
  %v741 = vadd.f32 %v688, %v740
  %v742 = vpop.f32.mrf.mxu0
  %v743 = vpop.f32.mrf.mxu0
  %v744 = vpop.f32.mrf.mxu0
  %745 = vdwg.mxu0
  %v746 = vld [vmem:[%s17] sm:$0x1]
  %v748 = vlaneseq
  %v749 = vshrl.u32 %v748, 7
  %v750 = vsub.s32 0, %v749
  %v751 = vrot.slane %v746, %v750
  %v753 = vadd.f32 %v741, %v751
  %v754 = vmax.f32 %v753, 0.0
  %756 = vrot.lane.b32.xlu0 %v483, 32
  %v757 = vpop.permute.xlu0 %756
  %760 = vrot.lane.b32.xlu0 %v612, 35
  %v761 = vpop.permute.xlu0 %760
  %v763 = vsel %vm376, %v345, %v757
  %vm764 = vcmask 285696
  %v765 = vsel %vm764, %v763, %v761
  %vm766 = vcmask 287744
  %767 = vst.msk [vmem:[%s18] sm:$0x3] %vm766, %v765
  %v768 = vpack.c.bf16 %v754, %v754
  %v770 = vrot.slane %v768, 6
  %771 = vrot.lane.b32.xlu0 %v770, 32
  %v772 = vpop.permute.xlu0 %771
  %v775 = vsel %vm376, %v350, %v772
  %v777 = vunpack.c.l.b16 %v775
  %v778 = vunpack.c.h.b16 %v775
  %v779 = vpack.c.b16 %v777, %v777
  %v780 = vpack.c.b16 %v778, %v778
  %vm781 = vcmask 1041408
  %vm782 = vcmask 1045508
  %vm783 = vmor %vm781, %vm782
  %v784 = vrot.slane %v779, 6
  %v785 = vrot.slane %v784, 4
  %v786 = vrot.slane %v780, 6
  %v787 = vsel %vm783, %v785, %v786
  %vm789 = vcmask 519168
  %790 = vst.msk [vmem:[%s19] sm:$0xf] %vm789, %v787
  // Predicated region
  $region74: #{_lambda_.4} parent=0 // pred_check
    _
  $region75: #{_lambda_.4} parent=0 // pred_check_branch
    %792 = sbr.rel (0) target = $region77
  $region76: #{_lambda_.4} parent=0 // pred_region
    _
  $region77: #{_lambda_.4} parent=0 // pred_fallthru
    _
  // Predicated region
  $region78: #{_lambda_.4} parent=0 // pred_check
    _
  $region79: #{_lambda_.4} parent=0 // pred_check_branch
    %794 = sbr.rel (0) target = $region81
  $region80: #{_lambda_.4} parent=0 // pred_region
    _
  $region81: #{_lambda_.4} parent=0 // pred_fallthru
    _
  // Predicated region
  $region82: #{_lambda_.4} parent=0 // pred_check
    _
  $region83: #{_lambda_.4} parent=0 // pred_check_branch
    %796 = sbr.rel (0) target = $region85
  $region84: #{_lambda_.4} parent=0 // pred_region
    _
  $region85: #{_lambda_.4} parent=0 // pred_fallthru
    _
  // Predicated region
  $region86: #{_lambda_.4} parent=0 // pred_check
    _
  $region87: #{_lambda_.4} parent=0 // pred_check_branch
    %798 = sbr.rel (0) target = $region89
  $region88: #{_lambda_.4} parent=0 // pred_region
    _
  $region89: #{_lambda_.4} parent=0 // pred_fallthru
    _

// kernel: _lambda_.5
$region0: #{_lambda_.5}
  #allocation0 [shape = 'u32[]', space=smem, size = 0x4, offset = 0x4, fixed_abs, tag = 'smem constant byte address 0x4 - core index']
  #allocation1 [shape = 'u32[144,128]{1,0:T(1,128)}', space=vmem, size = 0x12000, scoped, tag = 'internal scratch']
  #allocation2 [shape = 'f32[2]{0:T(128)}', space=smem, size = 0x200, scoped, tag = 'scratch operand']
  %s0 = inlined_call_operand.vmem [shape: bf16[4,2,64], index: 0, kind: input, shape index: {}]
  %s1 = inlined_call_operand.vmem [shape: f32[2,36], index: 1, kind: input, shape index: {}]
  %s2 = inlined_call_operand.vmem [shape: f32[2,3], index: 2, kind: input, shape index: {}]
  %s3 = inlined_call_operand.vmem [shape: f32[2,1], index: 3, kind: input, shape index: {}]
  %s4 = inlined_call_operand.vmem [shape: f32[3], index: 4, kind: output, shape index: {}]
  %s5 = sld [smem:[#allocation0]]
  $region57: #{_lambda_.5} parent=0
    _
  %s7 = ssub.s32 1, %s5
  %s8 = scalar_select 0, %s7, %s5
  $region1: #{_lambda_.5} parent=0
    #allocation3 [shape = 'u8[512]{0}', space=smem, size = 0x200, scoped, tag = 'output window, operand 0, single buffered']
    #allocation4 [shape = 's32[2]{0}', space=sflag, size = 0x8, scoped, tag = 'scoped memory for _lambda_.5']
    %9 = vsyncpa [#allocation4], 0
    loop: start=0, step=1, limit=6
    $region2: #{_lambda_.5} parent=1 // loop_pre_header
      _
    $region3: #{_lambda_.5} parent=1 // loop_header
      %s11 = sphi 0, %s15
      %p12 = scmp.ge.s32.totalorder %s11, 6
      %s21 = sphi 0, %s23
      %s24 = sphi 0, %s21
      %s25 = sphi 0, %s24
      %s41 = sphi 0, %s25
      %s45 = sphi 0, %s45
      %s47 = sphi 0, %s45
      %s48 = sphi 0, %s47
      %s62 = sphi 0, %s48
      %s66 = sphi 0, %s66
      %s68 = sphi 0, %s66
      %s69 = sphi 0, %s68
      %s83 = sphi 0, %s69
      %s87 = sphi 0, %s87
      %s89 = sphi 0, %s87
      %s90 = sphi 0, %s89
      %s104 = sphi 0, %s90
      %s108 = sphi 0, %s108
      %s110 = sphi 0, %s108
      %s111 = sphi 0, %s110
      %s125 = sphi 0, %s111
    $region4: #{_lambda_.5} parent=1 // loop_header_branch
      %14 = sbr.rel (%p12) target = $region8
    $region5: #{_lambda_.5} parent=1 // loop_body
      %s16 = ssub.s32 %s11, 1
      %s17 = ssub.s32 %s11, 2
      %s18 = sadd.s32 %s11, 1
      %s19 = ssub.s32 %s11, %s18
      %p20 = scmp.eq.s32.totalorder %s19, 0
      %s22 = sadd.s32 %s21, 1
      %s23 = scalar_select %p20, %s21, %s22
      %p26 = pneg %p20
      %p27 = scmp.eq.s32.totalorder %s11, 3
      %p28 = por %p26, %p27
      %p29 = scmp.ne.s32.totalorder %s21, %s24
      %p30 = scmp.eq.s32.totalorder %s11, 0
      %p31 = por %p29, %p30
      %p32 = scmp.ne.s32.totalorder %s21, %s24
      %p33 = scmp.eq.s32.totalorder %s16, 3
      %p34 = por %p32, %p33
      %p35 = scmp.ne.s32.totalorder %s24, %s25
      %p36 = scmp.eq.s32.totalorder %s16, 0
      %p37 = por %p35, %p36
      %p38 = scmp.ne.s32.totalorder %s24, %s25
      %p39 = scmp.eq.s32.totalorder %s17, 3
      %p40 = por %p38, %p39
      %p42 = scmp.ne.s32.totalorder %s25, %s41
      %p43 = scmp.eq.s32.totalorder %s17, 0
      %p44 = por %p42, %p43
      %s46 = sadd.s32 %s45, 1
      %p49 = scmp.eq.s32.totalorder %s11, 3
      %p50 = scmp.ne.s32.totalorder %s45, %s47
      %p51 = scmp.eq.s32.totalorder %s11, 0
      %p52 = por %p50, %p51
      %p53 = scmp.ne.s32.totalorder %s45, %s47
      %p54 = scmp.eq.s32.totalorder %s16, 3
      %p55 = por %p53, %p54
      %p56 = scmp.ne.s32.totalorder %s47, %s48
      %p57 = scmp.eq.s32.totalorder %s16, 0
      %p58 = por %p56, %p57
      %p59 = scmp.ne.s32.totalorder %s47, %s48
      %p60 = scmp.eq.s32.totalorder %s17, 3
      %p61 = por %p59, %p60
      %p63 = scmp.ne.s32.totalorder %s48, %s62
      %p64 = scmp.eq.s32.totalorder %s17, 0
      %p65 = por %p63, %p64
      %s67 = sadd.s32 %s66, 1
      %p70 = scmp.eq.s32.totalorder %s11, 3
      %p71 = scmp.ne.s32.totalorder %s66, %s68
      %p72 = scmp.eq.s32.totalorder %s11, 0
      %p73 = por %p71, %p72
      %p74 = scmp.ne.s32.totalorder %s66, %s68
      %p75 = scmp.eq.s32.totalorder %s16, 3
      %p76 = por %p74, %p75
      %p77 = scmp.ne.s32.totalorder %s68, %s69
      %p78 = scmp.eq.s32.totalorder %s16, 0
      %p79 = por %p77, %p78
      %p80 = scmp.ne.s32.totalorder %s68, %s69
      %p81 = scmp.eq.s32.totalorder %s17, 3
      %p82 = por %p80, %p81
      %p84 = scmp.ne.s32.totalorder %s69, %s83
      %p85 = scmp.eq.s32.totalorder %s17, 0
      %p86 = por %p84, %p85
      %s88 = sadd.s32 %s87, 1
      %p91 = scmp.eq.s32.totalorder %s11, 3
      %p92 = scmp.ne.s32.totalorder %s87, %s89
      %p93 = scmp.eq.s32.totalorder %s11, 0
      %p94 = por %p92, %p93
      %p95 = scmp.ne.s32.totalorder %s87, %s89
      %p96 = scmp.eq.s32.totalorder %s16, 3
      %p97 = por %p95, %p96
      %p98 = scmp.ne.s32.totalorder %s89, %s90
      %p99 = scmp.eq.s32.totalorder %s16, 0
      %p100 = por %p98, %p99
      %p101 = scmp.ne.s32.totalorder %s89, %s90
      %p102 = scmp.eq.s32.totalorder %s17, 3
      %p103 = por %p101, %p102
      %p105 = scmp.ne.s32.totalorder %s90, %s104
      %p106 = scmp.eq.s32.totalorder %s17, 0
      %p107 = por %p105, %p106
      %s109 = sadd.s32 %s108, 1
      %p112 = scmp.eq.s32.totalorder %s11, 3
      %p113 = scmp.ne.s32.totalorder %s108, %s110
      %p114 = scmp.eq.s32.totalorder %s11, 0
      %p115 = por %p113, %p114
      %p116 = scmp.ne.s32.totalorder %s108, %s110
      %p117 = scmp.eq.s32.totalorder %s16, 3
      %p118 = por %p116, %p117
      %p119 = scmp.ne.s32.totalorder %s110, %s111
      %p120 = scmp.eq.s32.totalorder %s16, 0
      %p121 = por %p119, %p120
      %p122 = scmp.ne.s32.totalorder %s110, %s111
      %p123 = scmp.eq.s32.totalorder %s17, 3
      %p124 = por %p122, %p123
      %p126 = scmp.ne.s32.totalorder %s111, %s125
      %p127 = scmp.eq.s32.totalorder %s17, 0
      %p128 = por %p126, %p127
      %p129 = scmp.le.s32.totalorder 1, %s11
      %p130 = scmp.lt.s32.totalorder %s11, 5
      %p131 = pnand %p129, %p130
      %p132 = pneg %p131
      // Predicated region
      $region9: #{_lambda_.5} parent=5 // pred_check
        _
      $region10: #{_lambda_.5} parent=5 // pred_check_branch
        %134 = sbr.rel (%p131) target = $region12
      $region11: #{_lambda_.5} parent=5 // pred_region
        %s135 = ssub.s32 %s11, 1
        // Predicated region
        $region13: #{_lambda_.5} parent=11 // pred_check
          %p136 = pneg %p58
        $region14: #{_lambda_.5} parent=11 // pred_check_branch
          %138 = sbr.rel (%p136) target = $region16
        $region15: #{_lambda_.5} parent=11 // pred_region
          _
        $region16: #{_lambda_.5} parent=11 // pred_fallthru
          _
        // Predicated region
        $region17: #{_lambda_.5} parent=11 // pred_check
          %p139 = pneg %p79
        $region18: #{_lambda_.5} parent=11 // pred_check_branch
          %141 = sbr.rel (%p139) target = $region20
        $region19: #{_lambda_.5} parent=11 // pred_region
          _
        $region20: #{_lambda_.5} parent=11 // pred_fallthru
          _
        // Predicated region
        $region21: #{_lambda_.5} parent=11 // pred_check
          %p142 = pneg %p100
        $region22: #{_lambda_.5} parent=11 // pred_check_branch
          %144 = sbr.rel (%p142) target = $region24
        $region23: #{_lambda_.5} parent=11 // pred_region
          _
        $region24: #{_lambda_.5} parent=11 // pred_fallthru
          _
      $region12: #{_lambda_.5} parent=5 // pred_fallthru
        _
      %p145 = scmp.lt.s32.totalorder %s11, 4
      // Predicated region
      $region25: #{_lambda_.5} parent=5 // pred_check
        %p146 = pneg %p145
      $region26: #{_lambda_.5} parent=5 // pred_check_branch
        %148 = sbr.rel (%p146) target = $region28
      $region27: #{_lambda_.5} parent=5 // pred_region
        // Predicated region
        $region29: #{_lambda_.5} parent=27 // pred_check
          %p149 = pneg %p31
        $region30: #{_lambda_.5} parent=27 // pred_check_branch
          %151 = sbr.rel (%p149) target = $region32
        $region31: #{_lambda_.5} parent=27 // pred_region
          %p152 = scmp.lt.s32.totalorder %s11, 3
          %s153 = scalar_select %p152, %s11, 3
          %s154 = scalar_lea.vmem %s0, %s153
        $region32: #{_lambda_.5} parent=27 // pred_fallthru
          _
      $region28: #{_lambda_.5} parent=5 // pred_fallthru
        _
      %p155 = scmp.le.s32.totalorder 1, %s11
      %p156 = scmp.lt.s32.totalorder %s11, 5
      %p157 = pnand %p155, %p156
      %p158 = pneg %p157
      // Predicated region
      $region33: #{_lambda_.5} parent=5 // pred_check
        _
      $region34: #{_lambda_.5} parent=5 // pred_check_branch
        %160 = sbr.rel (%p157) target = $region36
      $region35: #{_lambda_.5} parent=5 // pred_region
        %s161 = ssub.s32 %s11, 1
        %p162 = scmp.lt.s32.totalorder %s16, 3
        %s163 = scalar_select %p162, %s16, 3
        %s164 = scalar_lea.vmem %s0, %s163
        %p165 = pneg %p37
        %p166 = pneg %p34
        %p167 = pneg %p58
        %p168 = pneg %p55
        %p169 = pneg %p79
        %p170 = pneg %p76
        %p171 = pneg %p100
        %p172 = pneg %p97
        %p173 = pneg %p121
        %p174 = pneg %p118
        %p175 = scmp.lt.s32.totalorder %s16, 3
        %s176 = scalar_select %p175, %s16, 3
        %s177 = scalar_lea.vmem %s0, %s176
        %p179 = scmp.eq.s32.totalorder %s16, 0
        // Predicated region
        $region37: #{_lambda_.5} parent=35 // pred_check
          %p180 = pneg %p179
        $region38: #{_lambda_.5} parent=35 // pred_check_branch
          %182 = sbr.rel (%p180) target = $region40
        $region39: #{_lambda_.5} parent=35 // pred_region
          %s183 = scalar_lea.smem [#allocation2], 0
          %184 = sst [smem:[%s183]] 0.0
          %s185 = scalar_lea.smem [#allocation2], 1
          %186 = sst [smem:[%s185]] 0.0
        $region40: #{_lambda_.5} parent=35 // pred_fallthru
          _
        %v187 = vld [vmem:[%s177] sm:$0x1]
        %v188 = vld [vmem:[%s1] sm:$0x3]
        %v189 = vpack.c.bf16 %v188, %v188
        %v192 = vunpack.c.l.s4 1966171168
        %v193 = vunpack.c.0.s8 %v192
        %v194 = vlaneseq
        %v195 = vshrl.u32 %v194, 7
        %v196 = vsub.s32 %v193, %v195
        %v197 = vrot.slane %v187, %v196
        %v199 = vunpack.c.l.s4 1966171168
        %v200 = vunpack.c.0.s8 %v199
        %v201 = vlaneseq
        %v202 = vshrl.u32 %v201, 7
        %v203 = vsub.s32 %v200, %v202
        %v204 = vrot.slane %v197, %v203
        %205 = vrot.lane.b32.xlu0 %v204, 96
        %v206 = vpop.permute.xlu0 %205
        %vm207 = vcmask 261120
        %v209 = vsel %vm207, %v189, 0
        %v212 = vsel %vm207, %v206, 0
        %214 = vmatprep.subr.bf16.mxu0 0
        %215 = vmatpush1.bf16.xpose.msra.mxu0 0
        %216 = vmatprep.subr.bf16.mxu0 0
        %217 = vmatpush1.bf16.xpose.msra.mxu0 0
        %218 = vmatprep.subr.bf16.mxu0 0
        %219 = vmatpush1.bf16.xpose.msra.mxu0 0
        %220 = vmatprep.subr.bf16.mxu0 0
        %221 = vmatpush1.bf16.xpose.msra.mxu0 0
        %222 = vmatprep.subr.bf16.mxu0 0
        %223 = vmatpush1.bf16.xpose.msra.mxu0 0
        %224 = vmatprep.subr.bf16.mxu0 0
        %225 = vmatpush1.bf16.xpose.msra.mxu0 0
        %226 = vmatprep.subr.bf16.mxu0 0
        %227 = vmatpush1.bf16.xpose.msra.mxu0 0
        %228 = vmatprep.subr.bf16.mxu0 0
        %229 = vmatpush1.bf16.xpose.msra.mxu0 %v212
        %230 = vmatprep.subr.bf16.mxu0 0
        %231 = vmatpush2.bf16.xpose.msra.mxu0 0
        %232 = vmatprep.subr.bf16.mxu0 0
        %233 = vmatpush2.bf16.xpose.msra.mxu0 0
        %234 = vmatprep.subr.bf16.mxu0 0
        %235 = vmatpush2.bf16.xpose.msra.mxu0 0
        %236 = vmatprep.subr.bf16.mxu0 0
        %237 = vmatpush2.bf16.xpose.msra.mxu0 0
        %238 = vmatprep.subr.bf16.mxu0 0
        %239 = vmatpush2.bf16.xpose.msra.mxu0 0
        %240 = vmatprep.subr.bf16.mxu0 0
        %241 = vmatpush2.bf16.xpose.msra.mxu0 0
        %242 = vmatprep.subr.bf16.mxu0 0
        %243 = vmatpush2.bf16.xpose.msra.mxu0 0
        %244 = vmatprep.subr.bf16.mxu0 0
        %245 = vmatpush2.bf16.xpose.msra.mxu0 0
        %246 = vmatprep.mubr.bf16.mxu0 0
        %247 = vmatmul.mubr.bf16.gmra.mxu0 %v209
        %v248 = vpop.f32.mrf.mxu0
        %v249 = vadd.f32 0.0, %v248
        %v250 = vpop.f32.mrf.mxu0
        %v251 = vpop.f32.mrf.mxu0
        %v252 = vpop.f32.mrf.mxu0
        %253 = vdwg.mxu0
        %v255 = vsel %vm207, %v187, 0
        %257 = vmatprep.subr.bf16.mxu0 0
        %258 = vmatpush1.bf16.xpose.msra.mxu0 0
        %259 = vmatprep.subr.bf16.mxu0 0
        %260 = vmatpush1.bf16.xpose.msra.mxu0 0
        %261 = vmatprep.subr.bf16.mxu0 0
        %262 = vmatpush1.bf16.xpose.msra.mxu0 0
        %263 = vmatprep.subr.bf16.mxu0 0
        %264 = vmatpush1.bf16.xpose.msra.mxu0 0
        %265 = vmatprep.subr.bf16.mxu0 0
        %266 = vmatpush1.bf16.xpose.msra.mxu0 0
        %267 = vmatprep.subr.bf16.mxu0 0
        %268 = vmatpush1.bf16.xpose.msra.mxu0 0
        %269 = vmatprep.subr.bf16.mxu0 0
        %270 = vmatpush1.bf16.xpose.msra.mxu0 0
        %271 = vmatprep.subr.bf16.mxu0 0
        %272 = vmatpush1.bf16.xpose.msra.mxu0 %v212
        %273 = vmatprep.subr.bf16.mxu0 0
        %274 = vmatpush2.bf16.xpose.msra.mxu0 0
        %275 = vmatprep.subr.bf16.mxu0 0
        %276 = vmatpush2.bf16.xpose.msra.mxu0 0
        %277 = vmatprep.subr.bf16.mxu0 0
        %278 = vmatpush2.bf16.xpose.msra.mxu0 0
        %279 = vmatprep.subr.bf16.mxu0 0
        %280 = vmatpush2.bf16.xpose.msra.mxu0 0
        %281 = vmatprep.subr.bf16.mxu0 0
        %282 = vmatpush2.bf16.xpose.msra.mxu0 0
        %283 = vmatprep.subr.bf16.mxu0 0
        %284 = vmatpush2.bf16.xpose.msra.mxu0 0
        %285 = vmatprep.subr.bf16.mxu0 0
        %286 = vmatpush2.bf16.xpose.msra.mxu0 0
        %287 = vmatprep.subr.bf16.mxu0 0
        %288 = vmatpush2.bf16.xpose.msra.mxu0 0
        %289 = vmatprep.mubr.bf16.mxu0 0
        %290 = vmatmul.mubr.bf16.gmra.mxu0 %v255
        %v291 = vpop.f32.mrf.mxu0
        %v292 = vadd.f32 0.0, %v291
        %v293 = vpop.f32.mrf.mxu0
        %v294 = vpop.f32.mrf.mxu0
        %v295 = vpop.f32.mrf.mxu0
        %296 = vdwg.mxu0
        %v297 = vunpack.c.l.bf16 %v187
        %v298 = vunpack.c.l.bf16 %v189
        %v301 = vunpack.c.l.s4 1983009808
        %v302 = vunpack.c.0.s8 %v301
        %v303 = vlaneseq
        %v304 = vshrl.u32 %v303, 7
        %v305 = vsub.s32 %v302, %v304
        %v306 = vrot.slane %v297, %v305
        %307 = vrot.lane.b32.xlu0 %v306, 96
        %v308 = vpop.permute.xlu0 %307
        %v310 = vmul.f32 %v298, %v308
        %vm311 = vcmask 254976
        %v312 = vsel %vm311, %v310, 0.0
        %313 = vadd.xlane.f32.xlu0 %v312
        %v314 = vpop.xlane.xlu0 %313
        %315 = vrot.lane.b32.xlu0 %v297, 96
        %v316 = vpop.permute.xlu0 %315
        %v318 = vmul.f32 %v297, %v316
        %v319 = vsel %vm311, %v318, 0.0
        %320 = vadd.xlane.f32.xlu0 %v319
        %v321 = vpop.xlane.xlu0 %320
        %s322 = sld [smem:[#allocation2]]
        %vm323 = vcmask 9216
        %v324 = vsel %vm323, %v249, -inf
        %325 = vmax.xlane.f32.xlu0 %v324
        %v326 = vpop.xlane.xlu0 %325
        %v327 = vsub.f32 %v249, %v326
        %v328 = vmul.f32 %v327, 1.442695
        %v329 = vpow.pop %v328
        %v330 = vsel %vm323, %v329, 0.0
        %331 = vadd.xlane.f32.xlu0 %v330
        %v332 = vpop.xlane.xlu0 %331
        %v333 = vlog2.pop %v332
        %v334 = vmul.f32 %v333, 0.6931472
        %v335 = vadd.f32 %v334, %v326
        %v336 = vsub.f32 %v335, %v314
        %vm337 = vcmask 1024
        %v338 = vsel %vm337, %v336, 0.0
        %339 = vadd.xlane.f32.xlu0 %v338
        %v340 = vpop.xlane.xlu0 %339
        %v341 = vrot.slane %v340, 4
        %v342 = vadd.f32 %v340, %v341
        %v343 = vrot.slane %v342, 2
        %v344 = vadd.f32 %v342, %v343
        %v345 = vrot.slane %v344, 1
        %v346 = vadd.f32 %v344, %v345
        %s347 = vtos %v346
        %v348 = vrcp.pop 2.0
        %s349 = vtos %v348
        %s350 = smul.f32 %s347, %s349
        %s351 = sadd.f32 %s322, %s350
        %s352 = scalar_lea.smem [#allocation2], 0
        %353 = sst [smem:[%s352]] %s351
        %s354 = sld [smem:[#allocation2 + $0x1]]
        %v355 = vsel %vm323, %v292, -inf
        %356 = vmax.xlane.f32.xlu0 %v355
        %v357 = vpop.xlane.xlu0 %356
        %v358 = vsub.f32 %v292, %v357
        %v359 = vmul.f32 %v358, 1.442695
        %v360 = vpow.pop %v359
        %v361 = vsel %vm323, %v360, 0.0
        %362 = vadd.xlane.f32.xlu0 %v361
        %v363 = vpop.xlane.xlu0 %362
        %v364 = vlog2.pop %v363
        %v365 = vmul.f32 %v364, 0.6931472
        %v366 = vadd.f32 %v365, %v357
        %v367 = vsub.f32 %v366, %v321
        %v368 = vsel %vm337, %v367, 0.0
        %369 = vadd.xlane.f32.xlu0 %v368
        %v370 = vpop.xlane.xlu0 %369
        %v371 = vrot.slane %v370, 4
        %v372 = vadd.f32 %v370, %v371
        %v373 = vrot.slane %v372, 2
        %v374 = vadd.f32 %v372, %v373
        %v375 = vrot.slane %v374, 1
        %v376 = vadd.f32 %v374, %v375
        %s377 = vtos %v376
        %v378 = vrcp.pop 2.0
        %s379 = vtos %v378
        %s380 = smul.f32 %s377, %s379
        %s381 = sadd.f32 %s354, %s380
        %s382 = scalar_lea.smem [#allocation2], 1
        %383 = sst [smem:[%s382]] %s381
        %p384 = scmp.eq.s32.totalorder %s16, 3
        // Predicated region
        $region41: #{_lambda_.5} parent=35 // pred_check
          %p385 = pneg %p384
        $region42: #{_lambda_.5} parent=35 // pred_check_branch
          %387 = sbr.rel (%p385) target = $region44
        $region43: #{_lambda_.5} parent=35 // pred_region
          %v388 = vld [vmem:[%s1] sm:$0x3]
          %v389 = vld [vmem:[%s2] sm:$0x3]
          %391 = vrot.lane.b32.xlu0 %v389, 32
          %v392 = vpop.permute.xlu0 %391
          %v394 = vsub.f32 %v388, %v392
          %v395 = vand.u32 2147483647, %v394
          %v396 = vmul.f32 %v395, 0.5
          %v397 = vmul.f32 %v395, 0.45
          %399 = vrot.lane.b32.xlu0 %v397, 127
          %v400 = vpop.permute.xlu0 %399
          %v402 = vadd.f32 %v396, %v400
          %v403 = vmul.f32 %v395, 0.05
          %405 = vrot.lane.b32.xlu0 %v403, 126
          %v406 = vpop.permute.xlu0 %405
          %v408 = vadd.f32 %v402, %v406
          %410 = vrot.lane.b32.xlu0 %v408, 96
          %v411 = vpop.permute.xlu0 %410
          %v413 = vsel %vm337, %v411, 0.0
          %414 = vadd.xlane.f32.xlu0 %v413
          %v415 = vpop.xlane.xlu0 %414
          %v416 = vrot.slane %v415, 4
          %v417 = vadd.f32 %v415, %v416
          %v418 = vrot.slane %v417, 2
          %v419 = vadd.f32 %v417, %v418
          %v420 = vrot.slane %v419, 1
          %v421 = vadd.f32 %v419, %v420
          %s422 = vtos %v421
          %v423 = vld [vmem:[%s3] sm:$0x3]
          %425 = vrot.lane.b32.xlu0 %v423, 35
          %v426 = vpop.permute.xlu0 %425
          %v428 = vsub.f32 %v388, %v426
          %v429 = vand.u32 2147483647, %v428
          %431 = vrot.lane.b32.xlu0 %v429, 93
          %v432 = vpop.permute.xlu0 %431
          %v434 = vsel %vm337, %v432, 0.0
          %435 = vadd.xlane.f32.xlu0 %v434
          %v436 = vpop.xlane.xlu0 %435
          %v437 = vrot.slane %v436, 4
          %v438 = vadd.f32 %v436, %v437
          %v439 = vrot.slane %v438, 2
          %v440 = vadd.f32 %v438, %v439
          %v441 = vrot.slane %v440, 1
          %v442 = vadd.f32 %v440, %v441
          %s443 = vtos %v442
          %s444 = smul.f32 %s422, 0.95
          %v445 = vrcp.pop 2.0
          %s446 = vtos %v445
          %s447 = smul.f32 %s444, %s446
          %s448 = smul.f32 %s443, 0.05
          %v449 = vrcp.pop 2.0
          %s450 = vtos %v449
          %s451 = smul.f32 %s448, %s450
          %s452 = sadd.f32 %s447, %s451
          %s453 = sld [smem:[#allocation2]]
          %s454 = sadd.f32 %s452, %s453
          %s455 = sld [smem:[#allocation2 + $0x1]]
          %v456 = vrcp.pop 4.0
          %s457 = vtos %v456
          %s458 = smul.f32 %s455, %s457
          %s459 = smul.f32 %s458, 0.5
          %s460 = sadd.f32 %s454, %s459
          %s461 = scalar_lea.smem [#allocation3], 0
          %462 = sst [smem:[%s461]] %s460
          %s463 = scalar_lea.smem [#allocation3], 1
          %464 = sst [smem:[%s463]] %s454
          %s465 = scalar_lea.smem [#allocation3], 2
          %466 = sst [smem:[%s465]] %s459
        $region44: #{_lambda_.5} parent=35 // pred_fallthru
          _
        // Predicated region
        $region45: #{_lambda_.5} parent=35 // pred_check
          %p467 = pneg %p118
        $region46: #{_lambda_.5} parent=35 // pred_check_branch
          %469 = sbr.rel (%p467) target = $region48
        $region47: #{_lambda_.5} parent=35 // pred_region
          %s471 = ssub.s32 16, 16
          %472 = vsyncadd [#allocation4], %s471
          %s474 = sshll.u32 %s4, 4
          %s475 = int_to_ptr.vmem [resolvable:$true] %s474
          %477 = dma.smem_to_vmem [#allocation3], 16, %s475, [#allocation4]
        $region48: #{_lambda_.5} parent=35 // pred_fallthru
          _
        // Predicated region
        $region49: #{_lambda_.5} parent=35 // pred_check
          %p478 = pneg %p118
        $region50: #{_lambda_.5} parent=35 // pred_check_branch
          %480 = sbr.rel (%p478) target = $region52
        $region51: #{_lambda_.5} parent=35 // pred_region
          %481 = dma.done [#allocation4], 16
        $region52: #{_lambda_.5} parent=35 // pred_fallthru
          _
        %482 = sfence
      $region36: #{_lambda_.5} parent=5 // pred_fallthru
        _
      %p483 = scmp.le.s32.totalorder 2, %s11
      // Predicated region
      $region53: #{_lambda_.5} parent=5 // pred_check
        %p484 = pneg %p483
      $region54: #{_lambda_.5} parent=5 // pred_check_branch
        %486 = sbr.rel (%p484) target = $region56
      $region55: #{_lambda_.5} parent=5 // pred_region
        %s487 = ssub.s32 %s11, 2
      $region56: #{_lambda_.5} parent=5 // pred_fallthru
        _
    $region6: #{_lambda_.5} parent=1 // loop_footer
      %s15 = sadd.s32 1, %s11
    $region7: #{_lambda_.5} parent=1 // loop_footer_branch
      %10 = sbr.rel target = $region3
    $region8: #{_lambda_.5} parent=1 // loop_exit
      _
    %488 = vsyncpa [#allocation4], 1
    %s489 = scalar_lea.sflag [#allocation4], 1
    %490 = vsyncpa %s489, 1

// kernel: _lambda_.3
$region0: #{_lambda_.3}
  #allocation0 [shape = 'u32[]', space=smem, size = 0x4, offset = 0x4, fixed_abs, tag = 'smem constant byte address 0x4 - core index']
  #allocation1 [shape = 'u32[144,128]{1,0:T(1,128)}', space=vmem, size = 0x12000, scoped, tag = 'internal scratch']
  %s0 = inlined_call_operand.vmem [shape: bf16[4,768], index: 0, kind: input, shape index: {}]
  %s1 = inlined_call_operand.vmem [shape: bf16[768,512], index: 1, kind: input, shape index: {}]
  %s2 = inlined_call_operand.vmem [shape: f32[1,512], index: 2, kind: input, shape index: {}]
  %s3 = inlined_call_operand.hbm [shape: bf16[512,256], index: 3, kind: input, shape index: {}]
  %s4 = inlined_call_operand.vmem [shape: f32[1,256], index: 4, kind: input, shape index: {}]
  %s5 = inlined_call_operand.hbm [shape: bf16[256,256], index: 5, kind: input, shape index: {}]
  %s6 = inlined_call_operand.vmem [shape: f32[1,256], index: 6, kind: input, shape index: {}]
  %s7 = inlined_call_operand.vmem [shape: bf16[256,128], index: 7, kind: input, shape index: {}]
  %s8 = inlined_call_operand.vmem [shape: f32[1,128], index: 8, kind: input, shape index: {}]
  %s9 = inlined_call_operand.hbm [shape: bf16[128,128], index: 9, kind: input, shape index: {}]
  %s10 = inlined_call_operand.vmem [shape: f32[1,128], index: 10, kind: input, shape index: {}]
  %s11 = inlined_call_operand.hbm [shape: bf16[128,32], index: 11, kind: input, shape index: {}]
  %s12 = inlined_call_operand.vmem [shape: f32[1,32], index: 12, kind: input, shape index: {}]
  %s13 = inlined_call_operand.vmem [shape: bf16[4,128], index: 13, kind: output, shape index: {0}]
  %s14 = inlined_call_operand.vmem [shape: bf16[4,32], index: 14, kind: output, shape index: {1}]
  %15 = xla_tuple %s13, %s14
  %s16 = sld [smem:[#allocation0]]
  $region86: #{_lambda_.3} parent=0
    _
  %s18 = ssub.s32 1, %s16
  %s19 = scalar_select 0, %s18, %s16
  $region1: #{_lambda_.3} parent=0
    #allocation2 [shape = 'u8[262144]{0}', space=vmem, size = 0x40000, scoped, tag = 'input window, operand 3, single buffered']
    #allocation3 [shape = 's32[1]{0}', space=sflag, size = 0x4, scoped, tag = 'scoped memory for _lambda_.3']
    #allocation4 [shape = 'u8[131072]{0}', space=vmem, size = 0x20000, scoped, tag = 'input window, operand 5, single buffered']
    #allocation5 [shape = 's32[1]{0}', space=sflag, size = 0x4, scoped, tag = 'scoped memory for _lambda_.3']
    #allocation6 [shape = 'u8[32768]{0}', space=vmem, size = 0x8000, scoped, tag = 'input window, operand 9, single buffered']
    #allocation7 [shape = 'u8[32768]{0}', space=vmem, size = 0x8000, scoped, tag = 'input window, operand 11, single buffered']
    #allocation8 [shape = 's32[1]{0}', space=sflag, size = 0x4, scoped, tag = 'scoped memory for _lambda_.3']
    %20 = vsyncpa [#allocation3], 0
    %21 = vsyncpa [#allocation5], 0
    %22 = vsyncpa [#allocation8], 0
    // Predicated region
    $region2: #{_lambda_.3} parent=1 // pred_check
      _
    $region3: #{_lambda_.3} parent=1 // pred_check_branch
      %24 = sbr.rel (0) target = $region5
    $region4: #{_lambda_.3} parent=1 // pred_region
      _
    $region5: #{_lambda_.3} parent=1 // pred_fallthru
      _
    // Predicated region
    $region6: #{_lambda_.3} parent=1 // pred_check
      _
    $region7: #{_lambda_.3} parent=1 // pred_check_branch
      %26 = sbr.rel (0) target = $region9
    $region8: #{_lambda_.3} parent=1 // pred_region
      _
    $region9: #{_lambda_.3} parent=1 // pred_fallthru
      _
    // Predicated region
    $region10: #{_lambda_.3} parent=1 // pred_check
      _
    $region11: #{_lambda_.3} parent=1 // pred_check_branch
      %28 = sbr.rel (0) target = $region13
    $region12: #{_lambda_.3} parent=1 // pred_region
      _
    $region13: #{_lambda_.3} parent=1 // pred_fallthru
      _
    // Predicated region
    $region14: #{_lambda_.3} parent=1 // pred_check
      _
    $region15: #{_lambda_.3} parent=1 // pred_check_branch
      %30 = sbr.rel (0) target = $region17
    $region16: #{_lambda_.3} parent=1 // pred_region
      %s32 = ssub.s32 8192, 8192
      %33 = vsyncadd [#allocation3], %s32
      %s34 = sshll.u32 [#allocation2], 4
      %s35 = int_to_ptr.vmem [resolvable:$true] %s34
      %40 = dma.hbm_to_vmem [thread:$0]  %s3, 8192, %s35, [#allocation3], 128, 128, 8
    $region17: #{_lambda_.3} parent=1 // pred_fallthru
      _
    // Predicated region
    $region18: #{_lambda_.3} parent=1 // pred_check
      _
    $region19: #{_lambda_.3} parent=1 // pred_check_branch
      %42 = sbr.rel (0) target = $region21
    $region20: #{_lambda_.3} parent=1 // pred_region
      _
    $region21: #{_lambda_.3} parent=1 // pred_fallthru
      _
    // Predicated region
    $region22: #{_lambda_.3} parent=1 // pred_check
      _
    $region23: #{_lambda_.3} parent=1 // pred_check_branch
      %44 = sbr.rel (0) target = $region25
    $region24: #{_lambda_.3} parent=1 // pred_region
      %s46 = ssub.s32 4096, 4096
      %47 = vsyncadd [#allocation5], %s46
      %s48 = sshll.u32 [#allocation4], 4
      %s49 = int_to_ptr.vmem [resolvable:$true] %s48
      %54 = dma.hbm_to_vmem [thread:$0]  %s5, 4096, %s49, [#allocation5], 128, 128, 8
    $region25: #{_lambda_.3} parent=1 // pred_fallthru
      _
    // Predicated region
    $region26: #{_lambda_.3} parent=1 // pred_check
      _
    $region27: #{_lambda_.3} parent=1 // pred_check_branch
      %56 = sbr.rel (0) target = $region29
    $region28: #{_lambda_.3} parent=1 // pred_region
      _
    $region29: #{_lambda_.3} parent=1 // pred_fallthru
      _
    // Predicated region
    $region30: #{_lambda_.3} parent=1 // pred_check
      _
    $region31: #{_lambda_.3} parent=1 // pred_check_branch
      %58 = sbr.rel (0) target = $region33
    $region32: #{_lambda_.3} parent=1 // pred_region
      _
    $region33: #{_lambda_.3} parent=1 // pred_fallthru
      _
    // Predicated region
    $region34: #{_lambda_.3} parent=1 // pred_check
      _
    $region35: #{_lambda_.3} parent=1 // pred_check_branch
      %60 = sbr.rel (0) target = $region37
    $region36: #{_lambda_.3} parent=1 // pred_region
      _
    $region37: #{_lambda_.3} parent=1 // pred_fallthru
      _
    // Predicated region
    $region38: #{_lambda_.3} parent=1 // pred_check
      _
    $region39: #{_lambda_.3} parent=1 // pred_check_branch
      %62 = sbr.rel (0) target = $region41
    $region40: #{_lambda_.3} parent=1 // pred_region
      %s64 = ssub.s32 1024, 1024
      %65 = vsyncadd [#allocation5], %s64
      %s66 = sshll.u32 [#allocation6], 4
      %s67 = int_to_ptr.vmem [resolvable:$true] %s66
      %72 = dma.hbm_to_vmem [thread:$0]  %s9, 1024, %s67, [#allocation5], 64, 64, 4
    $region41: #{_lambda_.3} parent=1 // pred_fallthru
      _
    // Predicated region
    $region42: #{_lambda_.3} parent=1 // pred_check
      _
    $region43: #{_lambda_.3} parent=1 // pred_check_branch
      %74 = sbr.rel (0) target = $region45
    $region44: #{_lambda_.3} parent=1 // pred_region
      _
    $region45: #{_lambda_.3} parent=1 // pred_fallthru
      _
    // Predicated region
    $region46: #{_lambda_.3} parent=1 // pred_check
      _
    $region47: #{_lambda_.3} parent=1 // pred_check_branch
      %76 = sbr.rel (0) target = $region49
    $region48: #{_lambda_.3} parent=1 // pred_region
      %s78 = ssub.s32 1024, 1024
      %79 = vsyncadd [#allocation8], %s78
      %s80 = sshll.u32 [#allocation7], 4
      %s81 = int_to_ptr.vmem [resolvable:$true] %s80
      %86 = dma.hbm_to_vmem [thread:$0]  %s11, 1024, %s81, [#allocation8], 64, 64, 4
    $region49: #{_lambda_.3} parent=1 // pred_fallthru
      _
    // Predicated region
    $region50: #{_lambda_.3} parent=1 // pred_check
      _
    $region51: #{_lambda_.3} parent=1 // pred_check_branch
      %88 = sbr.rel (0) target = $region53
    $region52: #{_lambda_.3} parent=1 // pred_region
      _
    $region53: #{_lambda_.3} parent=1 // pred_fallthru
      _
    // Predicated region
    $region54: #{_lambda_.3} parent=1 // pred_check
      _
    $region55: #{_lambda_.3} parent=1 // pred_check_branch
      %90 = sbr.rel (0) target = $region57
    $region56: #{_lambda_.3} parent=1 // pred_region
      %91 = dma.done [#allocation3], 8192
    $region57: #{_lambda_.3} parent=1 // pred_fallthru
      _
    // Predicated region
    $region58: #{_lambda_.3} parent=1 // pred_check
      _
    $region59: #{_lambda_.3} parent=1 // pred_check_branch
      %93 = sbr.rel (0) target = $region61
    $region60: #{_lambda_.3} parent=1 // pred_region
      %94 = dma.done [#allocation5], 4096
    $region61: #{_lambda_.3} parent=1 // pred_fallthru
      _
    // Predicated region
    $region62: #{_lambda_.3} parent=1 // pred_check
      _
    $region63: #{_lambda_.3} parent=1 // pred_check_branch
      %96 = sbr.rel (0) target = $region65
    $region64: #{_lambda_.3} parent=1 // pred_region
      %97 = dma.done [#allocation5], 1024
    $region65: #{_lambda_.3} parent=1 // pred_fallthru
      _
    // Predicated region
    $region66: #{_lambda_.3} parent=1 // pred_check
      _
    $region67: #{_lambda_.3} parent=1 // pred_check_branch
      %99 = sbr.rel (0) target = $region69
    $region68: #{_lambda_.3} parent=1 // pred_region
      %100 = dma.done [#allocation8], 1024
    $region69: #{_lambda_.3} parent=1 // pred_fallthru
      _
    %v102 = vld [vmem:[%s0] sm:$0xff]
    %v103 = vld [vmem:[%s0 + $0x8] sm:$0xf]
    %v104 = vld [vmem:[%s1] sm:$0xff]
    %v105 = vld [vmem:[%s1 + $0x8] sm:$0xff]
    %v106 = vld [vmem:[%s1 + $0x10] sm:$0xff]
    %v107 = vld [vmem:[%s1 + $0x18] sm:$0xff]
    %v108 = vld [vmem:[%s1 + $0x20] sm:$0xff]
    %v109 = vld [vmem:[%s1 + $0x28] sm:$0xff]
    %v110 = vld [vmem:[%s1 + $0x30] sm:$0xff]
    %v111 = vld [vmem:[%s1 + $0x38] sm:$0xff]
    %v112 = vld [vmem:[%s1 + $0x40] sm:$0xff]
    %v113 = vld [vmem:[%s1 + $0x48] sm:$0xff]
    %v114 = vld [vmem:[%s1 + $0x50] sm:$0xff]
    %v115 = vld [vmem:[%s1 + $0x58] sm:$0xff]
    %v116 = vld [vmem:[%s1 + $0x60] sm:$0xff]
    %v117 = vld [vmem:[%s1 + $0x68] sm:$0xff]
    %v118 = vld [vmem:[%s1 + $0x70] sm:$0xff]
    %v119 = vld [vmem:[%s1 + $0x78] sm:$0xff]
    %v120 = vld [vmem:[%s1 + $0x80] sm:$0xff]
    %v121 = vld [vmem:[%s1 + $0x88] sm:$0xff]
    %v122 = vld [vmem:[%s1 + $0x90] sm:$0xff]
    %v123 = vld [vmem:[%s1 + $0x98] sm:$0xff]
    %v124 = vld [vmem:[%s1 + $0xa0] sm:$0xff]
    %v125 = vld [vmem:[%s1 + $0xa8] sm:$0xff]
    %v126 = vld [vmem:[%s1 + $0xb0] sm:$0xff]
    %v127 = vld [vmem:[%s1 + $0xb8] sm:$0xff]
    %v128 = vld [vmem:[%s1 + $0xc0] sm:$0xff]
    %v129 = vld [vmem:[%s1 + $0xc8] sm:$0xff]
    %v130 = vld [vmem:[%s1 + $0xd0] sm:$0xff]
    %v131 = vld [vmem:[%s1 + $0xd8] sm:$0xff]
    %v132 = vld [vmem:[%s1 + $0xe0] sm:$0xff]
    %v133 = vld [vmem:[%s1 + $0xe8] sm:$0xff]
    %v134 = vld [vmem:[%s1 + $0xf0] sm:$0xff]
    %v135 = vld [vmem:[%s1 + $0xf8] sm:$0xff]
    %v136 = vld [vmem:[%s1 + $0x100] sm:$0xff]
    %v137 = vld [vmem:[%s1 + $0x108] sm:$0xff]
    %v138 = vld [vmem:[%s1 + $0x110] sm:$0xff]
    %v139 = vld [vmem:[%s1 + $0x118] sm:$0xff]
    %v140 = vld [vmem:[%s1 + $0x120] sm:$0xff]
    %v141 = vld [vmem:[%s1 + $0x128] sm:$0xff]
    %v142 = vld [vmem:[%s1 + $0x130] sm:$0xff]
    %v143 = vld [vmem:[%s1 + $0x138] sm:$0xff]
    %v144 = vld [vmem:[%s1 + $0x140] sm:$0xff]
    %v145 = vld [vmem:[%s1 + $0x148] sm:$0xff]
    %v146 = vld [vmem:[%s1 + $0x150] sm:$0xff]
    %v147 = vld [vmem:[%s1 + $0x158] sm:$0xff]
    %v148 = vld [vmem:[%s1 + $0x160] sm:$0xff]
    %v149 = vld [vmem:[%s1 + $0x168] sm:$0xff]
    %v150 = vld [vmem:[%s1 + $0x170] sm:$0xff]
    %v151 = vld [vmem:[%s1 + $0x178] sm:$0xff]
    %v152 = vld [vmem:[%s1 + $0x180] sm:$0xff]
    %v153 = vld [vmem:[%s1 + $0x188] sm:$0xff]
    %v154 = vld [vmem:[%s1 + $0x190] sm:$0xff]
    %v155 = vld [vmem:[%s1 + $0x198] sm:$0xff]
    %v156 = vld [vmem:[%s1 + $0x1a0] sm:$0xff]
    %v157 = vld [vmem:[%s1 + $0x1a8] sm:$0xff]
    %v158 = vld [vmem:[%s1 + $0x1b0] sm:$0xff]
    %v159 = vld [vmem:[%s1 + $0x1b8] sm:$0xff]
    %v160 = vld [vmem:[%s1 + $0x1c0] sm:$0xff]
    %v161 = vld [vmem:[%s1 + $0x1c8] sm:$0xff]
    %v162 = vld [vmem:[%s1 + $0x1d0] sm:$0xff]
    %v163 = vld [vmem:[%s1 + $0x1d8] sm:$0xff]
    %v164 = vld [vmem:[%s1 + $0x1e0] sm:$0xff]
    %v165 = vld [vmem:[%s1 + $0x1e8] sm:$0xff]
    %v166 = vld [vmem:[%s1 + $0x1f0] sm:$0xff]
    %v167 = vld [vmem:[%s1 + $0x1f8] sm:$0xff]
    %v168 = vld [vmem:[%s1 + $0x200] sm:$0xff]
    %v169 = vld [vmem:[%s1 + $0x208] sm:$0xff]
    %v170 = vld [vmem:[%s1 + $0x210] sm:$0xff]
    %v171 = vld [vmem:[%s1 + $0x218] sm:$0xff]
    %v172 = vld [vmem:[%s1 + $0x220] sm:$0xff]
    %v173 = vld [vmem:[%s1 + $0x228] sm:$0xff]
    %v174 = vld [vmem:[%s1 + $0x230] sm:$0xff]
    %v175 = vld [vmem:[%s1 + $0x238] sm:$0xff]
    %v176 = vld [vmem:[%s1 + $0x240] sm:$0xff]
    %v177 = vld [vmem:[%s1 + $0x248] sm:$0xff]
    %v178 = vld [vmem:[%s1 + $0x250] sm:$0xff]
    %v179 = vld [vmem:[%s1 + $0x258] sm:$0xff]
    %v180 = vld [vmem:[%s1 + $0x260] sm:$0xff]
    %v181 = vld [vmem:[%s1 + $0x268] sm:$0xff]
    %v182 = vld [vmem:[%s1 + $0x270] sm:$0xff]
    %v183 = vld [vmem:[%s1 + $0x278] sm:$0xff]
    %v184 = vld [vmem:[%s1 + $0x280] sm:$0xff]
    %v185 = vld [vmem:[%s1 + $0x288] sm:$0xff]
    %v186 = vld [vmem:[%s1 + $0x290] sm:$0xff]
    %v187 = vld [vmem:[%s1 + $0x298] sm:$0xff]
    %v188 = vld [vmem:[%s1 + $0x2a0] sm:$0xff]
    %v189 = vld [vmem:[%s1 + $0x2a8] sm:$0xff]
    %v190 = vld [vmem:[%s1 + $0x2b0] sm:$0xff]
    %v191 = vld [vmem:[%s1 + $0x2b8] sm:$0xff]
    %v192 = vld [vmem:[%s1 + $0x2c0] sm:$0xff]
    %v193 = vld [vmem:[%s1 + $0x2c8] sm:$0xff]
    %v194 = vld [vmem:[%s1 + $0x2d0] sm:$0xff]
    %v195 = vld [vmem:[%s1 + $0x2d8] sm:$0xff]
    %v196 = vld [vmem:[%s1 + $0x2e0] sm:$0xff]
    %v197 = vld [vmem:[%s1 + $0x2e8] sm:$0xff]
    %v198 = vld [vmem:[%s1 + $0x2f0] sm:$0xff]
    %v199 = vld [vmem:[%s1 + $0x2f8] sm:$0xff]
    %v200 = vld [vmem:[%s1 + $0x300] sm:$0xff]
    %v201 = vld [vmem:[%s1 + $0x308] sm:$0xff]
    %v202 = vld [vmem:[%s1 + $0x310] sm:$0xff]
    %v203 = vld [vmem:[%s1 + $0x318] sm:$0xff]
    %v204 = vld [vmem:[%s1 + $0x320] sm:$0xff]
    %v205 = vld [vmem:[%s1 + $0x328] sm:$0xff]
    %v206 = vld [vmem:[%s1 + $0x330] sm:$0xff]
    %v207 = vld [vmem:[%s1 + $0x338] sm:$0xff]
    %v208 = vld [vmem:[%s1 + $0x340] sm:$0xff]
    %v209 = vld [vmem:[%s1 + $0x348] sm:$0xff]
    %v210 = vld [vmem:[%s1 + $0x350] sm:$0xff]
    %v211 = vld [vmem:[%s1 + $0x358] sm:$0xff]
    %v212 = vld [vmem:[%s1 + $0x360] sm:$0xff]
    %v213 = vld [vmem:[%s1 + $0x368] sm:$0xff]
    %v214 = vld [vmem:[%s1 + $0x370] sm:$0xff]
    %v215 = vld [vmem:[%s1 + $0x378] sm:$0xff]
    %v216 = vld [vmem:[%s1 + $0x380] sm:$0xff]
    %v217 = vld [vmem:[%s1 + $0x388] sm:$0xff]
    %v218 = vld [vmem:[%s1 + $0x390] sm:$0xff]
    %v219 = vld [vmem:[%s1 + $0x398] sm:$0xff]
    %v220 = vld [vmem:[%s1 + $0x3a0] sm:$0xff]
    %v221 = vld [vmem:[%s1 + $0x3a8] sm:$0xff]
    %v222 = vld [vmem:[%s1 + $0x3b0] sm:$0xff]
    %v223 = vld [vmem:[%s1 + $0x3b8] sm:$0xff]
    %v224 = vld [vmem:[%s1 + $0x3c0] sm:$0xff]
    %v225 = vld [vmem:[%s1 + $0x3c8] sm:$0xff]
    %v226 = vld [vmem:[%s1 + $0x3d0] sm:$0xff]
    %v227 = vld [vmem:[%s1 + $0x3d8] sm:$0xff]
    %v228 = vld [vmem:[%s1 + $0x3e0] sm:$0xff]
    %v229 = vld [vmem:[%s1 + $0x3e8] sm:$0xff]
    %v230 = vld [vmem:[%s1 + $0x3f0] sm:$0xff]
    %v231 = vld [vmem:[%s1 + $0x3f8] sm:$0xff]
    %v232 = vld [vmem:[%s1 + $0x400] sm:$0xff]
    %v233 = vld [vmem:[%s1 + $0x408] sm:$0xff]
    %v234 = vld [vmem:[%s1 + $0x410] sm:$0xff]
    %v235 = vld [vmem:[%s1 + $0x418] sm:$0xff]
    %v236 = vld [vmem:[%s1 + $0x420] sm:$0xff]
    %v237 = vld [vmem:[%s1 + $0x428] sm:$0xff]
    %v238 = vld [vmem:[%s1 + $0x430] sm:$0xff]
    %v239 = vld [vmem:[%s1 + $0x438] sm:$0xff]
    %v240 = vld [vmem:[%s1 + $0x440] sm:$0xff]
    %v241 = vld [vmem:[%s1 + $0x448] sm:$0xff]
    %v242 = vld [vmem:[%s1 + $0x450] sm:$0xff]
    %v243 = vld [vmem:[%s1 + $0x458] sm:$0xff]
    %v244 = vld [vmem:[%s1 + $0x460] sm:$0xff]
    %v245 = vld [vmem:[%s1 + $0x468] sm:$0xff]
    %v246 = vld [vmem:[%s1 + $0x470] sm:$0xff]
    %v247 = vld [vmem:[%s1 + $0x478] sm:$0xff]
    %v248 = vld [vmem:[%s1 + $0x480] sm:$0xff]
    %v249 = vld [vmem:[%s1 + $0x488] sm:$0xff]
    %v250 = vld [vmem:[%s1 + $0x490] sm:$0xff]
    %v251 = vld [vmem:[%s1 + $0x498] sm:$0xff]
    %v252 = vld [vmem:[%s1 + $0x4a0] sm:$0xff]
    %v253 = vld [vmem:[%s1 + $0x4a8] sm:$0xff]
    %v254 = vld [vmem:[%s1 + $0x4b0] sm:$0xff]
    %v255 = vld [vmem:[%s1 + $0x4b8] sm:$0xff]
    %v256 = vld [vmem:[%s1 + $0x4c0] sm:$0xff]
    %v257 = vld [vmem:[%s1 + $0x4c8] sm:$0xff]
    %v258 = vld [vmem:[%s1 + $0x4d0] sm:$0xff]
    %v259 = vld [vmem:[%s1 + $0x4d8] sm:$0xff]
    %v260 = vld [vmem:[%s1 + $0x4e0] sm:$0xff]
    %v261 = vld [vmem:[%s1 + $0x4e8] sm:$0xff]
    %v262 = vld [vmem:[%s1 + $0x4f0] sm:$0xff]
    %v263 = vld [vmem:[%s1 + $0x4f8] sm:$0xff]
    %v264 = vld [vmem:[%s1 + $0x500] sm:$0xff]
    %v265 = vld [vmem:[%s1 + $0x508] sm:$0xff]
    %v266 = vld [vmem:[%s1 + $0x510] sm:$0xff]
    %v267 = vld [vmem:[%s1 + $0x518] sm:$0xff]
    %v268 = vld [vmem:[%s1 + $0x520] sm:$0xff]
    %v269 = vld [vmem:[%s1 + $0x528] sm:$0xff]
    %v270 = vld [vmem:[%s1 + $0x530] sm:$0xff]
    %v271 = vld [vmem:[%s1 + $0x538] sm:$0xff]
    %v272 = vld [vmem:[%s1 + $0x540] sm:$0xff]
    %v273 = vld [vmem:[%s1 + $0x548] sm:$0xff]
    %v274 = vld [vmem:[%s1 + $0x550] sm:$0xff]
    %v275 = vld [vmem:[%s1 + $0x558] sm:$0xff]
    %v276 = vld [vmem:[%s1 + $0x560] sm:$0xff]
    %v277 = vld [vmem:[%s1 + $0x568] sm:$0xff]
    %v278 = vld [vmem:[%s1 + $0x570] sm:$0xff]
    %v279 = vld [vmem:[%s1 + $0x578] sm:$0xff]
    %v280 = vld [vmem:[%s1 + $0x580] sm:$0xff]
    %v281 = vld [vmem:[%s1 + $0x588] sm:$0xff]
    %v282 = vld [vmem:[%s1 + $0x590] sm:$0xff]
    %v283 = vld [vmem:[%s1 + $0x598] sm:$0xff]
    %v284 = vld [vmem:[%s1 + $0x5a0] sm:$0xff]
    %v285 = vld [vmem:[%s1 + $0x5a8] sm:$0xff]
    %v286 = vld [vmem:[%s1 + $0x5b0] sm:$0xff]
    %v287 = vld [vmem:[%s1 + $0x5b8] sm:$0xff]
    %v288 = vld [vmem:[%s1 + $0x5c0] sm:$0xff]
    %v289 = vld [vmem:[%s1 + $0x5c8] sm:$0xff]
    %v290 = vld [vmem:[%s1 + $0x5d0] sm:$0xff]
    %v291 = vld [vmem:[%s1 + $0x5d8] sm:$0xff]
    %v292 = vld [vmem:[%s1 + $0x5e0] sm:$0xff]
    %v293 = vld [vmem:[%s1 + $0x5e8] sm:$0xff]
    %v294 = vld [vmem:[%s1 + $0x5f0] sm:$0xff]
    %v295 = vld [vmem:[%s1 + $0x5f8] sm:$0xff]
    %v296 = vld [vmem:[%s2] sm:$0xf]
    %v298 = vlaneseq
    %v299 = vshrl.u32 %v298, 7
    %v300 = vsub.s32 0, %v299
    %v301 = vrot.slane %v296, %v300
    %v302 = vlaneseq
    %v303 = vshrl.u32 %v302, 7
    %v304 = vsub.s32 1, %v303
    %v305 = vrot.slane %v296, %v304
    %v306 = vlaneseq
    %v307 = vshrl.u32 %v306, 7
    %v308 = vsub.s32 2, %v307
    %v309 = vrot.slane %v296, %v308
    %v310 = vlaneseq
    %v311 = vshrl.u32 %v310, 7
    %v312 = vsub.s32 3, %v311
    %v313 = vrot.slane %v296, %v312
    %v320 = vcombine.high %v102, %v102
    %v322 = vunpack.c.l.s4 1983009808
    %v323 = vunpack.c.0.s8 %v322
    %v324 = vlaneseq
    %v325 = vshrl.u32 %v324, 7
    %v326 = vsub.s32 %v323, %v325
    %v327 = vrot.slane %v102, %v326
    %v329 = vunpack.c.l.s4 1983009808
    %v330 = vunpack.c.0.s8 %v329
    %v331 = vlaneseq
    %v332 = vshrl.u32 %v331, 7
    %v333 = vsub.s32 %v330, %v332
    %v334 = vrot.slane %v320, %v333
    %v335 = vcombine.high %v327, %v327
    %v336 = vcombine.high %v334, %v334
    %v338 = vunpack.c.l.s4 1983009808
    %v339 = vunpack.c.0.s8 %v338
    %v340 = vlaneseq
    %v341 = vshrl.u32 %v340, 7
    %v342 = vsub.s32 %v339, %v341
    %v343 = vrot.slane %v103, %v342
    %v344 = vcombine.high %v343, %v343
    %v543 = vunpack.c.l.b16 %v104
    %v544 = vunpack.c.h.b16 %v104
    %v545 = vunpack.c.l.b16 %v105
    %v546 = vunpack.c.h.b16 %v105
    %v547 = vunpack.c.l.b16 %v106
    %v548 = vunpack.c.h.b16 %v106
    %v549 = vunpack.c.l.b16 %v107
    %v550 = vunpack.c.h.b16 %v107
    %v551 = vunpack.c.l.b16 %v108
    %v552 = vunpack.c.h.b16 %v108
    %v553 = vunpack.c.l.b16 %v109
    %v554 = vunpack.c.h.b16 %v109
    %v555 = vunpack.c.l.b16 %v110
    %v556 = vunpack.c.h.b16 %v110
    %v557 = vunpack.c.l.b16 %v111
    %v558 = vunpack.c.h.b16 %v111
    %v559 = vunpack.c.l.b16 %v112
    %v560 = vunpack.c.h.b16 %v112
    %v561 = vunpack.c.l.b16 %v113
    %v562 = vunpack.c.h.b16 %v113
    %v563 = vunpack.c.l.b16 %v114
    %v564 = vunpack.c.h.b16 %v114
    %v565 = vunpack.c.l.b16 %v115
    %v566 = vunpack.c.h.b16 %v115
    %v567 = vunpack.c.l.b16 %v116
    %v568 = vunpack.c.h.b16 %v116
    %v569 = vunpack.c.l.b16 %v117
    %v570 = vunpack.c.h.b16 %v117
    %v571 = vunpack.c.l.b16 %v118
    %v572 = vunpack.c.h.b16 %v118
    %v573 = vunpack.c.l.b16 %v119
    %v574 = vunpack.c.h.b16 %v119
    %v575 = vunpack.c.l.b16 %v120
    %v576 = vunpack.c.h.b16 %v120
    %v577 = vunpack.c.l.b16 %v121
    %v578 = vunpack.c.h.b16 %v121
    %v579 = vunpack.c.l.b16 %v122
    %v580 = vunpack.c.h.b16 %v122
    %v581 = vunpack.c.l.b16 %v123
    %v582 = vunpack.c.h.b16 %v123
    %v583 = vunpack.c.l.b16 %v124
    %v584 = vunpack.c.h.b16 %v124
    %v585 = vunpack.c.l.b16 %v125
    %v586 = vunpack.c.h.b16 %v125
    %v587 = vunpack.c.l.b16 %v126
    %v588 = vunpack.c.h.b16 %v126
    %v589 = vunpack.c.l.b16 %v127
    %v590 = vunpack.c.h.b16 %v127
    %v591 = vunpack.c.l.b16 %v128
    %v592 = vunpack.c.h.b16 %v128
    %v593 = vunpack.c.l.b16 %v129
    %v594 = vunpack.c.h.b16 %v129
    %v595 = vunpack.c.l.b16 %v130
    %v596 = vunpack.c.h.b16 %v130
    %v597 = vunpack.c.l.b16 %v131
    %v598 = vunpack.c.h.b16 %v131
    %v599 = vunpack.c.l.b16 %v132
    %v600 = vunpack.c.h.b16 %v132
    %v601 = vunpack.c.l.b16 %v133
    %v602 = vunpack.c.h.b16 %v133
    %v603 = vunpack.c.l.b16 %v134
    %v604 = vunpack.c.h.b16 %v134
    %v605 = vunpack.c.l.b16 %v135
    %v606 = vunpack.c.h.b16 %v135
    %v607 = vunpack.c.l.b16 %v136
    %v608 = vunpack.c.h.b16 %v136
    %v609 = vunpack.c.l.b16 %v137
    %v610 = vunpack.c.h.b16 %v137
    %v611 = vunpack.c.l.b16 %v138
    %v612 = vunpack.c.h.b16 %v138
    %v613 = vunpack.c.l.b16 %v139
    %v614 = vunpack.c.h.b16 %v139
    %v615 = vunpack.c.l.b16 %v140
    %v616 = vunpack.c.h.b16 %v140
    %v617 = vunpack.c.l.b16 %v141
    %v618 = vunpack.c.h.b16 %v141
    %v619 = vunpack.c.l.b16 %v142
    %v620 = vunpack.c.h.b16 %v142
    %v621 = vunpack.c.l.b16 %v143
    %v622 = vunpack.c.h.b16 %v143
    %v623 = vunpack.c.l.b16 %v144
    %v624 = vunpack.c.h.b16 %v144
    %v625 = vunpack.c.l.b16 %v145
    %v626 = vunpack.c.h.b16 %v145
    %v627 = vunpack.c.l.b16 %v146
    %v628 = vunpack.c.h.b16 %v146
    %v629 = vunpack.c.l.b16 %v147
    %v630 = vunpack.c.h.b16 %v147
    %v631 = vunpack.c.l.b16 %v148
    %v632 = vunpack.c.h.b16 %v148
    %v633 = vunpack.c.l.b16 %v149
    %v634 = vunpack.c.h.b16 %v149
    %v635 = vunpack.c.l.b16 %v150
    %v636 = vunpack.c.h.b16 %v150
    %v637 = vunpack.c.l.b16 %v151
    %v638 = vunpack.c.h.b16 %v151
    %v639 = vunpack.c.l.b16 %v152
    %v640 = vunpack.c.h.b16 %v152
    %v641 = vunpack.c.l.b16 %v153
    %v642 = vunpack.c.h.b16 %v153
    %v643 = vunpack.c.l.b16 %v154
    %v644 = vunpack.c.h.b16 %v154
    %v645 = vunpack.c.l.b16 %v155
    %v646 = vunpack.c.h.b16 %v155
    %v647 = vunpack.c.l.b16 %v156
    %v648 = vunpack.c.h.b16 %v156
    %v649 = vunpack.c.l.b16 %v157
    %v650 = vunpack.c.h.b16 %v157
    %v651 = vunpack.c.l.b16 %v158
    %v652 = vunpack.c.h.b16 %v158
    %v653 = vunpack.c.l.b16 %v159
    %v654 = vunpack.c.h.b16 %v159
    %v655 = vunpack.c.l.b16 %v160
    %v656 = vunpack.c.h.b16 %v160
    %v657 = vunpack.c.l.b16 %v161
    %v658 = vunpack.c.h.b16 %v161
    %v659 = vunpack.c.l.b16 %v162
    %v660 = vunpack.c.h.b16 %v162
    %v661 = vunpack.c.l.b16 %v163
    %v662 = vunpack.c.h.b16 %v163
    %v663 = vunpack.c.l.b16 %v164
    %v664 = vunpack.c.h.b16 %v164
    %v665 = vunpack.c.l.b16 %v165
    %v666 = vunpack.c.h.b16 %v165
    %v667 = vunpack.c.l.b16 %v166
    %v668 = vunpack.c.h.b16 %v166
    %v669 = vunpack.c.l.b16 %v167
    %v670 = vunpack.c.h.b16 %v167
    %v671 = vunpack.c.l.b16 %v168
    %v672 = vunpack.c.h.b16 %v168
    %v673 = vunpack.c.l.b16 %v169
    %v674 = vunpack.c.h.b16 %v169
    %v675 = vunpack.c.l.b16 %v170
    %v676 = vunpack.c.h.b16 %v170
    %v677 = vunpack.c.l.b16 %v171
    %v678 = vunpack.c.h.b16 %v171
    %v679 = vunpack.c.l.b16 %v172
    %v680 = vunpack.c.h.b16 %v172
    %v681 = vunpack.c.l.b16 %v173
    %v682 = vunpack.c.h.b16 %v173
    %v683 = vunpack.c.l.b16 %v174
    %v684 = vunpack.c.h.b16 %v174
    %v685 = vunpack.c.l.b16 %v175
    %v686 = vunpack.c.h.b16 %v175
    %v687 = vunpack.c.l.b16 %v176
    %v688 = vunpack.c.h.b16 %v176
    %v689 = vunpack.c.l.b16 %v177
    %v690 = vunpack.c.h.b16 %v177
    %v691 = vunpack.c.l.b16 %v178
    %v692 = vunpack.c.h.b16 %v178
    %v693 = vunpack.c.l.b16 %v179
    %v694 = vunpack.c.h.b16 %v179
    %v695 = vunpack.c.l.b16 %v180
    %v696 = vunpack.c.h.b16 %v180
    %v697 = vunpack.c.l.b16 %v181
    %v698 = vunpack.c.h.b16 %v181
    %v699 = vunpack.c.l.b16 %v182
    %v700 = vunpack.c.h.b16 %v182
    %v701 = vunpack.c.l.b16 %v183
    %v702 = vunpack.c.h.b16 %v183
    %v703 = vunpack.c.l.b16 %v184
    %v704 = vunpack.c.h.b16 %v184
    %v705 = vunpack.c.l.b16 %v185
    %v706 = vunpack.c.h.b16 %v185
    %v707 = vunpack.c.l.b16 %v186
    %v708 = vunpack.c.h.b16 %v186
    %v709 = vunpack.c.l.b16 %v187
    %v710 = vunpack.c.h.b16 %v187
    %v711 = vunpack.c.l.b16 %v188
    %v712 = vunpack.c.h.b16 %v188
    %v713 = vunpack.c.l.b16 %v189
    %v714 = vunpack.c.h.b16 %v189
    %v715 = vunpack.c.l.b16 %v190
    %v716 = vunpack.c.h.b16 %v190
    %v717 = vunpack.c.l.b16 %v191
    %v718 = vunpack.c.h.b16 %v191
    %v719 = vunpack.c.l.b16 %v192
    %v720 = vunpack.c.h.b16 %v192
    %v721 = vunpack.c.l.b16 %v193
    %v722 = vunpack.c.h.b16 %v193
    %v723 = vunpack.c.l.b16 %v194
    %v724 = vunpack.c.h.b16 %v194
    %v725 = vunpack.c.l.b16 %v195
    %v726 = vunpack.c.h.b16 %v195
    %v727 = vunpack.c.l.b16 %v196
    %v728 = vunpack.c.h.b16 %v196
    %v729 = vunpack.c.l.b16 %v197
    %v730 = vunpack.c.h.b16 %v197
    %v731 = vunpack.c.l.b16 %v198
    %v732 = vunpack.c.h.b16 %v198
    %v733 = vunpack.c.l.b16 %v199
    %v734 = vunpack.c.h.b16 %v199
    %v735 = vunpack.c.l.b16 %v200
    %v736 = vunpack.c.h.b16 %v200
    %v737 = vunpack.c.l.b16 %v201
    %v738 = vunpack.c.h.b16 %v201
    %v739 = vunpack.c.l.b16 %v202
    %v740 = vunpack.c.h.b16 %v202
    %v741 = vunpack.c.l.b16 %v203
    %v742 = vunpack.c.h.b16 %v203
    %v743 = vunpack.c.l.b16 %v204
    %v744 = vunpack.c.h.b16 %v204
    %v745 = vunpack.c.l.b16 %v205
    %v746 = vunpack.c.h.b16 %v205
    %v747 = vunpack.c.l.b16 %v206
    %v748 = vunpack.c.h.b16 %v206
    %v749 = vunpack.c.l.b16 %v207
    %v750 = vunpack.c.h.b16 %v207
    %v751 = vunpack.c.l.b16 %v208
    %v752 = vunpack.c.h.b16 %v208
    %v753 = vunpack.c.l.b16 %v209
    %v754 = vunpack.c.h.b16 %v209
    %v755 = vunpack.c.l.b16 %v210
    %v756 = vunpack.c.h.b16 %v210
    %v757 = vunpack.c.l.b16 %v211
    %v758 = vunpack.c.h.b16 %v211
    %v759 = vunpack.c.l.b16 %v212
    %v760 = vunpack.c.h.b16 %v212
    %v761 = vunpack.c.l.b16 %v213
    %v762 = vunpack.c.h.b16 %v213
    %v763 = vunpack.c.l.b16 %v214
    %v764 = vunpack.c.h.b16 %v214
    %v765 = vunpack.c.l.b16 %v215
    %v766 = vunpack.c.h.b16 %v215
    %v767 = vunpack.c.l.b16 %v216
    %v768 = vunpack.c.h.b16 %v216
    %v769 = vunpack.c.l.b16 %v217
    %v770 = vunpack.c.h.b16 %v217
    %v771 = vunpack.c.l.b16 %v218
    %v772 = vunpack.c.h.b16 %v218
    %v773 = vunpack.c.l.b16 %v219
    %v774 = vunpack.c.h.b16 %v219
    %v775 = vunpack.c.l.b16 %v220
    %v776 = vunpack.c.h.b16 %v220
    %v777 = vunpack.c.l.b16 %v221
    %v778 = vunpack.c.h.b16 %v221
    %v779 = vunpack.c.l.b16 %v222
    %v780 = vunpack.c.h.b16 %v222
    %v781 = vunpack.c.l.b16 %v223
    %v782 = vunpack.c.h.b16 %v223
    %v783 = vunpack.c.l.b16 %v224
    %v784 = vunpack.c.h.b16 %v224
    %v785 = vunpack.c.l.b16 %v225
    %v786 = vunpack.c.h.b16 %v225
    %v787 = vunpack.c.l.b16 %v226
    %v788 = vunpack.c.h.b16 %v226
    %v789 = vunpack.c.l.b16 %v227
    %v790 = vunpack.c.h.b16 %v227
    %v791 = vunpack.c.l.b16 %v228
    %v792 = vunpack.c.h.b16 %v228
    %v793 = vunpack.c.l.b16 %v229
    %v794 = vunpack.c.h.b16 %v229
    %v795 = vunpack.c.l.b16 %v230
    %v796 = vunpack.c.h.b16 %v230
    %v797 = vunpack.c.l.b16 %v231
    %v798 = vunpack.c.h.b16 %v231
    %v799 = vunpack.c.l.b16 %v232
    %v800 = vunpack.c.h.b16 %v232
    %v801 = vunpack.c.l.b16 %v233
    %v802 = vunpack.c.h.b16 %v233
    %v803 = vunpack.c.l.b16 %v234
    %v804 = vunpack.c.h.b16 %v234
    %v805 = vunpack.c.l.b16 %v235
    %v806 = vunpack.c.h.b16 %v235
    %v807 = vunpack.c.l.b16 %v236
    %v808 = vunpack.c.h.b16 %v236
    %v809 = vunpack.c.l.b16 %v237
    %v810 = vunpack.c.h.b16 %v237
    %v811 = vunpack.c.l.b16 %v238
    %v812 = vunpack.c.h.b16 %v238
    %v813 = vunpack.c.l.b16 %v239
    %v814 = vunpack.c.h.b16 %v239
    %v815 = vunpack.c.l.b16 %v240
    %v816 = vunpack.c.h.b16 %v240
    %v817 = vunpack.c.l.b16 %v241
    %v818 = vunpack.c.h.b16 %v241
    %v819 = vunpack.c.l.b16 %v242
    %v820 = vunpack.c.h.b16 %v242
    %v821 = vunpack.c.l.b16 %v243
    %v822 = vunpack.c.h.b16 %v243
    %v823 = vunpack.c.l.b16 %v244
    %v824 = vunpack.c.h.b16 %v244
    %v825 = vunpack.c.l.b16 %v245
    %v826 = vunpack.c.h.b16 %v245
    %v827 = vunpack.c.l.b16 %v246
    %v828 = vunpack.c.h.b16 %v246
    %v829 = vunpack.c.l.b16 %v247
    %v830 = vunpack.c.h.b16 %v247
    %v831 = vunpack.c.l.b16 %v248
    %v832 = vunpack.c.h.b16 %v248
    %v833 = vunpack.c.l.b16 %v249
    %v834 = vunpack.c.h.b16 %v249
    %v835 = vunpack.c.l.b16 %v250
    %v836 = vunpack.c.h.b16 %v250
    %v837 = vunpack.c.l.b16 %v251
    %v838 = vunpack.c.h.b16 %v251
    %v839 = vunpack.c.l.b16 %v252
    %v840 = vunpack.c.h.b16 %v252
    %v841 = vunpack.c.l.b16 %v253
    %v842 = vunpack.c.h.b16 %v253
    %v843 = vunpack.c.l.b16 %v254
    %v844 = vunpack.c.h.b16 %v254
    %v845 = vunpack.c.l.b16 %v255
    %v846 = vunpack.c.h.b16 %v255
    %v847 = vunpack.c.l.b16 %v256
    %v848 = vunpack.c.h.b16 %v256
    %v849 = vunpack.c.l.b16 %v257
    %v850 = vunpack.c.h.b16 %v257
    %v851 = vunpack.c.l.b16 %v258
    %v852 = vunpack.c.h.b16 %v258
    %v853 = vunpack.c.l.b16 %v259
    %v854 = vunpack.c.h.b16 %v259
    %v855 = vunpack.c.l.b16 %v260
    %v856 = vunpack.c.h.b16 %v260
    %v857 = vunpack.c.l.b16 %v261
    %v858 = vunpack.c.h.b16 %v261
    %v859 = vunpack.c.l.b16 %v262
    %v860 = vunpack.c.h.b16 %v262
    %v861 = vunpack.c.l.b16 %v263
    %v862 = vunpack.c.h.b16 %v263
    %v863 = vunpack.c.l.b16 %v264
    %v864 = vunpack.c.h.b16 %v264
    %v865 = vunpack.c.l.b16 %v265
    %v866 = vunpack.c.h.b16 %v265
    %v867 = vunpack.c.l.b16 %v266
    %v868 = vunpack.c.h.b16 %v266
    %v869 = vunpack.c.l.b16 %v267
    %v870 = vunpack.c.h.b16 %v267
    %v871 = vunpack.c.l.b16 %v268
    %v872 = vunpack.c.h.b16 %v268
    %v873 = vunpack.c.l.b16 %v269
    %v874 = vunpack.c.h.b16 %v269
    %v875 = vunpack.c.l.b16 %v270
    %v876 = vunpack.c.h.b16 %v270
    %v877 = vunpack.c.l.b16 %v271
    %v878 = vunpack.c.h.b16 %v271
    %v879 = vunpack.c.l.b16 %v272
    %v880 = vunpack.c.h.b16 %v272
    %v881 = vunpack.c.l.b16 %v273
    %v882 = vunpack.c.h.b16 %v273
    %v883 = vunpack.c.l.b16 %v274
    %v884 = vunpack.c.h.b16 %v274
    %v885 = vunpack.c.l.b16 %v275
    %v886 = vunpack.c.h.b16 %v275
    %v887 = vunpack.c.l.b16 %v276
    %v888 = vunpack.c.h.b16 %v276
    %v889 = vunpack.c.l.b16 %v277
    %v890 = vunpack.c.h.b16 %v277
    %v891 = vunpack.c.l.b16 %v278
    %v892 = vunpack.c.h.b16 %v278
    %v893 = vunpack.c.l.b16 %v279
    %v894 = vunpack.c.h.b16 %v279
    %v895 = vunpack.c.l.b16 %v280
    %v896 = vunpack.c.h.b16 %v280
    %v897 = vunpack.c.l.b16 %v281
    %v898 = vunpack.c.h.b16 %v281
    %v899 = vunpack.c.l.b16 %v282
    %v900 = vunpack.c.h.b16 %v282
    %v901 = vunpack.c.l.b16 %v283
    %v902 = vunpack.c.h.b16 %v283
    %v903 = vunpack.c.l.b16 %v284
    %v904 = vunpack.c.h.b16 %v284
    %v905 = vunpack.c.l.b16 %v285
    %v906 = vunpack.c.h.b16 %v285
    %v907 = vunpack.c.l.b16 %v286
    %v908 = vunpack.c.h.b16 %v286
    %v909 = vunpack.c.l.b16 %v287
    %v910 = vunpack.c.h.b16 %v287
    %v911 = vunpack.c.l.b16 %v288
    %v912 = vunpack.c.h.b16 %v288
    %v913 = vunpack.c.l.b16 %v289
    %v914 = vunpack.c.h.b16 %v289
    %v915 = vunpack.c.l.b16 %v290
    %v916 = vunpack.c.h.b16 %v290
    %v917 = vunpack.c.l.b16 %v291
    %v918 = vunpack.c.h.b16 %v291
    %v919 = vunpack.c.l.b16 %v292
    %v920 = vunpack.c.h.b16 %v292
    %v921 = vunpack.c.l.b16 %v293
    %v922 = vunpack.c.h.b16 %v293
    %v923 = vunpack.c.l.b16 %v294
    %v924 = vunpack.c.h.b16 %v294
    %v925 = vunpack.c.l.b16 %v295
    %v926 = vunpack.c.h.b16 %v295
    %v927 = vpack.c.b16 %v547, %v543
    %v928 = vpack.c.b16 %v548, %v544
    %v929 = vpack.c.b16 %v549, %v545
    %v930 = vpack.c.b16 %v550, %v546
    %v931 = vpack.c.b16 %v555, %v551
    %v932 = vpack.c.b16 %v556, %v552
    %v933 = vpack.c.b16 %v557, %v553
    %v934 = vpack.c.b16 %v558, %v554
    %v935 = vpack.c.b16 %v563, %v559
    %v936 = vpack.c.b16 %v564, %v560
    %v937 = vpack.c.b16 %v565, %v561
    %v938 = vpack.c.b16 %v566, %v562
    %v939 = vpack.c.b16 %v571, %v567
    %v940 = vpack.c.b16 %v572, %v568
    %v941 = vpack.c.b16 %v573, %v569
    %v942 = vpack.c.b16 %v574, %v570
    %v943 = vpack.c.b16 %v579, %v575
    %v944 = vpack.c.b16 %v580, %v576
    %v945 = vpack.c.b16 %v581, %v577
    %v946 = vpack.c.b16 %v582, %v578
    %v947 = vpack.c.b16 %v587, %v583
    %v948 = vpack.c.b16 %v588, %v584
    %v949 = vpack.c.b16 %v589, %v585
    %v950 = vpack.c.b16 %v590, %v586
    %v951 = vpack.c.b16 %v595, %v591
    %v952 = vpack.c.b16 %v596, %v592
    %v953 = vpack.c.b16 %v597, %v593
    %v954 = vpack.c.b16 %v598, %v594
    %v955 = vpack.c.b16 %v603, %v599
    %v956 = vpack.c.b16 %v604, %v600
    %v957 = vpack.c.b16 %v605, %v601
    %v958 = vpack.c.b16 %v606, %v602
    %v959 = vpack.c.b16 %v611, %v607
    %v960 = vpack.c.b16 %v612, %v608
    %v961 = vpack.c.b16 %v613, %v609
    %v962 = vpack.c.b16 %v614, %v610
    %v963 = vpack.c.b16 %v619, %v615
    %v964 = vpack.c.b16 %v620, %v616
    %v965 = vpack.c.b16 %v621, %v617
    %v966 = vpack.c.b16 %v622, %v618
    %v967 = vpack.c.b16 %v627, %v623
    %v968 = vpack.c.b16 %v628, %v624
    %v969 = vpack.c.b16 %v629, %v625
    %v970 = vpack.c.b16 %v630, %v626
    %v971 = vpack.c.b16 %v635, %v631
    %v972 = vpack.c.b16 %v636, %v632
    %v973 = vpack.c.b16 %v637, %v633
    %v974 = vpack.c.b16 %v638, %v634
    %v975 = vpack.c.b16 %v643, %v639
    %v976 = vpack.c.b16 %v644, %v640
    %v977 = vpack.c.b16 %v645, %v641
    %v978 = vpack.c.b16 %v646, %v642
    %v979 = vpack.c.b16 %v651, %v647
    %v980 = vpack.c.b16 %v652, %v648
    %v981 = vpack.c.b16 %v653, %v649
    %v982 = vpack.c.b16 %v654, %v650
    %v983 = vpack.c.b16 %v659, %v655
    %v984 = vpack.c.b16 %v660, %v656
    %v985 = vpack.c.b16 %v661, %v657
    %v986 = vpack.c.b16 %v662, %v658
    %v987 = vpack.c.b16 %v667, %v663
    %v988 = vpack.c.b16 %v668, %v664
    %v989 = vpack.c.b16 %v669, %v665
    %v990 = vpack.c.b16 %v670, %v666
    %v991 = vpack.c.b16 %v675, %v671
    %v992 = vpack.c.b16 %v676, %v672
    %v993 = vpack.c.b16 %v677, %v673
    %v994 = vpack.c.b16 %v678, %v674
    %v995 = vpack.c.b16 %v683, %v679
    %v996 = vpack.c.b16 %v684, %v680
    %v997 = vpack.c.b16 %v685, %v681
    %v998 = vpack.c.b16 %v686, %v682
    %v999 = vpack.c.b16 %v691, %v687
    %v1000 = vpack.c.b16 %v692, %v688
    %v1001 = vpack.c.b16 %v693, %v689
    %v1002 = vpack.c.b16 %v694, %v690
    %v1003 = vpack.c.b16 %v699, %v695
    %v1004 = vpack.c.b16 %v700, %v696
    %v1005 = vpack.c.b16 %v701, %v697
    %v1006 = vpack.c.b16 %v702, %v698
    %v1007 = vpack.c.b16 %v707, %v703
    %v1008 = vpack.c.b16 %v708, %v704
    %v1009 = vpack.c.b16 %v709, %v705
    %v1010 = vpack.c.b16 %v710, %v706
    %v1011 = vpack.c.b16 %v715, %v711
    %v1012 = vpack.c.b16 %v716, %v712
    %v1013 = vpack.c.b16 %v717, %v713
    %v1014 = vpack.c.b16 %v718, %v714
    %v1015 = vpack.c.b16 %v723, %v719
    %v1016 = vpack.c.b16 %v724, %v720
    %v1017 = vpack.c.b16 %v725, %v721
    %v1018 = vpack.c.b16 %v726, %v722
    %v1019 = vpack.c.b16 %v731, %v727
    %v1020 = vpack.c.b16 %v732, %v728
    %v1021 = vpack.c.b16 %v733, %v729
    %v1022 = vpack.c.b16 %v734, %v730
    %v1023 = vpack.c.b16 %v739, %v735
    %v1024 = vpack.c.b16 %v740, %v736
    %v1025 = vpack.c.b16 %v741, %v737
    %v1026 = vpack.c.b16 %v742, %v738
    %v1027 = vpack.c.b16 %v747, %v743
    %v1028 = vpack.c.b16 %v748, %v744
    %v1029 = vpack.c.b16 %v749, %v745
    %v1030 = vpack.c.b16 %v750, %v746
    %v1031 = vpack.c.b16 %v755, %v751
    %v1032 = vpack.c.b16 %v756, %v752
    %v1033 = vpack.c.b16 %v757, %v753
    %v1034 = vpack.c.b16 %v758, %v754
    %v1035 = vpack.c.b16 %v763, %v759
    %v1036 = vpack.c.b16 %v764, %v760
    %v1037 = vpack.c.b16 %v765, %v761
    %v1038 = vpack.c.b16 %v766, %v762
    %v1039 = vpack.c.b16 %v771, %v767
    %v1040 = vpack.c.b16 %v772, %v768
    %v1041 = vpack.c.b16 %v773, %v769
    %v1042 = vpack.c.b16 %v774, %v770
    %v1043 = vpack.c.b16 %v779, %v775
    %v1044 = vpack.c.b16 %v780, %v776
    %v1045 = vpack.c.b16 %v781, %v777
    %v1046 = vpack.c.b16 %v782, %v778
    %v1047 = vpack.c.b16 %v787, %v783
    %v1048 = vpack.c.b16 %v788, %v784
    %v1049 = vpack.c.b16 %v789, %v785
    %v1050 = vpack.c.b16 %v790, %v786
    %v1051 = vpack.c.b16 %v795, %v791
    %v1052 = vpack.c.b16 %v796, %v792
    %v1053 = vpack.c.b16 %v797, %v793
    %v1054 = vpack.c.b16 %v798, %v794
    %v1055 = vpack.c.b16 %v803, %v799
    %v1056 = vpack.c.b16 %v804, %v800
    %v1057 = vpack.c.b16 %v805, %v801
    %v1058 = vpack.c.b16 %v806, %v802
    %v1059 = vpack.c.b16 %v811, %v807
    %v1060 = vpack.c.b16 %v812, %v808
    %v1061 = vpack.c.b16 %v813, %v809
    %v1062 = vpack.c.b16 %v814, %v810
    %v1063 = vpack.c.b16 %v819, %v815
    %v1064 = vpack.c.b16 %v820, %v816
    %v1065 = vpack.c.b16 %v821, %v817
    %v1066 = vpack.c.b16 %v822, %v818
    %v1067 = vpack.c.b16 %v827, %v823
    %v1068 = vpack.c.b16 %v828, %v824
    %v1069 = vpack.c.b16 %v829, %v825
    %v1070 = vpack.c.b16 %v830, %v826
    %v1071 = vpack.c.b16 %v835, %v831
    %v1072 = vpack.c.b16 %v836, %v832
    %v1073 = vpack.c.b16 %v837, %v833
    %v1074 = vpack.c.b16 %v838, %v834
    %v1075 = vpack.c.b16 %v843, %v839
    %v1076 = vpack.c.b16 %v844, %v840
    %v1077 = vpack.c.b16 %v845, %v841
    %v1078 = vpack.c.b16 %v846, %v842
    %v1079 = vpack.c.b16 %v851, %v847
    %v1080 = vpack.c.b16 %v852, %v848
    %v1081 = vpack.c.b16 %v853, %v849
    %v1082 = vpack.c.b16 %v854, %v850
    %v1083 = vpack.c.b16 %v859, %v855
    %v1084 = vpack.c.b16 %v860, %v856
    %v1085 = vpack.c.b16 %v861, %v857
    %v1086 = vpack.c.b16 %v862, %v858
    %v1087 = vpack.c.b16 %v867, %v863
    %v1088 = vpack.c.b16 %v868, %v864
    %v1089 = vpack.c.b16 %v869, %v865
    %v1090 = vpack.c.b16 %v870, %v866
    %v1091 = vpack.c.b16 %v875, %v871
    %v1092 = vpack.c.b16 %v876, %v872
    %v1093 = vpack.c.b16 %v877, %v873
    %v1094 = vpack.c.b16 %v878, %v874
    %v1095 = vpack.c.b16 %v883, %v879
    %v1096 = vpack.c.b16 %v884, %v880
    %v1097 = vpack.c.b16 %v885, %v881
    %v1098 = vpack.c.b16 %v886, %v882
    %v1099 = vpack.c.b16 %v891, %v887
    %v1100 = vpack.c.b16 %v892, %v888
    %v1101 = vpack.c.b16 %v893, %v889
    %v1102 = vpack.c.b16 %v894, %v890
    %v1103 = vpack.c.b16 %v899, %v895
    %v1104 = vpack.c.b16 %v900, %v896
    %v1105 = vpack.c.b16 %v901, %v897
    %v1106 = vpack.c.b16 %v902, %v898
    %v1107 = vpack.c.b16 %v907, %v903
    %v1108 = vpack.c.b16 %v908, %v904
    %v1109 = vpack.c.b16 %v909, %v905
    %v1110 = vpack.c.b16 %v910, %v906
    %v1111 = vpack.c.b16 %v915, %v911
    %v1112 = vpack.c.b16 %v916, %v912
    %v1113 = vpack.c.b16 %v917, %v913
    %v1114 = vpack.c.b16 %v918, %v914
    %v1115 = vpack.c.b16 %v923, %v919
    %v1116 = vpack.c.b16 %v924, %v920
    %v1117 = vpack.c.b16 %v925, %v921
    %v1118 = vpack.c.b16 %v926, %v922
    %1311 = vmatprep.subr.bf16.mxu0 %v956
    %1312 = vmatpush1.bf16.msra.mxu0 %v955
    %1313 = vmatprep.subr.bf16.mxu0 %v952
    %1314 = vmatpush1.bf16.msra.mxu0 %v951
    %1315 = vmatprep.subr.bf16.mxu0 %v948
    %1316 = vmatpush1.bf16.msra.mxu0 %v947
    %1317 = vmatprep.subr.bf16.mxu0 %v944
    %1318 = vmatpush1.bf16.msra.mxu0 %v943
    %1319 = vmatprep.subr.bf16.mxu0 %v940
    %1320 = vmatpush1.bf16.msra.mxu0 %v939
    %1321 = vmatprep.subr.bf16.mxu0 %v936
    %1322 = vmatpush1.bf16.msra.mxu0 %v935
    %1323 = vmatprep.subr.bf16.mxu0 %v932
    %1324 = vmatpush1.bf16.msra.mxu0 %v931
    %1325 = vmatprep.subr.bf16.mxu0 %v928
    %1326 = vmatpush1.bf16.msra.mxu0 %v927
    %1327 = vmatprep.subr.bf16.mxu0 %v988
    %1328 = vmatpush2.bf16.msra.mxu0 %v987
    %1329 = vmatprep.subr.bf16.mxu0 %v984
    %1330 = vmatpush2.bf16.msra.mxu0 %v983
    %1331 = vmatprep.subr.bf16.mxu0 %v980
    %1332 = vmatpush2.bf16.msra.mxu0 %v979
    %1333 = vmatprep.subr.bf16.mxu0 %v976
    %1334 = vmatpush2.bf16.msra.mxu0 %v975
    %1335 = vmatprep.subr.bf16.mxu0 %v972
    %1336 = vmatpush2.bf16.msra.mxu0 %v971
    %1337 = vmatprep.subr.bf16.mxu0 %v968
    %1338 = vmatpush2.bf16.msra.mxu0 %v967
    %1339 = vmatprep.subr.bf16.mxu0 %v964
    %1340 = vmatpush2.bf16.msra.mxu0 %v963
    %1341 = vmatprep.subr.bf16.mxu0 %v960
    %1342 = vmatpush2.bf16.msra.mxu0 %v959
    %1343 = vmatprep.mubr.bf16.mxu0 %v335
    %1344 = vmatmul.mubr.bf16.gmra.mxu0 %v327
    %v1345 = vpop.f32.mrf.mxu0
    %v1346 = vadd.f32 %v301, %v1345
    %v1347 = vpop.f32.mrf.mxu0
    %v1348 = vadd.f32 %v305, %v1347
    %v1349 = vpop.f32.mrf.mxu0
    %v1350 = vpop.f32.mrf.mxu0
    %1351 = vdwg.mxu0
    %1352 = vmatprep.subr.bf16.mxu0 %v1020
    %1353 = vmatpush1.bf16.msra.mxu0 %v1019
    %1354 = vmatprep.subr.bf16.mxu0 %v1016
    %1355 = vmatpush1.bf16.msra.mxu0 %v1015
    %1356 = vmatprep.subr.bf16.mxu0 %v1012
    %1357 = vmatpush1.bf16.msra.mxu0 %v1011
    %1358 = vmatprep.subr.bf16.mxu0 %v1008
    %1359 = vmatpush1.bf16.msra.mxu0 %v1007
    %1360 = vmatprep.subr.bf16.mxu0 %v1004
    %1361 = vmatpush1.bf16.msra.mxu0 %v1003
    %1362 = vmatprep.subr.bf16.mxu0 %v1000
    %1363 = vmatpush1.bf16.msra.mxu0 %v999
    %1364 = vmatprep.subr.bf16.mxu0 %v996
    %1365 = vmatpush1.bf16.msra.mxu0 %v995
    %1366 = vmatprep.subr.bf16.mxu0 %v992
    %1367 = vmatpush1.bf16.msra.mxu0 %v991
    %1368 = vmatprep.subr.bf16.mxu0 %v1052
    %1369 = vmatpush2.bf16.msra.mxu0 %v1051
    %1370 = vmatprep.subr.bf16.mxu0 %v1048
    %1371 = vmatpush2.bf16.msra.mxu0 %v1047
    %1372 = vmatprep.subr.bf16.mxu0 %v1044
    %1373 = vmatpush2.bf16.msra.mxu0 %v1043
    %1374 = vmatprep.subr.bf16.mxu0 %v1040
    %1375 = vmatpush2.bf16.msra.mxu0 %v1039
    %1376 = vmatprep.subr.bf16.mxu0 %v1036
    %1377 = vmatpush2.bf16.msra.mxu0 %v1035
    %1378 = vmatprep.subr.bf16.mxu0 %v1032
    %1379 = vmatpush2.bf16.msra.mxu0 %v1031
    %1380 = vmatprep.subr.bf16.mxu0 %v1028
    %1381 = vmatpush2.bf16.msra.mxu0 %v1027
    %1382 = vmatprep.subr.bf16.mxu0 %v1024
    %1383 = vmatpush2.bf16.msra.mxu0 %v1023
    %1384 = vmatprep.mubr.bf16.mxu0 %v336
    %1385 = vmatmul.mubr.bf16.gmra.mxu0 %v334
    %v1386 = vpop.f32.mrf.mxu0
    %v1387 = vadd.f32 %v1346, %v1386
    %v1388 = vpop.f32.mrf.mxu0
    %v1389 = vadd.f32 %v1348, %v1388
    %v1390 = vpop.f32.mrf.mxu0
    %v1391 = vpop.f32.mrf.mxu0
    %1392 = vdwg.mxu0
    %1393 = vmatprep.subr.bf16.mxu0 %v1084
    %1394 = vmatpush1.bf16.msra.mxu0 %v1083
    %1395 = vmatprep.subr.bf16.mxu0 %v1080
    %1396 = vmatpush1.bf16.msra.mxu0 %v1079
    %1397 = vmatprep.subr.bf16.mxu0 %v1076
    %1398 = vmatpush1.bf16.msra.mxu0 %v1075
    %1399 = vmatprep.subr.bf16.mxu0 %v1072
    %1400 = vmatpush1.bf16.msra.mxu0 %v1071
    %1401 = vmatprep.subr.bf16.mxu0 %v1068
    %1402 = vmatpush1.bf16.msra.mxu0 %v1067
    %1403 = vmatprep.subr.bf16.mxu0 %v1064
    %1404 = vmatpush1.bf16.msra.mxu0 %v1063
    %1405 = vmatprep.subr.bf16.mxu0 %v1060
    %1406 = vmatpush1.bf16.msra.mxu0 %v1059
    %1407 = vmatprep.subr.bf16.mxu0 %v1056
    %1408 = vmatpush1.bf16.msra.mxu0 %v1055
    %1409 = vmatprep.subr.bf16.mxu0 %v1116
    %1410 = vmatpush2.bf16.msra.mxu0 %v1115
    %1411 = vmatprep.subr.bf16.mxu0 %v1112
    %1412 = vmatpush2.bf16.msra.mxu0 %v1111
    %1413 = vmatprep.subr.bf16.mxu0 %v1108
    %1414 = vmatpush2.bf16.msra.mxu0 %v1107
    %1415 = vmatprep.subr.bf16.mxu0 %v1104
    %1416 = vmatpush2.bf16.msra.mxu0 %v1103
    %1417 = vmatprep.subr.bf16.mxu0 %v1100
    %1418 = vmatpush2.bf16.msra.mxu0 %v1099
    %1419 = vmatprep.subr.bf16.mxu0 %v1096
    %1420 = vmatpush2.bf16.msra.mxu0 %v1095
    %1421 = vmatprep.subr.bf16.mxu0 %v1092
    %1422 = vmatpush2.bf16.msra.mxu0 %v1091
    %1423 = vmatprep.subr.bf16.mxu0 %v1088
    %1424 = vmatpush2.bf16.msra.mxu0 %v1087
    %1425 = vmatprep.mubr.bf16.mxu0 %v344
    %1426 = vmatmul.mubr.bf16.gmra.mxu0 %v343
    %v1427 = vpop.f32.mrf.mxu0
    %v1428 = vadd.f32 %v1387, %v1427
    %v1429 = vpop.f32.mrf.mxu0
    %v1430 = vadd.f32 %v1389, %v1429
    %v1431 = vpop.f32.mrf.mxu0
    %v1432 = vpop.f32.mrf.mxu0
    %1433 = vdwg.mxu0
    %1434 = vmatprep.subr.bf16.mxu0 %v958
    %1435 = vmatpush1.bf16.msra.mxu0 %v957
    %1436 = vmatprep.subr.bf16.mxu0 %v954
    %1437 = vmatpush1.bf16.msra.mxu0 %v953
    %1438 = vmatprep.subr.bf16.mxu0 %v950
    %1439 = vmatpush1.bf16.msra.mxu0 %v949
    %1440 = vmatprep.subr.bf16.mxu0 %v946
    %1441 = vmatpush1.bf16.msra.mxu0 %v945
    %1442 = vmatprep.subr.bf16.mxu0 %v942
    %1443 = vmatpush1.bf16.msra.mxu0 %v941
    %1444 = vmatprep.subr.bf16.mxu0 %v938
    %1445 = vmatpush1.bf16.msra.mxu0 %v937
    %1446 = vmatprep.subr.bf16.mxu0 %v934
    %1447 = vmatpush1.bf16.msra.mxu0 %v933
    %1448 = vmatprep.subr.bf16.mxu0 %v930
    %1449 = vmatpush1.bf16.msra.mxu0 %v929
    %1450 = vmatprep.subr.bf16.mxu0 %v990
    %1451 = vmatpush2.bf16.msra.mxu0 %v989
    %1452 = vmatprep.subr.bf16.mxu0 %v986
    %1453 = vmatpush2.bf16.msra.mxu0 %v985
    %1454 = vmatprep.subr.bf16.mxu0 %v982
    %1455 = vmatpush2.bf16.msra.mxu0 %v981
    %1456 = vmatprep.subr.bf16.mxu0 %v978
    %1457 = vmatpush2.bf16.msra.mxu0 %v977
    %1458 = vmatprep.subr.bf16.mxu0 %v974
    %1459 = vmatpush2.bf16.msra.mxu0 %v973
    %1460 = vmatprep.subr.bf16.mxu0 %v970
    %1461 = vmatpush2.bf16.msra.mxu0 %v969
    %1462 = vmatprep.subr.bf16.mxu0 %v966
    %1463 = vmatpush2.bf16.msra.mxu0 %v965
    %1464 = vmatprep.subr.bf16.mxu0 %v962
    %1465 = vmatpush2.bf16.msra.mxu0 %v961
    %1466 = vmatprep.mubr.bf16.mxu0 %v335
    %1467 = vmatmul.mubr.bf16.gmra.mxu0 %v327
    %v1468 = vpop.f32.mrf.mxu0
    %v1469 = vadd.f32 %v309, %v1468
    %v1470 = vpop.f32.mrf.mxu0
    %v1471 = vadd.f32 %v313, %v1470
    %v1472 = vpop.f32.mrf.mxu0
    %v1473 = vpop.f32.mrf.mxu0
    %1474 = vdwg.mxu0
    %1475 = vmatprep.subr.bf16.mxu0 %v1022
    %1476 = vmatpush1.bf16.msra.mxu0 %v1021
    %1477 = vmatprep.subr.bf16.mxu0 %v1018
    %1478 = vmatpush1.bf16.msra.mxu0 %v1017
    %1479 = vmatprep.subr.bf16.mxu0 %v1014
    %1480 = vmatpush1.bf16.msra.mxu0 %v1013
    %1481 = vmatprep.subr.bf16.mxu0 %v1010
    %1482 = vmatpush1.bf16.msra.mxu0 %v1009
    %1483 = vmatprep.subr.bf16.mxu0 %v1006
    %1484 = vmatpush1.bf16.msra.mxu0 %v1005
    %1485 = vmatprep.subr.bf16.mxu0 %v1002
    %1486 = vmatpush1.bf16.msra.mxu0 %v1001
    %1487 = vmatprep.subr.bf16.mxu0 %v998
    %1488 = vmatpush1.bf16.msra.mxu0 %v997
    %1489 = vmatprep.subr.bf16.mxu0 %v994
    %1490 = vmatpush1.bf16.msra.mxu0 %v993
    %1491 = vmatprep.subr.bf16.mxu0 %v1054
    %1492 = vmatpush2.bf16.msra.mxu0 %v1053
    %1493 = vmatprep.subr.bf16.mxu0 %v1050
    %1494 = vmatpush2.bf16.msra.mxu0 %v1049
    %1495 = vmatprep.subr.bf16.mxu0 %v1046
    %1496 = vmatpush2.bf16.msra.mxu0 %v1045
    %1497 = vmatprep.subr.bf16.mxu0 %v1042
    %1498 = vmatpush2.bf16.msra.mxu0 %v1041
    %1499 = vmatprep.subr.bf16.mxu0 %v1038
    %1500 = vmatpush2.bf16.msra.mxu0 %v1037
    %1501 = vmatprep.subr.bf16.mxu0 %v1034
    %1502 = vmatpush2.bf16.msra.mxu0 %v1033
    %1503 = vmatprep.subr.bf16.mxu0 %v1030
    %1504 = vmatpush2.bf16.msra.mxu0 %v1029
    %1505 = vmatprep.subr.bf16.mxu0 %v1026
    %1506 = vmatpush2.bf16.msra.mxu0 %v1025
    %1507 = vmatprep.mubr.bf16.mxu0 %v336
    %1508 = vmatmul.mubr.bf16.gmra.mxu0 %v334
    %v1509 = vpop.f32.mrf.mxu0
    %v1510 = vadd.f32 %v1469, %v1509
    %v1511 = vpop.f32.mrf.mxu0
    %v1512 = vadd.f32 %v1471, %v1511
    %v1513 = vpop.f32.mrf.mxu0
    %v1514 = vpop.f32.mrf.mxu0
    %1515 = vdwg.mxu0
    %1516 = vmatprep.subr.bf16.mxu0 %v1086
    %1517 = vmatpush1.bf16.msra.mxu0 %v1085
    %1518 = vmatprep.subr.bf16.mxu0 %v1082
    %1519 = vmatpush1.bf16.msra.mxu0 %v1081
    %1520 = vmatprep.subr.bf16.mxu0 %v1078
    %1521 = vmatpush1.bf16.msra.mxu0 %v1077
    %1522 = vmatprep.subr.bf16.mxu0 %v1074
    %1523 = vmatpush1.bf16.msra.mxu0 %v1073
    %1524 = vmatprep.subr.bf16.mxu0 %v1070
    %1525 = vmatpush1.bf16.msra.mxu0 %v1069
    %1526 = vmatprep.subr.bf16.mxu0 %v1066
    %1527 = vmatpush1.bf16.msra.mxu0 %v1065
    %1528 = vmatprep.subr.bf16.mxu0 %v1062
    %1529 = vmatpush1.bf16.msra.mxu0 %v1061
    %1530 = vmatprep.subr.bf16.mxu0 %v1058
    %1531 = vmatpush1.bf16.msra.mxu0 %v1057
    %1532 = vmatprep.subr.bf16.mxu0 %v1118
    %1533 = vmatpush2.bf16.msra.mxu0 %v1117
    %1534 = vmatprep.subr.bf16.mxu0 %v1114
    %1535 = vmatpush2.bf16.msra.mxu0 %v1113
    %1536 = vmatprep.subr.bf16.mxu0 %v1110
    %1537 = vmatpush2.bf16.msra.mxu0 %v1109
    %1538 = vmatprep.subr.bf16.mxu0 %v1106
    %1539 = vmatpush2.bf16.msra.mxu0 %v1105
    %1540 = vmatprep.subr.bf16.mxu0 %v1102
    %1541 = vmatpush2.bf16.msra.mxu0 %v1101
    %1542 = vmatprep.subr.bf16.mxu0 %v1098
    %1543 = vmatpush2.bf16.msra.mxu0 %v1097
    %1544 = vmatprep.subr.bf16.mxu0 %v1094
    %1545 = vmatpush2.bf16.msra.mxu0 %v1093
    %1546 = vmatprep.subr.bf16.mxu0 %v1090
    %1547 = vmatpush2.bf16.msra.mxu0 %v1089
    %1548 = vmatprep.mubr.bf16.mxu0 %v344
    %1549 = vmatmul.mubr.bf16.gmra.mxu0 %v343
    %v1550 = vpop.f32.mrf.mxu0
    %v1551 = vadd.f32 %v1510, %v1550
    %v1552 = vpop.f32.mrf.mxu0
    %v1553 = vadd.f32 %v1512, %v1552
    %v1554 = vpop.f32.mrf.mxu0
    %v1555 = vpop.f32.mrf.mxu0
    %1556 = vdwg.mxu0
    %v1557 = vmax.f32 %v1428, 0.0
    %v1558 = vmax.f32 %v1430, 0.0
    %v1559 = vmax.f32 %v1551, 0.0
    %v1560 = vmax.f32 %v1553, 0.0
    %v1561 = vld [vmem:[#allocation2] sm:$0xff]
    %v1562 = vld [vmem:[#allocation2 + $0x8] sm:$0xff]
    %v1563 = vld [vmem:[#allocation2 + $0x10] sm:$0xff]
    %v1564 = vld [vmem:[#allocation2 + $0x18] sm:$0xff]
    %v1565 = vld [vmem:[#allocation2 + $0x20] sm:$0xff]
    %v1566 = vld [vmem:[#allocation2 + $0x28] sm:$0xff]
    %v1567 = vld [vmem:[#allocation2 + $0x30] sm:$0xff]
    %v1568 = vld [vmem:[#allocation2 + $0x38] sm:$0xff]
    %v1569 = vld [vmem:[#allocation2 + $0x40] sm:$0xff]
    %v1570 = vld [vmem:[#allocation2 + $0x48] sm:$0xff]
    %v1571 = vld [vmem:[#allocation2 + $0x50] sm:$0xff]
    %v1572 = vld [vmem:[#allocation2 + $0x58] sm:$0xff]
    %v1573 = vld [vmem:[#allocation2 + $0x60] sm:$0xff]
    %v1574 = vld [vmem:[#allocation2 + $0x68] sm:$0xff]
    %v1575 = vld [vmem:[#allocation2 + $0x70] sm:$0xff]
    %v1576 = vld [vmem:[#allocation2 + $0x78] sm:$0xff]
    %v1577 = vld [vmem:[#allocation2 + $0x80] sm:$0xff]
    %v1578 = vld [vmem:[#allocation2 + $0x88] sm:$0xff]
    %v1579 = vld [vmem:[#allocation2 + $0x90] sm:$0xff]
    %v1580 = vld [vmem:[#allocation2 + $0x98] sm:$0xff]
    %v1581 = vld [vmem:[#allocation2 + $0xa0] sm:$0xff]
    %v1582 = vld [vmem:[#allocation2 + $0xa8] sm:$0xff]
    %v1583 = vld [vmem:[#allocation2 + $0xb0] sm:$0xff]
    %v1584 = vld [vmem:[#allocation2 + $0xb8] sm:$0xff]
    %v1585 = vld [vmem:[#allocation2 + $0xc0] sm:$0xff]
    %v1586 = vld [vmem:[#allocation2 + $0xc8] sm:$0xff]
    %v1587 = vld [vmem:[#allocation2 + $0xd0] sm:$0xff]
    %v1588 = vld [vmem:[#allocation2 + $0xd8] sm:$0xff]
    %v1589 = vld [vmem:[#allocation2 + $0xe0] sm:$0xff]
    %v1590 = vld [vmem:[#allocation2 + $0xe8] sm:$0xff]
    %v1591 = vld [vmem:[#allocation2 + $0xf0] sm:$0xff]
    %v1592 = vld [vmem:[#allocation2 + $0xf8] sm:$0xff]
    %v1593 = vld [vmem:[#allocation2 + $0x100] sm:$0xff]
    %v1594 = vld [vmem:[#allocation2 + $0x108] sm:$0xff]
    %v1595 = vld [vmem:[#allocation2 + $0x110] sm:$0xff]
    %v1596 = vld [vmem:[#allocation2 + $0x118] sm:$0xff]
    %v1597 = vld [vmem:[#allocation2 + $0x120] sm:$0xff]
    %v1598 = vld [vmem:[#allocation2 + $0x128] sm:$0xff]
    %v1599 = vld [vmem:[#allocation2 + $0x130] sm:$0xff]
    %v1600 = vld [vmem:[#allocation2 + $0x138] sm:$0xff]
    %v1601 = vld [vmem:[#allocation2 + $0x140] sm:$0xff]
    %v1602 = vld [vmem:[#allocation2 + $0x148] sm:$0xff]
    %v1603 = vld [vmem:[#allocation2 + $0x150] sm:$0xff]
    %v1604 = vld [vmem:[#allocation2 + $0x158] sm:$0xff]
    %v1605 = vld [vmem:[#allocation2 + $0x160] sm:$0xff]
    %v1606 = vld [vmem:[#allocation2 + $0x168] sm:$0xff]
    %v1607 = vld [vmem:[#allocation2 + $0x170] sm:$0xff]
    %v1608 = vld [vmem:[#allocation2 + $0x178] sm:$0xff]
    %v1609 = vld [vmem:[#allocation2 + $0x180] sm:$0xff]
    %v1610 = vld [vmem:[#allocation2 + $0x188] sm:$0xff]
    %v1611 = vld [vmem:[#allocation2 + $0x190] sm:$0xff]
    %v1612 = vld [vmem:[#allocation2 + $0x198] sm:$0xff]
    %v1613 = vld [vmem:[#allocation2 + $0x1a0] sm:$0xff]
    %v1614 = vld [vmem:[#allocation2 + $0x1a8] sm:$0xff]
    %v1615 = vld [vmem:[#allocation2 + $0x1b0] sm:$0xff]
    %v1616 = vld [vmem:[#allocation2 + $0x1b8] sm:$0xff]
    %v1617 = vld [vmem:[#allocation2 + $0x1c0] sm:$0xff]
    %v1618 = vld [vmem:[#allocation2 + $0x1c8] sm:$0xff]
    %v1619 = vld [vmem:[#allocation2 + $0x1d0] sm:$0xff]
    %v1620 = vld [vmem:[#allocation2 + $0x1d8] sm:$0xff]
    %v1621 = vld [vmem:[#allocation2 + $0x1e0] sm:$0xff]
    %v1622 = vld [vmem:[#allocation2 + $0x1e8] sm:$0xff]
    %v1623 = vld [vmem:[#allocation2 + $0x1f0] sm:$0xff]
    %v1624 = vld [vmem:[#allocation2 + $0x1f8] sm:$0xff]
    %v1625 = vld [vmem:[%s4] sm:$0x3]
    %v1626 = vpack.c.bf16 %v1557, %v1557
    %v1627 = vpack.c.bf16 %v1558, %v1558
    %v1628 = vpack.c.bf16 %v1559, %v1559
    %v1629 = vpack.c.bf16 %v1560, %v1560
    %v1631 = vlaneseq
    %v1632 = vshrl.u32 %v1631, 7
    %v1633 = vsub.s32 0, %v1632
    %v1634 = vrot.slane %v1625, %v1633
    %v1635 = vlaneseq
    %v1636 = vshrl.u32 %v1635, 7
    %v1637 = vsub.s32 1, %v1636
    %v1638 = vrot.slane %v1625, %v1637
    %v1705 = vunpack.c.l.b16 %v1561
    %v1706 = vunpack.c.h.b16 %v1561
    %v1707 = vunpack.c.l.b16 %v1562
    %v1708 = vunpack.c.h.b16 %v1562
    %v1709 = vunpack.c.l.b16 %v1563
    %v1710 = vunpack.c.h.b16 %v1563
    %v1711 = vunpack.c.l.b16 %v1564
    %v1712 = vunpack.c.h.b16 %v1564
    %v1713 = vunpack.c.l.b16 %v1565
    %v1714 = vunpack.c.h.b16 %v1565
    %v1715 = vunpack.c.l.b16 %v1566
    %v1716 = vunpack.c.h.b16 %v1566
    %v1717 = vunpack.c.l.b16 %v1567
    %v1718 = vunpack.c.h.b16 %v1567
    %v1719 = vunpack.c.l.b16 %v1568
    %v1720 = vunpack.c.h.b16 %v1568
    %v1721 = vunpack.c.l.b16 %v1569
    %v1722 = vunpack.c.h.b16 %v1569
    %v1723 = vunpack.c.l.b16 %v1570
    %v1724 = vunpack.c.h.b16 %v1570
    %v1725 = vunpack.c.l.b16 %v1571
    %v1726 = vunpack.c.h.b16 %v1571
    %v1727 = vunpack.c.l.b16 %v1572
    %v1728 = vunpack.c.h.b16 %v1572
    %v1729 = vunpack.c.l.b16 %v1573
    %v1730 = vunpack.c.h.b16 %v1573
    %v1731 = vunpack.c.l.b16 %v1574
    %v1732 = vunpack.c.h.b16 %v1574
    %v1733 = vunpack.c.l.b16 %v1575
    %v1734 = vunpack.c.h.b16 %v1575
    %v1735 = vunpack.c.l.b16 %v1576
    %v1736 = vunpack.c.h.b16 %v1576
    %v1737 = vunpack.c.l.b16 %v1577
    %v1738 = vunpack.c.h.b16 %v1577
    %v1739 = vunpack.c.l.b16 %v1578
    %v1740 = vunpack.c.h.b16 %v1578
    %v1741 = vunpack.c.l.b16 %v1579
    %v1742 = vunpack.c.h.b16 %v1579
    %v1743 = vunpack.c.l.b16 %v1580
    %v1744 = vunpack.c.h.b16 %v1580
    %v1745 = vunpack.c.l.b16 %v1581
    %v1746 = vunpack.c.h.b16 %v1581
    %v1747 = vunpack.c.l.b16 %v1582
    %v1748 = vunpack.c.h.b16 %v1582
    %v1749 = vunpack.c.l.b16 %v1583
    %v1750 = vunpack.c.h.b16 %v1583
    %v1751 = vunpack.c.l.b16 %v1584
    %v1752 = vunpack.c.h.b16 %v1584
    %v1753 = vunpack.c.l.b16 %v1585
    %v1754 = vunpack.c.h.b16 %v1585
    %v1755 = vunpack.c.l.b16 %v1586
    %v1756 = vunpack.c.h.b16 %v1586
    %v1757 = vunpack.c.l.b16 %v1587
    %v1758 = vunpack.c.h.b16 %v1587
    %v1759 = vunpack.c.l.b16 %v1588
    %v1760 = vunpack.c.h.b16 %v1588
    %v1761 = vunpack.c.l.b16 %v1589
    %v1762 = vunpack.c.h.b16 %v1589
    %v1763 = vunpack.c.l.b16 %v1590
    %v1764 = vunpack.c.h.b16 %v1590
    %v1765 = vunpack.c.l.b16 %v1591
    %v1766 = vunpack.c.h.b16 %v1591
    %v1767 = vunpack.c.l.b16 %v1592
    %v1768 = vunpack.c.h.b16 %v1592
    %v1769 = vunpack.c.l.b16 %v1593
    %v1770 = vunpack.c.h.b16 %v1593
    %v1771 = vunpack.c.l.b16 %v1594
    %v1772 = vunpack.c.h.b16 %v1594
    %v1773 = vunpack.c.l.b16 %v1595
    %v1774 = vunpack.c.h.b16 %v1595
    %v1775 = vunpack.c.l.b16 %v1596
    %v1776 = vunpack.c.h.b16 %v1596
    %v1777 = vunpack.c.l.b16 %v1597
    %v1778 = vunpack.c.h.b16 %v1597
    %v1779 = vunpack.c.l.b16 %v1598
    %v1780 = vunpack.c.h.b16 %v1598
    %v1781 = vunpack.c.l.b16 %v1599
    %v1782 = vunpack.c.h.b16 %v1599
    %v1783 = vunpack.c.l.b16 %v1600
    %v1784 = vunpack.c.h.b16 %v1600
    %v1785 = vunpack.c.l.b16 %v1601
    %v1786 = vunpack.c.h.b16 %v1601
    %v1787 = vunpack.c.l.b16 %v1602
    %v1788 = vunpack.c.h.b16 %v1602
    %v1789 = vunpack.c.l.b16 %v1603
    %v1790 = vunpack.c.h.b16 %v1603
    %v1791 = vunpack.c.l.b16 %v1604
    %v1792 = vunpack.c.h.b16 %v1604
    %v1793 = vunpack.c.l.b16 %v1605
    %v1794 = vunpack.c.h.b16 %v1605
    %v1795 = vunpack.c.l.b16 %v1606
    %v1796 = vunpack.c.h.b16 %v1606
    %v1797 = vunpack.c.l.b16 %v1607
    %v1798 = vunpack.c.h.b16 %v1607
    %v1799 = vunpack.c.l.b16 %v1608
    %v1800 = vunpack.c.h.b16 %v1608
    %v1801 = vunpack.c.l.b16 %v1609
    %v1802 = vunpack.c.h.b16 %v1609
    %v1803 = vunpack.c.l.b16 %v1610
    %v1804 = vunpack.c.h.b16 %v1610
    %v1805 = vunpack.c.l.b16 %v1611
    %v1806 = vunpack.c.h.b16 %v1611
    %v1807 = vunpack.c.l.b16 %v1612
    %v1808 = vunpack.c.h.b16 %v1612
    %v1809 = vunpack.c.l.b16 %v1613
    %v1810 = vunpack.c.h.b16 %v1613
    %v1811 = vunpack.c.l.b16 %v1614
    %v1812 = vunpack.c.h.b16 %v1614
    %v1813 = vunpack.c.l.b16 %v1615
    %v1814 = vunpack.c.h.b16 %v1615
    %v1815 = vunpack.c.l.b16 %v1616
    %v1816 = vunpack.c.h.b16 %v1616
    %v1817 = vunpack.c.l.b16 %v1617
    %v1818 = vunpack.c.h.b16 %v1617
    %v1819 = vunpack.c.l.b16 %v1618
    %v1820 = vunpack.c.h.b16 %v1618
    %v1821 = vunpack.c.l.b16 %v1619
    %v1822 = vunpack.c.h.b16 %v1619
    %v1823 = vunpack.c.l.b16 %v1620
    %v1824 = vunpack.c.h.b16 %v1620
    %v1825 = vunpack.c.l.b16 %v1621
    %v1826 = vunpack.c.h.b16 %v1621
    %v1827 = vunpack.c.l.b16 %v1622
    %v1828 = vunpack.c.h.b16 %v1622
    %v1829 = vunpack.c.l.b16 %v1623
    %v1830 = vunpack.c.h.b16 %v1623
    %v1831 = vunpack.c.l.b16 %v1624
    %v1832 = vunpack.c.h.b16 %v1624
    %v1833 = vpack.c.b16 %v1707, %v1705
    %v1834 = vpack.c.b16 %v1708, %v1706
    %v1835 = vpack.c.b16 %v1711, %v1709
    %v1836 = vpack.c.b16 %v1712, %v1710
    %v1837 = vpack.c.b16 %v1715, %v1713
    %v1838 = vpack.c.b16 %v1716, %v1714
    %v1839 = vpack.c.b16 %v1719, %v1717
    %v1840 = vpack.c.b16 %v1720, %v1718
    %v1841 = vpack.c.b16 %v1723, %v1721
    %v1842 = vpack.c.b16 %v1724, %v1722
    %v1843 = vpack.c.b16 %v1727, %v1725
    %v1844 = vpack.c.b16 %v1728, %v1726
    %v1845 = vpack.c.b16 %v1731, %v1729
    %v1846 = vpack.c.b16 %v1732, %v1730
    %v1847 = vpack.c.b16 %v1735, %v1733
    %v1848 = vpack.c.b16 %v1736, %v1734
    %v1849 = vpack.c.b16 %v1739, %v1737
    %v1850 = vpack.c.b16 %v1740, %v1738
    %v1851 = vpack.c.b16 %v1743, %v1741
    %v1852 = vpack.c.b16 %v1744, %v1742
    %v1853 = vpack.c.b16 %v1747, %v1745
    %v1854 = vpack.c.b16 %v1748, %v1746
    %v1855 = vpack.c.b16 %v1751, %v1749
    %v1856 = vpack.c.b16 %v1752, %v1750
    %v1857 = vpack.c.b16 %v1755, %v1753
    %v1858 = vpack.c.b16 %v1756, %v1754
    %v1859 = vpack.c.b16 %v1759, %v1757
    %v1860 = vpack.c.b16 %v1760, %v1758
    %v1861 = vpack.c.b16 %v1763, %v1761
    %v1862 = vpack.c.b16 %v1764, %v1762
    %v1863 = vpack.c.b16 %v1767, %v1765
    %v1864 = vpack.c.b16 %v1768, %v1766
    %v1865 = vpack.c.b16 %v1771, %v1769
    %v1866 = vpack.c.b16 %v1772, %v1770
    %v1867 = vpack.c.b16 %v1775, %v1773
    %v1868 = vpack.c.b16 %v1776, %v1774
    %v1869 = vpack.c.b16 %v1779, %v1777
    %v1870 = vpack.c.b16 %v1780, %v1778
    %v1871 = vpack.c.b16 %v1783, %v1781
    %v1872 = vpack.c.b16 %v1784, %v1782
    %v1873 = vpack.c.b16 %v1787, %v1785
    %v1874 = vpack.c.b16 %v1788, %v1786
    %v1875 = vpack.c.b16 %v1791, %v1789
    %v1876 = vpack.c.b16 %v1792, %v1790
    %v1877 = vpack.c.b16 %v1795, %v1793
    %v1878 = vpack.c.b16 %v1796, %v1794
    %v1879 = vpack.c.b16 %v1799, %v1797
    %v1880 = vpack.c.b16 %v1800, %v1798
    %v1881 = vpack.c.b16 %v1803, %v1801
    %v1882 = vpack.c.b16 %v1804, %v1802
    %v1883 = vpack.c.b16 %v1807, %v1805
    %v1884 = vpack.c.b16 %v1808, %v1806
    %v1885 = vpack.c.b16 %v1811, %v1809
    %v1886 = vpack.c.b16 %v1812, %v1810
    %v1887 = vpack.c.b16 %v1815, %v1813
    %v1888 = vpack.c.b16 %v1816, %v1814
    %v1889 = vpack.c.b16 %v1819, %v1817
    %v1890 = vpack.c.b16 %v1820, %v1818
    %v1891 = vpack.c.b16 %v1823, %v1821
    %v1892 = vpack.c.b16 %v1824, %v1822
    %v1893 = vpack.c.b16 %v1827, %v1825
    %v1894 = vpack.c.b16 %v1828, %v1826
    %v1895 = vpack.c.b16 %v1831, %v1829
    %v1896 = vpack.c.b16 %v1832, %v1830
    %1961 = vmatprep.subr.bf16.mxu0 %v1848
    %1962 = vmatpush1.bf16.msra.mxu0 %v1847
    %1963 = vmatprep.subr.bf16.mxu0 %v1846
    %1964 = vmatpush1.bf16.msra.mxu0 %v1845
    %1965 = vmatprep.subr.bf16.mxu0 %v1844
    %1966 = vmatpush1.bf16.msra.mxu0 %v1843
    %1967 = vmatprep.subr.bf16.mxu0 %v1842
    %1968 = vmatpush1.bf16.msra.mxu0 %v1841
    %1969 = vmatprep.subr.bf16.mxu0 %v1840
    %1970 = vmatpush1.bf16.msra.mxu0 %v1839
    %1971 = vmatprep.subr.bf16.mxu0 %v1838
    %1972 = vmatpush1.bf16.msra.mxu0 %v1837
    %1973 = vmatprep.subr.bf16.mxu0 %v1836
    %1974 = vmatpush1.bf16.msra.mxu0 %v1835
    %1975 = vmatprep.subr.bf16.mxu0 %v1834
    %1976 = vmatpush1.bf16.msra.mxu0 %v1833
    %1977 = vmatprep.subr.bf16.mxu0 %v1864
    %1978 = vmatpush2.bf16.msra.mxu0 %v1863
    %1979 = vmatprep.subr.bf16.mxu0 %v1862
    %1980 = vmatpush2.bf16.msra.mxu0 %v1861
    %1981 = vmatprep.subr.bf16.mxu0 %v1860
    %1982 = vmatpush2.bf16.msra.mxu0 %v1859
    %1983 = vmatprep.subr.bf16.mxu0 %v1858
    %1984 = vmatpush2.bf16.msra.mxu0 %v1857
    %1985 = vmatprep.subr.bf16.mxu0 %v1856
    %1986 = vmatpush2.bf16.msra.mxu0 %v1855
    %1987 = vmatprep.subr.bf16.mxu0 %v1854
    %1988 = vmatpush2.bf16.msra.mxu0 %v1853
    %1989 = vmatprep.subr.bf16.mxu0 %v1852
    %1990 = vmatpush2.bf16.msra.mxu0 %v1851
    %1991 = vmatprep.subr.bf16.mxu0 %v1850
    %1992 = vmatpush2.bf16.msra.mxu0 %v1849
    %1993 = vmatprep.mubr.bf16.mxu0 %v1627
    %1994 = vmatmul.mubr.bf16.gmra.mxu0 %v1626
    %v1995 = vpop.f32.mrf.mxu0
    %v1996 = vadd.f32 %v1634, %v1995
    %v1997 = vpop.f32.mrf.mxu0
    %v1998 = vadd.f32 %v1638, %v1997
    %v1999 = vpop.f32.mrf.mxu0
    %v2000 = vpop.f32.mrf.mxu0
    %2001 = vdwg.mxu0
    %2002 = vmatprep.subr.bf16.mxu0 %v1880
    %2003 = vmatpush1.bf16.msra.mxu0 %v1879
    %2004 = vmatprep.subr.bf16.mxu0 %v1878
    %2005 = vmatpush1.bf16.msra.mxu0 %v1877
    %2006 = vmatprep.subr.bf16.mxu0 %v1876
    %2007 = vmatpush1.bf16.msra.mxu0 %v1875
    %2008 = vmatprep.subr.bf16.mxu0 %v1874
    %2009 = vmatpush1.bf16.msra.mxu0 %v1873
    %2010 = vmatprep.subr.bf16.mxu0 %v1872
    %2011 = vmatpush1.bf16.msra.mxu0 %v1871
    %2012 = vmatprep.subr.bf16.mxu0 %v1870
    %2013 = vmatpush1.bf16.msra.mxu0 %v1869
    %2014 = vmatprep.subr.bf16.mxu0 %v1868
    %2015 = vmatpush1.bf16.msra.mxu0 %v1867
    %2016 = vmatprep.subr.bf16.mxu0 %v1866
    %2017 = vmatpush1.bf16.msra.mxu0 %v1865
    %2018 = vmatprep.subr.bf16.mxu0 %v1896
    %2019 = vmatpush2.bf16.msra.mxu0 %v1895
    %2020 = vmatprep.subr.bf16.mxu0 %v1894
    %2021 = vmatpush2.bf16.msra.mxu0 %v1893
    %2022 = vmatprep.subr.bf16.mxu0 %v1892
    %2023 = vmatpush2.bf16.msra.mxu0 %v1891
    %2024 = vmatprep.subr.bf16.mxu0 %v1890
    %2025 = vmatpush2.bf16.msra.mxu0 %v1889
    %2026 = vmatprep.subr.bf16.mxu0 %v1888
    %2027 = vmatpush2.bf16.msra.mxu0 %v1887
    %2028 = vmatprep.subr.bf16.mxu0 %v1886
    %2029 = vmatpush2.bf16.msra.mxu0 %v1885
    %2030 = vmatprep.subr.bf16.mxu0 %v1884
    %2031 = vmatpush2.bf16.msra.mxu0 %v1883
    %2032 = vmatprep.subr.bf16.mxu0 %v1882
    %2033 = vmatpush2.bf16.msra.mxu0 %v1881
    %2034 = vmatprep.mubr.bf16.mxu0 %v1629
    %2035 = vmatmul.mubr.bf16.gmra.mxu0 %v1628
    %v2036 = vpop.f32.mrf.mxu0
    %v2037 = vadd.f32 %v1996, %v2036
    %v2038 = vpop.f32.mrf.mxu0
    %v2039 = vadd.f32 %v1998, %v2038
    %v2040 = vpop.f32.mrf.mxu0
    %v2041 = vpop.f32.mrf.mxu0
    %2042 = vdwg.mxu0
    %v2043 = vmax.f32 %v2037, 0.0
    %v2044 = vmax.f32 %v2039, 0.0
    %v2045 = vld [vmem:[#allocation4] sm:$0xff]
    %v2046 = vld [vmem:[#allocation4 + $0x8] sm:$0xff]
    %v2047 = vld [vmem:[#allocation4 + $0x10] sm:$0xff]
    %v2048 = vld [vmem:[#allocation4 + $0x18] sm:$0xff]
    %v2049 = vld [vmem:[#allocation4 + $0x20] sm:$0xff]
    %v2050 = vld [vmem:[#allocation4 + $0x28] sm:$0xff]
    %v2051 = vld [vmem:[#allocation4 + $0x30] sm:$0xff]
    %v2052 = vld [vmem:[#allocation4 + $0x38] sm:$0xff]
    %v2053 = vld [vmem:[#allocation4 + $0x40] sm:$0xff]
    %v2054 = vld [vmem:[#allocation4 + $0x48] sm:$0xff]
    %v2055 = vld [vmem:[#allocation4 + $0x50] sm:$0xff]
    %v2056 = vld [vmem:[#allocation4 + $0x58] sm:$0xff]
    %v2057 = vld [vmem:[#allocation4 + $0x60] sm:$0xff]
    %v2058 = vld [vmem:[#allocation4 + $0x68] sm:$0xff]
    %v2059 = vld [vmem:[#allocation4 + $0x70] sm:$0xff]
    %v2060 = vld [vmem:[#allocation4 + $0x78] sm:$0xff]
    %v2061 = vld [vmem:[#allocation4 + $0x80] sm:$0xff]
    %v2062 = vld [vmem:[#allocation4 + $0x88] sm:$0xff]
    %v2063 = vld [vmem:[#allocation4 + $0x90] sm:$0xff]
    %v2064 = vld [vmem:[#allocation4 + $0x98] sm:$0xff]
    %v2065 = vld [vmem:[#allocation4 + $0xa0] sm:$0xff]
    %v2066 = vld [vmem:[#allocation4 + $0xa8] sm:$0xff]
    %v2067 = vld [vmem:[#allocation4 + $0xb0] sm:$0xff]
    %v2068 = vld [vmem:[#allocation4 + $0xb8] sm:$0xff]
    %v2069 = vld [vmem:[#allocation4 + $0xc0] sm:$0xff]
    %v2070 = vld [vmem:[#allocation4 + $0xc8] sm:$0xff]
    %v2071 = vld [vmem:[#allocation4 + $0xd0] sm:$0xff]
    %v2072 = vld [vmem:[#allocation4 + $0xd8] sm:$0xff]
    %v2073 = vld [vmem:[#allocation4 + $0xe0] sm:$0xff]
    %v2074 = vld [vmem:[#allocation4 + $0xe8] sm:$0xff]
    %v2075 = vld [vmem:[#allocation4 + $0xf0] sm:$0xff]
    %v2076 = vld [vmem:[#allocation4 + $0xf8] sm:$0xff]
    %v2077 = vld [vmem:[%s6] sm:$0x3]
    %v2078 = vpack.c.bf16 %v2043, %v2043
    %v2079 = vpack.c.bf16 %v2044, %v2044
    %v2081 = vlaneseq
    %v2082 = vshrl.u32 %v2081, 7
    %v2083 = vsub.s32 0, %v2082
    %v2084 = vrot.slane %v2077, %v2083
    %v2085 = vlaneseq
    %v2086 = vshrl.u32 %v2085, 7
    %v2087 = vsub.s32 1, %v2086
    %v2088 = vrot.slane %v2077, %v2087
    %v2123 = vunpack.c.l.b16 %v2045
    %v2124 = vunpack.c.h.b16 %v2045
    %v2125 = vunpack.c.l.b16 %v2046
    %v2126 = vunpack.c.h.b16 %v2046
    %v2127 = vunpack.c.l.b16 %v2047
    %v2128 = vunpack.c.h.b16 %v2047
    %v2129 = vunpack.c.l.b16 %v2048
    %v2130 = vunpack.c.h.b16 %v2048
    %v2131 = vunpack.c.l.b16 %v2049
    %v2132 = vunpack.c.h.b16 %v2049
    %v2133 = vunpack.c.l.b16 %v2050
    %v2134 = vunpack.c.h.b16 %v2050
    %v2135 = vunpack.c.l.b16 %v2051
    %v2136 = vunpack.c.h.b16 %v2051
    %v2137 = vunpack.c.l.b16 %v2052
    %v2138 = vunpack.c.h.b16 %v2052
    %v2139 = vunpack.c.l.b16 %v2053
    %v2140 = vunpack.c.h.b16 %v2053
    %v2141 = vunpack.c.l.b16 %v2054
    %v2142 = vunpack.c.h.b16 %v2054
    %v2143 = vunpack.c.l.b16 %v2055
    %v2144 = vunpack.c.h.b16 %v2055
    %v2145 = vunpack.c.l.b16 %v2056
    %v2146 = vunpack.c.h.b16 %v2056
    %v2147 = vunpack.c.l.b16 %v2057
    %v2148 = vunpack.c.h.b16 %v2057
    %v2149 = vunpack.c.l.b16 %v2058
    %v2150 = vunpack.c.h.b16 %v2058
    %v2151 = vunpack.c.l.b16 %v2059
    %v2152 = vunpack.c.h.b16 %v2059
    %v2153 = vunpack.c.l.b16 %v2060
    %v2154 = vunpack.c.h.b16 %v2060
    %v2155 = vunpack.c.l.b16 %v2061
    %v2156 = vunpack.c.h.b16 %v2061
    %v2157 = vunpack.c.l.b16 %v2062
    %v2158 = vunpack.c.h.b16 %v2062
    %v2159 = vunpack.c.l.b16 %v2063
    %v2160 = vunpack.c.h.b16 %v2063
    %v2161 = vunpack.c.l.b16 %v2064
    %v2162 = vunpack.c.h.b16 %v2064
    %v2163 = vunpack.c.l.b16 %v2065
    %v2164 = vunpack.c.h.b16 %v2065
    %v2165 = vunpack.c.l.b16 %v2066
    %v2166 = vunpack.c.h.b16 %v2066
    %v2167 = vunpack.c.l.b16 %v2067
    %v2168 = vunpack.c.h.b16 %v2067
    %v2169 = vunpack.c.l.b16 %v2068
    %v2170 = vunpack.c.h.b16 %v2068
    %v2171 = vunpack.c.l.b16 %v2069
    %v2172 = vunpack.c.h.b16 %v2069
    %v2173 = vunpack.c.l.b16 %v2070
    %v2174 = vunpack.c.h.b16 %v2070
    %v2175 = vunpack.c.l.b16 %v2071
    %v2176 = vunpack.c.h.b16 %v2071
    %v2177 = vunpack.c.l.b16 %v2072
    %v2178 = vunpack.c.h.b16 %v2072
    %v2179 = vunpack.c.l.b16 %v2073
    %v2180 = vunpack.c.h.b16 %v2073
    %v2181 = vunpack.c.l.b16 %v2074
    %v2182 = vunpack.c.h.b16 %v2074
    %v2183 = vunpack.c.l.b16 %v2075
    %v2184 = vunpack.c.h.b16 %v2075
    %v2185 = vunpack.c.l.b16 %v2076
    %v2186 = vunpack.c.h.b16 %v2076
    %v2187 = vpack.c.b16 %v2125, %v2123
    %v2188 = vpack.c.b16 %v2126, %v2124
    %v2189 = vpack.c.b16 %v2129, %v2127
    %v2190 = vpack.c.b16 %v2130, %v2128
    %v2191 = vpack.c.b16 %v2133, %v2131
    %v2192 = vpack.c.b16 %v2134, %v2132
    %v2193 = vpack.c.b16 %v2137, %v2135
    %v2194 = vpack.c.b16 %v2138, %v2136
    %v2195 = vpack.c.b16 %v2141, %v2139
    %v2196 = vpack.c.b16 %v2142, %v2140
    %v2197 = vpack.c.b16 %v2145, %v2143
    %v2198 = vpack.c.b16 %v2146, %v2144
    %v2199 = vpack.c.b16 %v2149, %v2147
    %v2200 = vpack.c.b16 %v2150, %v2148
    %v2201 = vpack.c.b16 %v2153, %v2151
    %v2202 = vpack.c.b16 %v2154, %v2152
    %v2203 = vpack.c.b16 %v2157, %v2155
    %v2204 = vpack.c.b16 %v2158, %v2156
    %v2205 = vpack.c.b16 %v2161, %v2159
    %v2206 = vpack.c.b16 %v2162, %v2160
    %v2207 = vpack.c.b16 %v2165, %v2163
    %v2208 = vpack.c.b16 %v2166, %v2164
    %v2209 = vpack.c.b16 %v2169, %v2167
    %v2210 = vpack.c.b16 %v2170, %v2168
    %v2211 = vpack.c.b16 %v2173, %v2171
    %v2212 = vpack.c.b16 %v2174, %v2172
    %v2213 = vpack.c.b16 %v2177, %v2175
    %v2214 = vpack.c.b16 %v2178, %v2176
    %v2215 = vpack.c.b16 %v2181, %v2179
    %v2216 = vpack.c.b16 %v2182, %v2180
    %v2217 = vpack.c.b16 %v2185, %v2183
    %v2218 = vpack.c.b16 %v2186, %v2184
    %2251 = vmatprep.subr.bf16.mxu0 %v2202
    %2252 = vmatpush1.bf16.msra.mxu0 %v2201
    %2253 = vmatprep.subr.bf16.mxu0 %v2200
    %2254 = vmatpush1.bf16.msra.mxu0 %v2199
    %2255 = vmatprep.subr.bf16.mxu0 %v2198
    %2256 = vmatpush1.bf16.msra.mxu0 %v2197
    %2257 = vmatprep.subr.bf16.mxu0 %v2196
    %2258 = vmatpush1.bf16.msra.mxu0 %v2195
    %2259 = vmatprep.subr.bf16.mxu0 %v2194
    %2260 = vmatpush1.bf16.msra.mxu0 %v2193
    %2261 = vmatprep.subr.bf16.mxu0 %v2192
    %2262 = vmatpush1.bf16.msra.mxu0 %v2191
    %2263 = vmatprep.subr.bf16.mxu0 %v2190
    %2264 = vmatpush1.bf16.msra.mxu0 %v2189
    %2265 = vmatprep.subr.bf16.mxu0 %v2188
    %2266 = vmatpush1.bf16.msra.mxu0 %v2187
    %2267 = vmatprep.subr.bf16.mxu0 %v2218
    %2268 = vmatpush2.bf16.msra.mxu0 %v2217
    %2269 = vmatprep.subr.bf16.mxu0 %v2216
    %2270 = vmatpush2.bf16.msra.mxu0 %v2215
    %2271 = vmatprep.subr.bf16.mxu0 %v2214
    %2272 = vmatpush2.bf16.msra.mxu0 %v2213
    %2273 = vmatprep.subr.bf16.mxu0 %v2212
    %2274 = vmatpush2.bf16.msra.mxu0 %v2211
    %2275 = vmatprep.subr.bf16.mxu0 %v2210
    %2276 = vmatpush2.bf16.msra.mxu0 %v2209
    %2277 = vmatprep.subr.bf16.mxu0 %v2208
    %2278 = vmatpush2.bf16.msra.mxu0 %v2207
    %2279 = vmatprep.subr.bf16.mxu0 %v2206
    %2280 = vmatpush2.bf16.msra.mxu0 %v2205
    %2281 = vmatprep.subr.bf16.mxu0 %v2204
    %2282 = vmatpush2.bf16.msra.mxu0 %v2203
    %2283 = vmatprep.mubr.bf16.mxu0 %v2079
    %2284 = vmatmul.mubr.bf16.gmra.mxu0 %v2078
    %v2285 = vpop.f32.mrf.mxu0
    %v2286 = vadd.f32 %v2084, %v2285
    %v2287 = vpop.f32.mrf.mxu0
    %v2288 = vadd.f32 %v2088, %v2287
    %v2289 = vpop.f32.mrf.mxu0
    %v2290 = vpop.f32.mrf.mxu0
    %2291 = vdwg.mxu0
    %v2292 = vmax.f32 %v2286, 0.0
    %v2293 = vmax.f32 %v2288, 0.0
    %v2294 = vld [vmem:[%s7] sm:$0xf]
    %v2295 = vld [vmem:[%s7 + $0x4] sm:$0xf]
    %v2296 = vld [vmem:[%s7 + $0x8] sm:$0xf]
    %v2297 = vld [vmem:[%s7 + $0xc] sm:$0xf]
    %v2298 = vld [vmem:[%s7 + $0x10] sm:$0xf]
    %v2299 = vld [vmem:[%s7 + $0x14] sm:$0xf]
    %v2300 = vld [vmem:[%s7 + $0x18] sm:$0xf]
    %v2301 = vld [vmem:[%s7 + $0x1c] sm:$0xf]
    %v2302 = vld [vmem:[%s7 + $0x20] sm:$0xf]
    %v2303 = vld [vmem:[%s7 + $0x24] sm:$0xf]
    %v2304 = vld [vmem:[%s7 + $0x28] sm:$0xf]
    %v2305 = vld [vmem:[%s7 + $0x2c] sm:$0xf]
    %v2306 = vld [vmem:[%s7 + $0x30] sm:$0xf]
    %v2307 = vld [vmem:[%s7 + $0x34] sm:$0xf]
    %v2308 = vld [vmem:[%s7 + $0x38] sm:$0xf]
    %v2309 = vld [vmem:[%s7 + $0x3c] sm:$0xf]
    %v2310 = vld [vmem:[%s7 + $0x40] sm:$0xf]
    %v2311 = vld [vmem:[%s7 + $0x44] sm:$0xf]
    %v2312 = vld [vmem:[%s7 + $0x48] sm:$0xf]
    %v2313 = vld [vmem:[%s7 + $0x4c] sm:$0xf]
    %v2314 = vld [vmem:[%s7 + $0x50] sm:$0xf]
    %v2315 = vld [vmem:[%s7 + $0x54] sm:$0xf]
    %v2316 = vld [vmem:[%s7 + $0x58] sm:$0xf]
    %v2317 = vld [vmem:[%s7 + $0x5c] sm:$0xf]
    %v2318 = vld [vmem:[%s7 + $0x60] sm:$0xf]
    %v2319 = vld [vmem:[%s7 + $0x64] sm:$0xf]
    %v2320 = vld [vmem:[%s7 + $0x68] sm:$0xf]
    %v2321 = vld [vmem:[%s7 + $0x6c] sm:$0xf]
    %v2322 = vld [vmem:[%s7 + $0x70] sm:$0xf]
    %v2323 = vld [vmem:[%s7 + $0x74] sm:$0xf]
    %v2324 = vld [vmem:[%s7 + $0x78] sm:$0xf]
    %v2325 = vld [vmem:[%s7 + $0x7c] sm:$0xf]
    %v2326 = vld [vmem:[%s8] sm:$0x1]
    %v2327 = vpack.c.bf16 %v2292, %v2292
    %v2328 = vpack.c.bf16 %v2293, %v2293
    %v2330 = vlaneseq
    %v2331 = vshrl.u32 %v2330, 7
    %v2332 = vsub.s32 0, %v2331
    %v2333 = vrot.slane %v2326, %v2332
    %v2367 = vunpack.c.l.b16 %v2294
    %v2368 = vunpack.c.l.b16 %v2295
    %v2369 = vunpack.c.l.b16 %v2296
    %v2370 = vunpack.c.l.b16 %v2297
    %v2371 = vunpack.c.l.b16 %v2298
    %v2372 = vunpack.c.l.b16 %v2299
    %v2373 = vunpack.c.l.b16 %v2300
    %v2374 = vunpack.c.l.b16 %v2301
    %v2375 = vunpack.c.l.b16 %v2302
    %v2376 = vunpack.c.l.b16 %v2303
    %v2377 = vunpack.c.l.b16 %v2304
    %v2378 = vunpack.c.l.b16 %v2305
    %v2379 = vunpack.c.l.b16 %v2306
    %v2380 = vunpack.c.l.b16 %v2307
    %v2381 = vunpack.c.l.b16 %v2308
    %v2382 = vunpack.c.l.b16 %v2309
    %v2383 = vunpack.c.l.b16 %v2310
    %v2384 = vunpack.c.l.b16 %v2311
    %v2385 = vunpack.c.l.b16 %v2312
    %v2386 = vunpack.c.l.b16 %v2313
    %v2387 = vunpack.c.l.b16 %v2314
    %v2388 = vunpack.c.l.b16 %v2315
    %v2389 = vunpack.c.l.b16 %v2316
    %v2390 = vunpack.c.l.b16 %v2317
    %v2391 = vunpack.c.l.b16 %v2318
    %v2392 = vunpack.c.l.b16 %v2319
    %v2393 = vunpack.c.l.b16 %v2320
    %v2394 = vunpack.c.l.b16 %v2321
    %v2395 = vunpack.c.l.b16 %v2322
    %v2396 = vunpack.c.l.b16 %v2323
    %v2397 = vunpack.c.l.b16 %v2324
    %v2398 = vunpack.c.l.b16 %v2325
    %v2399 = vpack.c.b16 %v2368, %v2367
    %v2400 = vpack.c.b16 %v2370, %v2369
    %v2401 = vpack.c.b16 %v2372, %v2371
    %v2402 = vpack.c.b16 %v2374, %v2373
    %v2403 = vpack.c.b16 %v2376, %v2375
    %v2404 = vpack.c.b16 %v2378, %v2377
    %v2405 = vpack.c.b16 %v2380, %v2379
    %v2406 = vpack.c.b16 %v2382, %v2381
    %v2407 = vpack.c.b16 %v2384, %v2383
    %v2408 = vpack.c.b16 %v2386, %v2385
    %v2409 = vpack.c.b16 %v2388, %v2387
    %v2410 = vpack.c.b16 %v2390, %v2389
    %v2411 = vpack.c.b16 %v2392, %v2391
    %v2412 = vpack.c.b16 %v2394, %v2393
    %v2413 = vpack.c.b16 %v2396, %v2395
    %v2414 = vpack.c.b16 %v2398, %v2397
    %2431 = vmatprep.subr.bf16.mxu0 0
    %2432 = vmatpush1.bf16.msra.mxu0 %v2406
    %2433 = vmatprep.subr.bf16.mxu0 0
    %2434 = vmatpush1.bf16.msra.mxu0 %v2405
    %2435 = vmatprep.subr.bf16.mxu0 0
    %2436 = vmatpush1.bf16.msra.mxu0 %v2404
    %2437 = vmatprep.subr.bf16.mxu0 0
    %2438 = vmatpush1.bf16.msra.mxu0 %v2403
    %2439 = vmatprep.subr.bf16.mxu0 0
    %2440 = vmatpush1.bf16.msra.mxu0 %v2402
    %2441 = vmatprep.subr.bf16.mxu0 0
    %2442 = vmatpush1.bf16.msra.mxu0 %v2401
    %2443 = vmatprep.subr.bf16.mxu0 0
    %2444 = vmatpush1.bf16.msra.mxu0 %v2400
    %2445 = vmatprep.subr.bf16.mxu0 0
    %2446 = vmatpush1.bf16.msra.mxu0 %v2399
    %2447 = vmatprep.subr.bf16.mxu0 0
    %2448 = vmatpush2.bf16.msra.mxu0 %v2414
    %2449 = vmatprep.subr.bf16.mxu0 0
    %2450 = vmatpush2.bf16.msra.mxu0 %v2413
    %2451 = vmatprep.subr.bf16.mxu0 0
    %2452 = vmatpush2.bf16.msra.mxu0 %v2412
    %2453 = vmatprep.subr.bf16.mxu0 0
    %2454 = vmatpush2.bf16.msra.mxu0 %v2411
    %2455 = vmatprep.subr.bf16.mxu0 0
    %2456 = vmatpush2.bf16.msra.mxu0 %v2410
    %2457 = vmatprep.subr.bf16.mxu0 0
    %2458 = vmatpush2.bf16.msra.mxu0 %v2409
    %2459 = vmatprep.subr.bf16.mxu0 0
    %2460 = vmatpush2.bf16.msra.mxu0 %v2408
    %2461 = vmatprep.subr.bf16.mxu0 0
    %2462 = vmatpush2.bf16.msra.mxu0 %v2407
    %2463 = vmatprep.mubr.bf16.mxu0 %v2328
    %2464 = vmatmul.mubr.bf16.gmra.mxu0 %v2327
    %v2465 = vpop.f32.mrf.mxu0
    %v2466 = vadd.f32 %v2333, %v2465
    %v2467 = vpop.f32.mrf.mxu0
    %v2468 = vpop.f32.mrf.mxu0
    %v2469 = vpop.f32.mrf.mxu0
    %2470 = vdwg.mxu0
    %v2471 = vmax.f32 %v2466, 0.0
    %v2472 = vld [vmem:[#allocation6] sm:$0xf]
    %v2473 = vld [vmem:[#allocation6 + $0x4] sm:$0xf]
    %v2474 = vld [vmem:[#allocation6 + $0x8] sm:$0xf]
    %v2475 = vld [vmem:[#allocation6 + $0xc] sm:$0xf]
    %v2476 = vld [vmem:[#allocation6 + $0x10] sm:$0xf]
    %v2477 = vld [vmem:[#allocation6 + $0x14] sm:$0xf]
    %v2478 = vld [vmem:[#allocation6 + $0x18] sm:$0xf]
    %v2479 = vld [vmem:[#allocation6 + $0x1c] sm:$0xf]
    %v2480 = vld [vmem:[#allocation6 + $0x20] sm:$0xf]
    %v2481 = vld [vmem:[#allocation6 + $0x24] sm:$0xf]
    %v2482 = vld [vmem:[#allocation6 + $0x28] sm:$0xf]
    %v2483 = vld [vmem:[#allocation6 + $0x2c] sm:$0xf]
    %v2484 = vld [vmem:[#allocation6 + $0x30] sm:$0xf]
    %v2485 = vld [vmem:[#allocation6 + $0x34] sm:$0xf]
    %v2486 = vld [vmem:[#allocation6 + $0x38] sm:$0xf]
    %v2487 = vld [vmem:[#allocation6 + $0x3c] sm:$0xf]
    %v2488 = vld [vmem:[%s10] sm:$0x1]
    %v2489 = vpack.c.bf16 %v2471, %v2471
    %v2491 = vlaneseq
    %v2492 = vshrl.u32 %v2491, 7
    %v2493 = vsub.s32 0, %v2492
    %v2494 = vrot.slane %v2488, %v2493
    %v2512 = vunpack.c.l.b16 %v2472
    %v2513 = vunpack.c.l.b16 %v2473
    %v2514 = vunpack.c.l.b16 %v2474
    %v2515 = vunpack.c.l.b16 %v2475
    %v2516 = vunpack.c.l.b16 %v2476
    %v2517 = vunpack.c.l.b16 %v2477
    %v2518 = vunpack.c.l.b16 %v2478
    %v2519 = vunpack.c.l.b16 %v2479
    %v2520 = vunpack.c.l.b16 %v2480
    %v2521 = vunpack.c.l.b16 %v2481
    %v2522 = vunpack.c.l.b16 %v2482
    %v2523 = vunpack.c.l.b16 %v2483
    %v2524 = vunpack.c.l.b16 %v2484
    %v2525 = vunpack.c.l.b16 %v2485
    %v2526 = vunpack.c.l.b16 %v2486
    %v2527 = vunpack.c.l.b16 %v2487
    %v2528 = vpack.c.b16 %v2513, %v2512
    %v2529 = vpack.c.b16 %v2515, %v2514
    %v2530 = vpack.c.b16 %v2517, %v2516
    %v2531 = vpack.c.b16 %v2519, %v2518
    %v2532 = vpack.c.b16 %v2521, %v2520
    %v2533 = vpack.c.b16 %v2523, %v2522
    %v2534 = vpack.c.b16 %v2525, %v2524
    %v2535 = vpack.c.b16 %v2527, %v2526
    %2544 = vmatprep.subr.bf16.mxu0 0
    %2545 = vmatpush1.bf16.msra.mxu0 %v2535
    %2546 = vmatprep.subr.bf16.mxu0 0
    %2547 = vmatpush1.bf16.msra.mxu0 %v2534
    %2548 = vmatprep.subr.bf16.mxu0 0
    %2549 = vmatpush1.bf16.msra.mxu0 %v2533
    %2550 = vmatprep.subr.bf16.mxu0 0
    %2551 = vmatpush1.bf16.msra.mxu0 %v2532
    %2552 = vmatprep.subr.bf16.mxu0 0
    %2553 = vmatpush1.bf16.msra.mxu0 %v2531
    %2554 = vmatprep.subr.bf16.mxu0 0
    %2555 = vmatpush1.bf16.msra.mxu0 %v2530
    %2556 = vmatprep.subr.bf16.mxu0 0
    %2557 = vmatpush1.bf16.msra.mxu0 %v2529
    %2558 = vmatprep.subr.bf16.mxu0 0
    %2559 = vmatpush1.bf16.msra.mxu0 %v2528
    %2560 = vmatprep.subr.bf16.mxu0 0
    %2561 = vmatpush2.bf16.msra.mxu0 0
    %2562 = vmatprep.subr.bf16.mxu0 0
    %2563 = vmatpush2.bf16.msra.mxu0 0
    %2564 = vmatprep.subr.bf16.mxu0 0
    %2565 = vmatpush2.bf16.msra.mxu0 0
    %2566 = vmatprep.subr.bf16.mxu0 0
    %2567 = vmatpush2.bf16.msra.mxu0 0
    %2568 = vmatprep.subr.bf16.mxu0 0
    %2569 = vmatpush2.bf16.msra.mxu0 0
    %2570 = vmatprep.subr.bf16.mxu0 0
    %2571 = vmatpush2.bf16.msra.mxu0 0
    %2572 = vmatprep.subr.bf16.mxu0 0
    %2573 = vmatpush2.bf16.msra.mxu0 0
    %2574 = vmatprep.subr.bf16.mxu0 0
    %2575 = vmatpush2.bf16.msra.mxu0 0
    %2576 = vmatprep.mubr.bf16.mxu0 0
    %2577 = vmatmul.mubr.bf16.gmra.mxu0 %v2489
    %v2578 = vpop.f32.mrf.mxu0
    %v2579 = vadd.f32 %v2494, %v2578
    %v2580 = vpop.f32.mrf.mxu0
    %v2581 = vpop.f32.mrf.mxu0
    %v2582 = vpop.f32.mrf.mxu0
    %2583 = vdwg.mxu0
    %v2584 = vmax.f32 %v2579, 0.0
    %v2585 = vpack.c.bf16 %v2584, %v2584
    %2586 = vst [vmem:[%s13] sm:$0x3] %v2585
    %v2587 = vld [vmem:[#allocation7] sm:$0xf]
    %v2588 = vld [vmem:[#allocation7 + $0x4] sm:$0xf]
    %v2589 = vld [vmem:[#allocation7 + $0x8] sm:$0xf]
    %v2590 = vld [vmem:[#allocation7 + $0xc] sm:$0xf]
    %v2591 = vld [vmem:[#allocation7 + $0x10] sm:$0xf]
    %v2592 = vld [vmem:[#allocation7 + $0x14] sm:$0xf]
    %v2593 = vld [vmem:[#allocation7 + $0x18] sm:$0xf]
    %v2594 = vld [vmem:[#allocation7 + $0x1c] sm:$0xf]
    %v2595 = vld [vmem:[#allocation7 + $0x20] sm:$0xf]
    %v2596 = vld [vmem:[#allocation7 + $0x24] sm:$0xf]
    %v2597 = vld [vmem:[#allocation7 + $0x28] sm:$0xf]
    %v2598 = vld [vmem:[#allocation7 + $0x2c] sm:$0xf]
    %v2599 = vld [vmem:[#allocation7 + $0x30] sm:$0xf]
    %v2600 = vld [vmem:[#allocation7 + $0x34] sm:$0xf]
    %v2601 = vld [vmem:[#allocation7 + $0x38] sm:$0xf]
    %v2602 = vld [vmem:[#allocation7 + $0x3c] sm:$0xf]
    %v2603 = vld [vmem:[%s12] sm:$0x1]
    %v2605 = vlaneseq
    %v2606 = vshrl.u32 %v2605, 7
    %v2607 = vsub.s32 0, %v2606
    %v2608 = vrot.slane %v2603, %v2607
    %v2626 = vunpack.c.l.b16 %v2587
    %v2627 = vunpack.c.l.b16 %v2588
    %v2628 = vunpack.c.l.b16 %v2589
    %v2629 = vunpack.c.l.b16 %v2590
    %v2630 = vunpack.c.l.b16 %v2591
    %v2631 = vunpack.c.l.b16 %v2592
    %v2632 = vunpack.c.l.b16 %v2593
    %v2633 = vunpack.c.l.b16 %v2594
    %v2634 = vunpack.c.l.b16 %v2595
    %v2635 = vunpack.c.l.b16 %v2596
    %v2636 = vunpack.c.l.b16 %v2597
    %v2637 = vunpack.c.l.b16 %v2598
    %v2638 = vunpack.c.l.b16 %v2599
    %v2639 = vunpack.c.l.b16 %v2600
    %v2640 = vunpack.c.l.b16 %v2601
    %v2641 = vunpack.c.l.b16 %v2602
    %v2642 = vpack.c.b16 %v2627, %v2626
    %v2643 = vpack.c.b16 %v2629, %v2628
    %v2644 = vpack.c.b16 %v2631, %v2630
    %v2645 = vpack.c.b16 %v2633, %v2632
    %v2646 = vpack.c.b16 %v2635, %v2634
    %v2647 = vpack.c.b16 %v2637, %v2636
    %v2648 = vpack.c.b16 %v2639, %v2638
    %v2649 = vpack.c.b16 %v2641, %v2640
    %2658 = vmatprep.subr.bf16.mxu0 0
    %2659 = vmatpush1.bf16.msra.mxu0 %v2649
    %2660 = vmatprep.subr.bf16.mxu0 0
    %2661 = vmatpush1.bf16.msra.mxu0 %v2648
    %2662 = vmatprep.subr.bf16.mxu0 0
    %2663 = vmatpush1.bf16.msra.mxu0 %v2647
    %2664 = vmatprep.subr.bf16.mxu0 0
    %2665 = vmatpush1.bf16.msra.mxu0 %v2646
    %2666 = vmatprep.subr.bf16.mxu0 0
    %2667 = vmatpush1.bf16.msra.mxu0 %v2645
    %2668 = vmatprep.subr.bf16.mxu0 0
    %2669 = vmatpush1.bf16.msra.mxu0 %v2644
    %2670 = vmatprep.subr.bf16.mxu0 0
    %2671 = vmatpush1.bf16.msra.mxu0 %v2643
    %2672 = vmatprep.subr.bf16.mxu0 0
    %2673 = vmatpush1.bf16.msra.mxu0 %v2642
    %2674 = vmatprep.subr.bf16.mxu0 0
    %2675 = vmatpush2.bf16.msra.mxu0 0
    %2676 = vmatprep.subr.bf16.mxu0 0
    %2677 = vmatpush2.bf16.msra.mxu0 0
    %2678 = vmatprep.subr.bf16.mxu0 0
    %2679 = vmatpush2.bf16.msra.mxu0 0
    %2680 = vmatprep.subr.bf16.mxu0 0
    %2681 = vmatpush2.bf16.msra.mxu0 0
    %2682 = vmatprep.subr.bf16.mxu0 0
    %2683 = vmatpush2.bf16.msra.mxu0 0
    %2684 = vmatprep.subr.bf16.mxu0 0
    %2685 = vmatpush2.bf16.msra.mxu0 0
    %2686 = vmatprep.subr.bf16.mxu0 0
    %2687 = vmatpush2.bf16.msra.mxu0 0
    %2688 = vmatprep.subr.bf16.mxu0 0
    %2689 = vmatpush2.bf16.msra.mxu0 0
    %2690 = vmatprep.mubr.bf16.mxu0 0
    %2691 = vmatmul.mubr.bf16.gmra.mxu0 %v2585
    %v2692 = vpop.f32.mrf.mxu0
    %v2693 = vadd.f32 %v2608, %v2692
    %v2694 = vpop.f32.mrf.mxu0
    %v2695 = vpop.f32.mrf.mxu0
    %v2696 = vpop.f32.mrf.mxu0
    %2697 = vdwg.mxu0
    %v2698 = vmax.f32 %v2693, 0.0
    %v2699 = vpack.c.bf16 %v2698, %v2698
    %vm2700 = vcmask 254976
    %2701 = vst.msk [vmem:[%s14] sm:$0x3] %vm2700, %v2699
    // Predicated region
    $region70: #{_lambda_.3} parent=1 // pred_check
      _
    $region71: #{_lambda_.3} parent=1 // pred_check_branch
      %2703 = sbr.rel (0) target = $region73
    $region72: #{_lambda_.3} parent=1 // pred_region
      _
    $region73: #{_lambda_.3} parent=1 // pred_fallthru
      _
    // Predicated region
    $region74: #{_lambda_.3} parent=1 // pred_check
      _
    $region75: #{_lambda_.3} parent=1 // pred_check_branch
      %2705 = sbr.rel (0) target = $region77
    $region76: #{_lambda_.3} parent=1 // pred_region
      _
    $region77: #{_lambda_.3} parent=1 // pred_fallthru
      _
    // Predicated region
    $region78: #{_lambda_.3} parent=1 // pred_check
      _
    $region79: #{_lambda_.3} parent=1 // pred_check_branch
      %2707 = sbr.rel (0) target = $region81
    $region80: #{_lambda_.3} parent=1 // pred_region
      _
    $region81: #{_lambda_.3} parent=1 // pred_fallthru
      _
    // Predicated region
    $region82: #{_lambda_.3} parent=1 // pred_check
      _
    $region83: #{_lambda_.3} parent=1 // pred_check_branch
      %2709 = sbr.rel (0) target = $region85
    $region84: #{_lambda_.3} parent=1 // pred_region
      _
    $region85: #{_lambda_.3} parent=1 // pred_fallthru
      _
    %2710 = vsyncpa [#allocation3], 1
    %2711 = vsyncpa [#allocation5], 1
    %2712 = vsyncpa [#allocation8], 1

</llo_original>
